<compile_context>
chip_gen: v6e
topology: v6e:2x2x1
jax: 0.10.0
libtpu: 0.0.40
codegen_flags: <defaults>
</compile_context>

<pallas_src>
import math

import jax
import jax.numpy as jnp
from jax import lax
from jax.experimental import pallas as pl
from jax.experimental.pallas import tpu as pltpu

# ---- problem sizes (small, consistent with the module) ----
B = 2          # batch
N1 = 16        # image-feature sequence length
N2 = 8         # latent sequence length
DIM = 32       # model dim D
DIM_HEAD = 16  # per-head dim
HEADS = 4
INNER = DIM_HEAD * HEADS   # 64
LN_EPS = 1e-5


def _layernorm(v, w, b):
    """PyTorch-style LayerNorm over the last axis (biased variance)."""
    mu = jnp.mean(v, axis=-1, keepdims=True)
    var = jnp.mean((v - mu) ** 2, axis=-1, keepdims=True)
    return (v - mu) * lax.rsqrt(var + LN_EPS) * w + b


def _attention_kernel(x_ref, lat_ref, ln_d_ref, ln_h_ref, w_qkv_t_ref,
                      w_out_ref, out_ref):
    """Whole batch in one grid step; heads handled via sublane-sliced weights."""
    # --- input layernorms (rows = batch-flattened sequence) ---
    x_n = _layernorm(x_ref[...], ln_d_ref[0:1, :], ln_d_ref[1:2, :])      # (B*N1, D)
    lat_n = _layernorm(lat_ref[...], ln_d_ref[2:3, :], ln_d_ref[3:4, :])  # (B*N2, D)

    # per-head LayerNorm affines (1/dh^0.25 scale already folded in on host)
    qw, qb = ln_h_ref[0:1, :], ln_h_ref[1:2, :]
    kw, kb = ln_h_ref[2:3, :], ln_h_ref[3:4, :]

    # act (rows, D) x w_t (dh, D) contracting the model dim -> (rows, dh)
    dn = (((1,), (1,)), ((), ()))

    out_acc = jnp.zeros((B * N2, DIM), jnp.float32)
    for h in range(HEADS):
        # Per-head weights = sublane-aligned (multiple-of-8) row slices of the
        # packed transposed operands: free views, no lane slicing, no relayout.
        r0 = h * DIM_HEAD
        wq_t = w_qkv_t_ref[r0:r0 + DIM_HEAD, :]                            # (dh, D)
        wk_t = w_qkv_t_ref[INNER + r0:INNER + r0 + DIM_HEAD, :]            # (dh, D)
        wv_t = w_qkv_t_ref[2 * INNER + r0:2 * INNER + r0 + DIM_HEAD, :]    # (dh, D)
        wo_h = w_out_ref[r0:r0 + DIM_HEAD, :]                              # (dh, D)

        # projections: each a single small MXU matmul, output already per-head
        q_h = lax.dot_general(lat_n, wq_t, dn, preferred_element_type=jnp.float32)
        k_l = lax.dot_general(lat_n, wk_t, dn, preferred_element_type=jnp.float32)
        v_l = lax.dot_general(lat_n, wv_t, dn, preferred_element_type=jnp.float32)
        k_x = lax.dot_general(x_n, wk_t, dn, preferred_element_type=jnp.float32)
        v_x = lax.dot_general(x_n, wv_t, dn, preferred_element_type=jnp.float32)

        # per-head layernorms (scale folded into qw/qb/kw/kb)
        q_h = _layernorm(q_h, qw, qb)
        k_l = _layernorm(k_l, kw, kb)
        k_x = _layernorm(k_x, kw, kb)

        # Split batch back out as a leading dim: minor dim unchanged and the new
        # second-minor (8 / 16) is a multiple of the 8-sublane tile, so these
        # reshapes are layout-preserving (no data movement).
        q3 = q_h.reshape(B, N2, DIM_HEAD)
        kx3 = k_x.reshape(B, N1, DIM_HEAD)
        kl3 = k_l.reshape(B, N2, DIM_HEAD)
        vx3 = v_x.reshape(B, N1, DIM_HEAD)
        vl3 = v_l.reshape(B, N2, DIM_HEAD)

        # Batched (over B) per-head attention; keys = [x ; latents] handled as a
        # split softmax — every computed logit/exp/sum element is live work.
        lg_x = jnp.einsum('bqd,bkd->bqk', q3, kx3,
                          preferred_element_type=jnp.float32)              # (B, N2, N1)
        lg_l = jnp.einsum('bqd,bkd->bqk', q3, kl3,
                          preferred_element_type=jnp.float32)              # (B, N2, N2)
        m = jnp.maximum(jnp.max(lg_x, axis=-1, keepdims=True),
                        jnp.max(lg_l, axis=-1, keepdims=True))
        p_x = jnp.exp(lg_x - m)
        p_l = jnp.exp(lg_l - m)
        denom = (jnp.sum(p_x, axis=-1, keepdims=True)
                 + jnp.sum(p_l, axis=-1, keepdims=True))
        o3 = (jnp.einsum('bqk,bkd->bqd', p_x, vx3,
                         preferred_element_type=jnp.float32)
              + jnp.einsum('bqk,bkd->bqd', p_l, vl3,
                           preferred_element_type=jnp.float32))            # (B, N2, dh)
        # deferred softmax normalization on the small PV result; approx=False
        # keeps the 1e-4 agreement with the reference.
        o3 = o3 * pl.reciprocal(denom, approx=False)

        # this head's contribution to the output projection (16-row weight slice)
        o2 = o3.reshape(B * N2, DIM_HEAD)
        out_acc = out_acc + jnp.dot(o2, wo_h, preferred_element_type=jnp.float32)

    # NOTE: output is only 32 lanes wide -> one masked partial store; batching
    # several layers per launch would make it lane-dense (not applicable here).
    out_ref[...] = out_acc


def pack_params(params):
    """One-time (init-time) packing: 11 module params -> 4 kernel operands."""
    n1w, n1b, n2w, n2b, wq, wkv, wout, nqw, nqb, nkw, nkb = params
    scale = 1.0 / math.sqrt(math.sqrt(DIM_HEAD))
    ln_d = jnp.concatenate([n1w, n1b, n2w, n2b], axis=0)                    # (4, D)
    # fold the 1/dh^0.25 attention scale into the norm_q / norm_k affines
    ln_h = jnp.concatenate([nqw * scale, nqb * scale,
                            nkw * scale, nkb * scale], axis=0)              # (4, dh)
    wk, wv = wkv[:, :INNER], wkv[:, INNER:]
    # transposed, head-major weight slab: rows [j*INNER + h*dh : + dh] hold head
    # h's q (j=0) / k (j=1) / v (j=2) weights -> per-head weights are sublane slices
    w_qkv_t = jnp.concatenate([wq.T, wk.T, wv.T], axis=0)                   # (3*INNER, D)
    return ln_d, ln_h, w_qkv_t, wout


@jax.jit
def perceiver_attention_qk(x, latents, packed):
    """x: (B, N1, D), latents: (B, N2, D)  ->  (B, N2, D)"""
    ln_d, ln_h, w_qkv_t, w_out = packed
    x2 = x.reshape(B * N1, DIM)            # leading-dim merges; free under jit
    lat2 = latents.reshape(B * N2, DIM)

    full = lambda shape: pl.BlockSpec(shape, lambda i: (0, 0))
    grid_spec = pltpu.PrefetchScalarGridSpec(
        num_scalar_prefetch=0,
        grid=(1,),                          # whole batch in one step on every TPU gen
        in_specs=[
            full((B * N1, DIM)),            # x (batch-flattened)
            full((B * N2, DIM)),            # latents (batch-flattened)
            full((4, DIM)),                 # norm1|norm2 weight/bias
            full((4, DIM_HEAD)),            # norm_q|norm_k weight/bias (pre-scaled)
            full((3 * INNER, DIM)),         # to_q|to_k|to_v, transposed, head-major
            full((INNER, DIM)),             # to_out
        ],
        out_specs=pl.BlockSpec((B * N2, DIM), lambda i: (0, 0)),
    )
    out2 = pl.pallas_call(
        _attention_kernel,
        out_shape=jax.ShapeDtypeStruct((B * N2, DIM), jnp.float32),
        grid_spec=grid_spec,
        compiler_params=pltpu.CompilerParams(
            dimension_semantics=("arbitrary",)),
    )(x2, lat2, ln_d, ln_h, w_qkv_t, w_out)
    return out2.reshape(B, N2, DIM)


# ---- pure-JAX reference (mirrors the PyTorch forward, uses UNPACKED params) ----
def reference(x, latents, params):
    n1w, n1b, n2w, n2b, wq, wkv, wout, nqw, nqb, nkw, nkb = params
    xn = _layernorm(x, n1w, n1b)
    latn = _layernorm(latents, n2w, n2b)
    q = latn @ wq                                            # (B, N2, INNER)
    kv_in = jnp.concatenate([xn, latn], axis=1)              # (B, N1+N2, D)
    kv = kv_in @ wkv
    k, v = kv[..., :INNER], kv[..., INNER:]

    def split_heads(t):
        b, l, _ = t.shape
        return t.reshape(b, l, HEADS, DIM_HEAD).transpose(0, 2, 1, 3)

    qh = _layernorm(split_heads(q), nqw, nqb)
    kh = _layernorm(split_heads(k), nkw, nkb)
    vh = split_heads(v)
    scale = 1.0 / math.sqrt(math.sqrt(DIM_HEAD))
    w = jnp.einsum('bhqd,bhkd->bhqk', qh * scale, kh * scale)
    w = jax.nn.softmax(w.astype(jnp.float32), axis=-1)
    out = jnp.einsum('bhqk,bhkd->bhqd', w, vh)
    out = out.transpose(0, 2, 1, 3).reshape(x.shape[0], N2, INNER)
    return out @ wout


if __name__ == "__main__":
    key = jax.random.PRNGKey(0)
    keys = jax.random.split(key, 12)

    x = jax.random.normal(keys[0], (B, N1, DIM), jnp.float32)
    latents = jax.random.normal(keys[1], (B, N2, DIM), jnp.float32)

    # deterministic parameter init (LayerNorm affine perturbed from 1/0 so it
    # actually exercises the affine path; Linear weights ~ N(0, 1/sqrt(fan_in)))
    params = (
        1.0 + 0.1 * jax.random.normal(keys[2], (1, DIM), jnp.float32),        # norm1 w
        0.1 * jax.random.normal(keys[3], (1, DIM), jnp.float32),              # norm1 b
        1.0 + 0.1 * jax.random.normal(keys[4], (1, DIM), jnp.float32),        # norm2 w
        0.1 * jax.random.normal(keys[5], (1, DIM), jnp.float32),              # norm2 b
        jax.random.normal(keys[6], (DIM, INNER), jnp.float32) / math.sqrt(DIM),       # to_q
        jax.random.normal(keys[7], (DIM, 2 * INNER), jnp.float32) / math.sqrt(DIM),   # to_kv
        jax.random.normal(keys[8], (INNER, DIM), jnp.float32) / math.sqrt(INNER),     # to_out
        1.0 + 0.1 * jax.random.normal(keys[9], (1, DIM_HEAD), jnp.float32),   # norm_q w
        0.1 * jax.random.normal(keys[10], (1, DIM_HEAD), jnp.float32),        # norm_q b
        1.0 + 0.1 * jax.random.normal(keys[11], (1, DIM_HEAD), jnp.float32),  # norm_k w
        jnp.zeros((1, DIM_HEAD), jnp.float32),                                # norm_k b
    )

    # one-time, init-time packing (hoisted out of the per-call hot path)
    packed = pack_params(params)

    out = perceiver_attention_qk(x, latents, packed)
    out = jax.block_until_ready(out)

    ref = reference(x, latents, params)
    assert out.shape == (B, N2, DIM)
    max_err = jnp.max(jnp.abs(out - ref))
    assert jnp.allclose(out, ref, atol=1e-4, rtol=1e-4), f"max abs err = {max_err}"

    print("KERNEL_OK")
</pallas_src>

<mosaic_0001>
module attributes {stable_mosaic.version = 11 : i64} {
  func.func @_attention_kernel(%arg0: i32, %arg1: memref<32x32xf32, #tpu.memory_space<vmem>>, %arg2: memref<16x32xf32, #tpu.memory_space<vmem>>, %arg3: memref<4x32xf32, #tpu.memory_space<vmem>>, %arg4: memref<4x16xf32, #tpu.memory_space<vmem>>, %arg5: memref<192x32xf32, #tpu.memory_space<vmem>>, %arg6: memref<64x32xf32, #tpu.memory_space<vmem>>, %arg7: memref<16x32xf32, #tpu.memory_space<vmem>>) attributes {dimension_semantics = [#tpu.dimension_semantics<arbitrary>], iteration_bounds = array<i64: 1>, scalar_prefetch = 0 : i64, scratch_operands = 0 : i64, tpu.core_type = #tpu.core_type<tc>, window_params = [{pipeline_mode = #tpu.pipeline_mode<synchronous>, transform_indices = @transform_0, window_bounds = array<i64: 32, 32>}, {pipeline_mode = #tpu.pipeline_mode<synchronous>, transform_indices = @transform_1, window_bounds = array<i64: 16, 32>}, {pipeline_mode = #tpu.pipeline_mode<synchronous>, transform_indices = @transform_2, window_bounds = array<i64: 4, 32>}, {pipeline_mode = #tpu.pipeline_mode<synchronous>, transform_indices = @transform_3, window_bounds = array<i64: 4, 16>}, {pipeline_mode = #tpu.pipeline_mode<synchronous>, transform_indices = @transform_4, window_bounds = array<i64: 192, 32>}, {pipeline_mode = #tpu.pipeline_mode<synchronous>, transform_indices = @transform_5, window_bounds = array<i64: 64, 32>}, {pipeline_mode = #tpu.pipeline_mode<synchronous>, transform_indices = @transform_6, window_bounds = array<i64: 16, 32>}]} {
    %c0 = arith.constant 0 : index
    %c0_0 = arith.constant 0 : index
    %0 = vector.load %arg1[%c0, %c0_0] : memref<32x32xf32, #tpu.memory_space<vmem>>, vector<32x32xf32>
    %c0_1 = arith.constant 0 : index
    %c0_2 = arith.constant 0 : index
    %1 = vector.load %arg3[%c0_1, %c0_2] : memref<4x32xf32, #tpu.memory_space<vmem>>, vector<1x32xf32>
    %c1 = arith.constant 1 : index
    %c0_3 = arith.constant 0 : index
    %2 = vector.load %arg3[%c1, %c0_3] : memref<4x32xf32, #tpu.memory_space<vmem>>, vector<1x32xf32>
    %cst = arith.constant dense<0.000000e+00> : vector<32xf32>
    %3 = vector.multi_reduction <add>, %0, %cst [1] : vector<32x32xf32> to vector<32xf32>
    %4 = vector.shape_cast %3 : vector<32xf32> to vector<32x1xf32>
    %cst_4 = arith.constant 3.200000e+01 : f32
    %5 = vector.broadcast %cst_4 : f32 to vector<32x1xf32>
    %6 = arith.divf %4, %5 : vector<32x1xf32>
    %7 = vector.broadcast %6 : vector<32x1xf32> to vector<32x32xf32>
    %8 = arith.subf %0, %7 : vector<32x32xf32>
    %9 = arith.mulf %8, %8 : vector<32x32xf32>
    %cst_5 = arith.constant dense<0.000000e+00> : vector<32xf32>
    %10 = vector.multi_reduction <add>, %9, %cst_5 [1] : vector<32x32xf32> to vector<32xf32>
    %11 = vector.shape_cast %10 : vector<32xf32> to vector<32x1xf32>
    %cst_6 = arith.constant 3.200000e+01 : f32
    %12 = vector.broadcast %cst_6 : f32 to vector<32x1xf32>
    %13 = arith.divf %11, %12 : vector<32x1xf32>
    %14 = vector.broadcast %6 : vector<32x1xf32> to vector<32x32xf32>
    %15 = arith.subf %0, %14 : vector<32x32xf32>
    %cst_7 = arith.constant 9.99999974E-6 : f32
    %16 = vector.broadcast %cst_7 : f32 to vector<32x1xf32>
    %17 = arith.addf %13, %16 : vector<32x1xf32>
    %18 = math.rsqrt %17 : vector<32x1xf32>
    %19 = vector.broadcast %18 : vector<32x1xf32> to vector<32x32xf32>
    %20 = arith.mulf %15, %19 : vector<32x32xf32>
    %21 = vector.broadcast %1 : vector<1x32xf32> to vector<32x32xf32>
    %22 = arith.mulf %20, %21 : vector<32x32xf32>
    %23 = vector.broadcast %2 : vector<1x32xf32> to vector<32x32xf32>
    %24 = arith.addf %22, %23 : vector<32x32xf32>
    %c0_8 = arith.constant 0 : index
    %c0_9 = arith.constant 0 : index
    %25 = vector.load %arg2[%c0_8, %c0_9] : memref<16x32xf32, #tpu.memory_space<vmem>>, vector<16x32xf32>
    %c2 = arith.constant 2 : index
    %c0_10 = arith.constant 0 : index
    %26 = vector.load %arg3[%c2, %c0_10] : memref<4x32xf32, #tpu.memory_space<vmem>>, vector<1x32xf32>
    %c3 = arith.constant 3 : index
    %c0_11 = arith.constant 0 : index
    %27 = vector.load %arg3[%c3, %c0_11] : memref<4x32xf32, #tpu.memory_space<vmem>>, vector<1x32xf32>
    %cst_12 = arith.constant dense<0.000000e+00> : vector<16xf32>
    %28 = vector.multi_reduction <add>, %25, %cst_12 [1] : vector<16x32xf32> to vector<16xf32>
    %29 = vector.shape_cast %28 : vector<16xf32> to vector<16x1xf32>
    %cst_13 = arith.constant 3.200000e+01 : f32
    %30 = vector.broadcast %cst_13 : f32 to vector<16x1xf32>
    %31 = arith.divf %29, %30 : vector<16x1xf32>
    %32 = vector.broadcast %31 : vector<16x1xf32> to vector<16x32xf32>
    %33 = arith.subf %25, %32 : vector<16x32xf32>
    %34 = arith.mulf %33, %33 : vector<16x32xf32>
    %cst_14 = arith.constant dense<0.000000e+00> : vector<16xf32>
    %35 = vector.multi_reduction <add>, %34, %cst_14 [1] : vector<16x32xf32> to vector<16xf32>
    %36 = vector.shape_cast %35 : vector<16xf32> to vector<16x1xf32>
    %cst_15 = arith.constant 3.200000e+01 : f32
    %37 = vector.broadcast %cst_15 : f32 to vector<16x1xf32>
    %38 = arith.divf %36, %37 : vector<16x1xf32>
    %39 = vector.broadcast %31 : vector<16x1xf32> to vector<16x32xf32>
    %40 = arith.subf %25, %39 : vector<16x32xf32>
    %cst_16 = arith.constant 9.99999974E-6 : f32
    %41 = vector.broadcast %cst_16 : f32 to vector<16x1xf32>
    %42 = arith.addf %38, %41 : vector<16x1xf32>
    %43 = math.rsqrt %42 : vector<16x1xf32>
    %44 = vector.broadcast %43 : vector<16x1xf32> to vector<16x32xf32>
    %45 = arith.mulf %40, %44 : vector<16x32xf32>
    %46 = vector.broadcast %26 : vector<1x32xf32> to vector<16x32xf32>
    %47 = arith.mulf %45, %46 : vector<16x32xf32>
    %48 = vector.broadcast %27 : vector<1x32xf32> to vector<16x32xf32>
    %49 = arith.addf %47, %48 : vector<16x32xf32>
    %c0_17 = arith.constant 0 : index
    %c0_18 = arith.constant 0 : index
    %50 = vector.load %arg4[%c0_17, %c0_18] : memref<4x16xf32, #tpu.memory_space<vmem>>, vector<1x16xf32>
    %c1_19 = arith.constant 1 : index
    %c0_20 = arith.constant 0 : index
    %51 = vector.load %arg4[%c1_19, %c0_20] : memref<4x16xf32, #tpu.memory_space<vmem>>, vector<1x16xf32>
    %c2_21 = arith.constant 2 : index
    %c0_22 = arith.constant 0 : index
    %52 = vector.load %arg4[%c2_21, %c0_22] : memref<4x16xf32, #tpu.memory_space<vmem>>, vector<1x16xf32>
    %c3_23 = arith.constant 3 : index
    %c0_24 = arith.constant 0 : index
    %53 = vector.load %arg4[%c3_23, %c0_24] : memref<4x16xf32, #tpu.memory_space<vmem>>, vector<1x16xf32>
    %cst_25 = arith.constant 0.000000e+00 : f32
    %54 = vector.broadcast %cst_25 : f32 to vector<16x32xf32>
    %c0_26 = arith.constant 0 : index
    %c0_27 = arith.constant 0 : index
    %55 = vector.load %arg5[%c0_26, %c0_27] : memref<192x32xf32, #tpu.memory_space<vmem>>, vector<16x32xf32>
    %c64 = arith.constant 64 : index
    %c0_28 = arith.constant 0 : index
    %56 = vector.load %arg5[%c64, %c0_28] : memref<192x32xf32, #tpu.memory_space<vmem>>, vector<16x32xf32>
    %c128 = arith.constant 128 : index
    %c0_29 = arith.constant 0 : index
    %57 = vector.load %arg5[%c128, %c0_29] : memref<192x32xf32, #tpu.memory_space<vmem>>, vector<16x32xf32>
    %c0_30 = arith.constant 0 : index
    %c0_31 = arith.constant 0 : index
    %58 = vector.load %arg6[%c0_30, %c0_31] : memref<64x32xf32, #tpu.memory_space<vmem>>, vector<16x32xf32>
    %cst_32 = arith.constant dense<0.000000e+00> : vector<16x16xf32>
    %59 = tpu.matmul %49, %55, %cst_32 {dimension_numbers = #tpu.dot_dimension_numbers<[1], [1], [0], [0], [0, 0, 1, 0], [], []>} : vector<16x32xf32>, vector<16x32xf32>, vector<16x16xf32> -> vector<16x16xf32>
    %cst_33 = arith.constant dense<0.000000e+00> : vector<16x16xf32>
    %60 = tpu.matmul %49, %56, %cst_33 {dimension_numbers = #tpu.dot_dimension_numbers<[1], [1], [0], [0], [0, 0, 1, 0], [], []>} : vector<16x32xf32>, vector<16x32xf32>, vector<16x16xf32> -> vector<16x16xf32>
    %cst_34 = arith.constant dense<0.000000e+00> : vector<16x16xf32>
    %61 = tpu.matmul %49, %57, %cst_34 {dimension_numbers = #tpu.dot_dimension_numbers<[1], [1], [0], [0], [0, 0, 1, 0], [], []>} : vector<16x32xf32>, vector<16x32xf32>, vector<16x16xf32> -> vector<16x16xf32>
    %cst_35 = arith.constant dense<0.000000e+00> : vector<32x16xf32>
    %62 = tpu.matmul %24, %56, %cst_35 {dimension_numbers = #tpu.dot_dimension_numbers<[1], [1], [0], [0], [0, 0, 1, 0], [], []>} : vector<32x32xf32>, vector<16x32xf32>, vector<32x16xf32> -> vector<32x16xf32>
    %cst_36 = arith.constant dense<0.000000e+00> : vector<32x16xf32>
    %63 = tpu.matmul %24, %57, %cst_36 {dimension_numbers = #tpu.dot_dimension_numbers<[1], [1], [0], [0], [0, 0, 1, 0], [], []>} : vector<32x32xf32>, vector<16x32xf32>, vector<32x16xf32> -> vector<32x16xf32>
    %cst_37 = arith.constant dense<0.000000e+00> : vector<16xf32>
    %64 = vector.multi_reduction <add>, %59, %cst_37 [1] : vector<16x16xf32> to vector<16xf32>
    %65 = vector.shape_cast %64 : vector<16xf32> to vector<16x1xf32>
    %cst_38 = arith.constant 1.600000e+01 : f32
    %66 = vector.broadcast %cst_38 : f32 to vector<16x1xf32>
    %67 = arith.divf %65, %66 : vector<16x1xf32>
    %68 = vector.broadcast %67 : vector<16x1xf32> to vector<16x16xf32>
    %69 = arith.subf %59, %68 : vector<16x16xf32>
    %70 = arith.mulf %69, %69 : vector<16x16xf32>
    %cst_39 = arith.constant dense<0.000000e+00> : vector<16xf32>
    %71 = vector.multi_reduction <add>, %70, %cst_39 [1] : vector<16x16xf32> to vector<16xf32>
    %72 = vector.shape_cast %71 : vector<16xf32> to vector<16x1xf32>
    %cst_40 = arith.constant 1.600000e+01 : f32
    %73 = vector.broadcast %cst_40 : f32 to vector<16x1xf32>
    %74 = arith.divf %72, %73 : vector<16x1xf32>
    %75 = vector.broadcast %67 : vector<16x1xf32> to vector<16x16xf32>
    %76 = arith.subf %59, %75 : vector<16x16xf32>
    %cst_41 = arith.constant 9.99999974E-6 : f32
    %77 = vector.broadcast %cst_41 : f32 to vector<16x1xf32>
    %78 = arith.addf %74, %77 : vector<16x1xf32>
    %79 = math.rsqrt %78 : vector<16x1xf32>
    %80 = vector.broadcast %79 : vector<16x1xf32> to vector<16x16xf32>
    %81 = arith.mulf %76, %80 : vector<16x16xf32>
    %82 = vector.broadcast %50 : vector<1x16xf32> to vector<16x16xf32>
    %83 = arith.mulf %81, %82 : vector<16x16xf32>
    %84 = vector.broadcast %51 : vector<1x16xf32> to vector<16x16xf32>
    %85 = arith.addf %83, %84 : vector<16x16xf32>
    %cst_42 = arith.constant dense<0.000000e+00> : vector<16xf32>
    %86 = vector.multi_reduction <add>, %60, %cst_42 [1] : vector<16x16xf32> to vector<16xf32>
    %87 = vector.shape_cast %86 : vector<16xf32> to vector<16x1xf32>
    %cst_43 = arith.constant 1.600000e+01 : f32
    %88 = vector.broadcast %cst_43 : f32 to vector<16x1xf32>
    %89 = arith.divf %87, %88 : vector<16x1xf32>
    %90 = vector.broadcast %89 : vector<16x1xf32> to vector<16x16xf32>
    %91 = arith.subf %60, %90 : vector<16x16xf32>
    %92 = arith.mulf %91, %91 : vector<16x16xf32>
    %cst_44 = arith.constant dense<0.000000e+00> : vector<16xf32>
    %93 = vector.multi_reduction <add>, %92, %cst_44 [1] : vector<16x16xf32> to vector<16xf32>
    %94 = vector.shape_cast %93 : vector<16xf32> to vector<16x1xf32>
    %cst_45 = arith.constant 1.600000e+01 : f32
    %95 = vector.broadcast %cst_45 : f32 to vector<16x1xf32>
    %96 = arith.divf %94, %95 : vector<16x1xf32>
    %97 = vector.broadcast %89 : vector<16x1xf32> to vector<16x16xf32>
    %98 = arith.subf %60, %97 : vector<16x16xf32>
    %cst_46 = arith.constant 9.99999974E-6 : f32
    %99 = vector.broadcast %cst_46 : f32 to vector<16x1xf32>
    %100 = arith.addf %96, %99 : vector<16x1xf32>
    %101 = math.rsqrt %100 : vector<16x1xf32>
    %102 = vector.broadcast %101 : vector<16x1xf32> to vector<16x16xf32>
    %103 = arith.mulf %98, %102 : vector<16x16xf32>
    %104 = vector.broadcast %52 : vector<1x16xf32> to vector<16x16xf32>
    %105 = arith.mulf %103, %104 : vector<16x16xf32>
    %106 = vector.broadcast %53 : vector<1x16xf32> to vector<16x16xf32>
    %107 = arith.addf %105, %106 : vector<16x16xf32>
    %cst_47 = arith.constant dense<0.000000e+00> : vector<32xf32>
    %108 = vector.multi_reduction <add>, %62, %cst_47 [1] : vector<32x16xf32> to vector<32xf32>
    %109 = vector.shape_cast %108 : vector<32xf32> to vector<32x1xf32>
    %cst_48 = arith.constant 1.600000e+01 : f32
    %110 = vector.broadcast %cst_48 : f32 to vector<32x1xf32>
    %111 = arith.divf %109, %110 : vector<32x1xf32>
    %112 = vector.broadcast %111 : vector<32x1xf32> to vector<32x16xf32>
    %113 = arith.subf %62, %112 : vector<32x16xf32>
    %114 = arith.mulf %113, %113 : vector<32x16xf32>
    %cst_49 = arith.constant dense<0.000000e+00> : vector<32xf32>
    %115 = vector.multi_reduction <add>, %114, %cst_49 [1] : vector<32x16xf32> to vector<32xf32>
    %116 = vector.shape_cast %115 : vector<32xf32> to vector<32x1xf32>
    %cst_50 = arith.constant 1.600000e+01 : f32
    %117 = vector.broadcast %cst_50 : f32 to vector<32x1xf32>
    %118 = arith.divf %116, %117 : vector<32x1xf32>
    %119 = vector.broadcast %111 : vector<32x1xf32> to vector<32x16xf32>
    %120 = arith.subf %62, %119 : vector<32x16xf32>
    %cst_51 = arith.constant 9.99999974E-6 : f32
    %121 = vector.broadcast %cst_51 : f32 to vector<32x1xf32>
    %122 = arith.addf %118, %121 : vector<32x1xf32>
    %123 = math.rsqrt %122 : vector<32x1xf32>
    %124 = vector.broadcast %123 : vector<32x1xf32> to vector<32x16xf32>
    %125 = arith.mulf %120, %124 : vector<32x16xf32>
    %126 = vector.broadcast %52 : vector<1x16xf32> to vector<32x16xf32>
    %127 = arith.mulf %125, %126 : vector<32x16xf32>
    %128 = vector.broadcast %53 : vector<1x16xf32> to vector<32x16xf32>
    %129 = arith.addf %127, %128 : vector<32x16xf32>
    %130 = vector.shape_cast %85 : vector<16x16xf32> to vector<2x8x16xf32>
    %131 = vector.shape_cast %129 : vector<32x16xf32> to vector<2x16x16xf32>
    %132 = vector.shape_cast %107 : vector<16x16xf32> to vector<2x8x16xf32>
    %133 = vector.shape_cast %63 : vector<32x16xf32> to vector<2x16x16xf32>
    %134 = vector.shape_cast %61 : vector<16x16xf32> to vector<2x8x16xf32>
    "tpu.trace_start"() <{level = 10 : i32, message = "bqd,bkd->bqk"}> : () -> ()
    %cst_52 = arith.constant dense<0.000000e+00> : vector<2x8x16xf32>
    %135 = tpu.matmul %130, %131, %cst_52 {dimension_numbers = #tpu.dot_dimension_numbers<[2], [2], [1], [1], [0, 0, 0, 1, 1, 1], [0], [0]>} : vector<2x8x16xf32>, vector<2x16x16xf32>, vector<2x8x16xf32> -> vector<2x8x16xf32>
    %cst_53 = arith.constant dense<0.000000e+00> : vector<2x8x8xf32>
    %136 = tpu.matmul %130, %132, %cst_53 {dimension_numbers = #tpu.dot_dimension_numbers<[2], [2], [1], [1], [0, 0, 0, 1, 1, 1], [0], [0]>} : vector<2x8x16xf32>, vector<2x8x16xf32>, vector<2x8x8xf32> -> vector<2x8x8xf32>
    "tpu.trace_stop"() : () -> ()
    %cst_54 = arith.constant dense<0xFF800000> : vector<2x8xf32>
    %137 = vector.multi_reduction <maximumf>, %135, %cst_54 [2] : vector<2x8x16xf32> to vector<2x8xf32>
    %138 = vector.shape_cast %137 : vector<2x8xf32> to vector<2x8x1xf32>
    %cst_55 = arith.constant dense<0xFF800000> : vector<2x8xf32>
    %139 = vector.multi_reduction <maximumf>, %136, %cst_55 [2] : vector<2x8x8xf32> to vector<2x8xf32>
    %140 = vector.shape_cast %139 : vector<2x8xf32> to vector<2x8x1xf32>
    %141 = arith.maximumf %138, %140 : vector<2x8x1xf32>
    %142 = vector.broadcast %141 : vector<2x8x1xf32> to vector<2x8x16xf32>
    %143 = arith.subf %135, %142 : vector<2x8x16xf32>
    %144 = math.exp %143 : vector<2x8x16xf32>
    %145 = vector.broadcast %141 : vector<2x8x1xf32> to vector<2x8x8xf32>
    %146 = arith.subf %136, %145 : vector<2x8x8xf32>
    %147 = math.exp %146 : vector<2x8x8xf32>
    %cst_56 = arith.constant dense<0.000000e+00> : vector<2x8xf32>
    %148 = vector.multi_reduction <add>, %144, %cst_56 [2] : vector<2x8x16xf32> to vector<2x8xf32>
    %149 = vector.shape_cast %148 : vector<2x8xf32> to vector<2x8x1xf32>
    %cst_57 = arith.constant dense<0.000000e+00> : vector<2x8xf32>
    %150 = vector.multi_reduction <add>, %147, %cst_57 [2] : vector<2x8x8xf32> to vector<2x8xf32>
    %151 = vector.shape_cast %150 : vector<2x8xf32> to vector<2x8x1xf32>
    %152 = arith.addf %149, %151 : vector<2x8x1xf32>
    "tpu.trace_start"() <{level = 10 : i32, message = "bqk,bkd->bqd"}> : () -> ()
    %cst_58 = arith.constant dense<0.000000e+00> : vector<2x8x16xf32>
    %153 = tpu.matmul %144, %133, %cst_58 {dimension_numbers = #tpu.dot_dimension_numbers<[2], [1], [1], [2], [0, 0, 0, 1, 1, 2], [0], [0]>} : vector<2x8x16xf32>, vector<2x16x16xf32>, vector<2x8x16xf32> -> vector<2x8x16xf32>
    %cst_59 = arith.constant dense<0.000000e+00> : vector<2x8x16xf32>
    %154 = tpu.matmul %147, %134, %cst_59 {dimension_numbers = #tpu.dot_dimension_numbers<[2], [1], [1], [2], [0, 0, 0, 1, 1, 2], [0], [0]>} : vector<2x8x8xf32>, vector<2x8x16xf32>, vector<2x8x16xf32> -> vector<2x8x16xf32>
    "tpu.trace_stop"() : () -> ()
    %155 = arith.addf %153, %154 : vector<2x8x16xf32>
    %156 = tpu.reciprocal %152 : vector<2x8x1xf32> -> vector<2x8x1xf32>
    %157 = vector.broadcast %156 : vector<2x8x1xf32> to vector<2x8x16xf32>
    %158 = arith.mulf %155, %157 : vector<2x8x16xf32>
    %159 = vector.shape_cast %158 : vector<2x8x16xf32> to vector<16x16xf32>
    %cst_60 = arith.constant dense<0.000000e+00> : vector<16x32xf32>
    %160 = tpu.matmul %159, %58, %cst_60 {dimension_numbers = #tpu.dot_dimension_numbers<[1], [0], [0], [1], [0, 0, 1, 1], [], []>} : vector<16x16xf32>, vector<16x32xf32>, vector<16x32xf32> -> vector<16x32xf32>
    %161 = arith.addf %54, %160 : vector<16x32xf32>
    %c16 = arith.constant 16 : index
    %c0_61 = arith.constant 0 : index
    %162 = vector.load %arg5[%c16, %c0_61] : memref<192x32xf32, #tpu.memory_space<vmem>>, vector<16x32xf32>
    %c80 = arith.constant 80 : index
    %c0_62 = arith.constant 0 : index
    %163 = vector.load %arg5[%c80, %c0_62] : memref<192x32xf32, #tpu.memory_space<vmem>>, vector<16x32xf32>
    %c144 = arith.constant 144 : index
    %c0_63 = arith.constant 0 : index
    %164 = vector.load %arg5[%c144, %c0_63] : memref<192x32xf32, #tpu.memory_space<vmem>>, vector<16x32xf32>
    %c16_64 = arith.constant 16 : index
    %c0_65 = arith.constant 0 : index
    %165 = vector.load %arg6[%c16_64, %c0_65] : memref<64x32xf32, #tpu.memory_space<vmem>>, vector<16x32xf32>
    %cst_66 = arith.constant dense<0.000000e+00> : vector<16x16xf32>
    %166 = tpu.matmul %49, %162, %cst_66 {dimension_numbers = #tpu.dot_dimension_numbers<[1], [1], [0], [0], [0, 0, 1, 0], [], []>} : vector<16x32xf32>, vector<16x32xf32>, vector<16x16xf32> -> vector<16x16xf32>
    %cst_67 = arith.constant dense<0.000000e+00> : vector<16x16xf32>
    %167 = tpu.matmul %49, %163, %cst_67 {dimension_numbers = #tpu.dot_dimension_numbers<[1], [1], [0], [0], [0, 0, 1, 0], [], []>} : vector<16x32xf32>, vector<16x32xf32>, vector<16x16xf32> -> vector<16x16xf32>
    %cst_68 = arith.constant dense<0.000000e+00> : vector<16x16xf32>
    %168 = tpu.matmul %49, %164, %cst_68 {dimension_numbers = #tpu.dot_dimension_numbers<[1], [1], [0], [0], [0, 0, 1, 0], [], []>} : vector<16x32xf32>, vector<16x32xf32>, vector<16x16xf32> -> vector<16x16xf32>
    %cst_69 = arith.constant dense<0.000000e+00> : vector<32x16xf32>
    %169 = tpu.matmul %24, %163, %cst_69 {dimension_numbers = #tpu.dot_dimension_numbers<[1], [1], [0], [0], [0, 0, 1, 0], [], []>} : vector<32x32xf32>, vector<16x32xf32>, vector<32x16xf32> -> vector<32x16xf32>
    %cst_70 = arith.constant dense<0.000000e+00> : vector<32x16xf32>
    %170 = tpu.matmul %24, %164, %cst_70 {dimension_numbers = #tpu.dot_dimension_numbers<[1], [1], [0], [0], [0, 0, 1, 0], [], []>} : vector<32x32xf32>, vector<16x32xf32>, vector<32x16xf32> -> vector<32x16xf32>
    %cst_71 = arith.constant dense<0.000000e+00> : vector<16xf32>
    %171 = vector.multi_reduction <add>, %166, %cst_71 [1] : vector<16x16xf32> to vector<16xf32>
    %172 = vector.shape_cast %171 : vector<16xf32> to vector<16x1xf32>
    %cst_72 = arith.constant 1.600000e+01 : f32
    %173 = vector.broadcast %cst_72 : f32 to vector<16x1xf32>
    %174 = arith.divf %172, %173 : vector<16x1xf32>
    %175 = vector.broadcast %174 : vector<16x1xf32> to vector<16x16xf32>
    %176 = arith.subf %166, %175 : vector<16x16xf32>
    %177 = arith.mulf %176, %176 : vector<16x16xf32>
    %cst_73 = arith.constant dense<0.000000e+00> : vector<16xf32>
    %178 = vector.multi_reduction <add>, %177, %cst_73 [1] : vector<16x16xf32> to vector<16xf32>
    %179 = vector.shape_cast %178 : vector<16xf32> to vector<16x1xf32>
    %cst_74 = arith.constant 1.600000e+01 : f32
    %180 = vector.broadcast %cst_74 : f32 to vector<16x1xf32>
    %181 = arith.divf %179, %180 : vector<16x1xf32>
    %182 = vector.broadcast %174 : vector<16x1xf32> to vector<16x16xf32>
    %183 = arith.subf %166, %182 : vector<16x16xf32>
    %cst_75 = arith.constant 9.99999974E-6 : f32
    %184 = vector.broadcast %cst_75 : f32 to vector<16x1xf32>
    %185 = arith.addf %181, %184 : vector<16x1xf32>
    %186 = math.rsqrt %185 : vector<16x1xf32>
    %187 = vector.broadcast %186 : vector<16x1xf32> to vector<16x16xf32>
    %188 = arith.mulf %183, %187 : vector<16x16xf32>
    %189 = vector.broadcast %50 : vector<1x16xf32> to vector<16x16xf32>
    %190 = arith.mulf %188, %189 : vector<16x16xf32>
    %191 = vector.broadcast %51 : vector<1x16xf32> to vector<16x16xf32>
    %192 = arith.addf %190, %191 : vector<16x16xf32>
    %cst_76 = arith.constant dense<0.000000e+00> : vector<16xf32>
    %193 = vector.multi_reduction <add>, %167, %cst_76 [1] : vector<16x16xf32> to vector<16xf32>
    %194 = vector.shape_cast %193 : vector<16xf32> to vector<16x1xf32>
    %cst_77 = arith.constant 1.600000e+01 : f32
    %195 = vector.broadcast %cst_77 : f32 to vector<16x1xf32>
    %196 = arith.divf %194, %195 : vector<16x1xf32>
    %197 = vector.broadcast %196 : vector<16x1xf32> to vector<16x16xf32>
    %198 = arith.subf %167, %197 : vector<16x16xf32>
    %199 = arith.mulf %198, %198 : vector<16x16xf32>
    %cst_78 = arith.constant dense<0.000000e+00> : vector<16xf32>
    %200 = vector.multi_reduction <add>, %199, %cst_78 [1] : vector<16x16xf32> to vector<16xf32>
    %201 = vector.shape_cast %200 : vector<16xf32> to vector<16x1xf32>
    %cst_79 = arith.constant 1.600000e+01 : f32
    %202 = vector.broadcast %cst_79 : f32 to vector<16x1xf32>
    %203 = arith.divf %201, %202 : vector<16x1xf32>
    %204 = vector.broadcast %196 : vector<16x1xf32> to vector<16x16xf32>
    %205 = arith.subf %167, %204 : vector<16x16xf32>
    %cst_80 = arith.constant 9.99999974E-6 : f32
    %206 = vector.broadcast %cst_80 : f32 to vector<16x1xf32>
    %207 = arith.addf %203, %206 : vector<16x1xf32>
    %208 = math.rsqrt %207 : vector<16x1xf32>
    %209 = vector.broadcast %208 : vector<16x1xf32> to vector<16x16xf32>
    %210 = arith.mulf %205, %209 : vector<16x16xf32>
    %211 = vector.broadcast %52 : vector<1x16xf32> to vector<16x16xf32>
    %212 = arith.mulf %210, %211 : vector<16x16xf32>
    %213 = vector.broadcast %53 : vector<1x16xf32> to vector<16x16xf32>
    %214 = arith.addf %212, %213 : vector<16x16xf32>
    %cst_81 = arith.constant dense<0.000000e+00> : vector<32xf32>
    %215 = vector.multi_reduction <add>, %169, %cst_81 [1] : vector<32x16xf32> to vector<32xf32>
    %216 = vector.shape_cast %215 : vector<32xf32> to vector<32x1xf32>
    %cst_82 = arith.constant 1.600000e+01 : f32
    %217 = vector.broadcast %cst_82 : f32 to vector<32x1xf32>
    %218 = arith.divf %216, %217 : vector<32x1xf32>
    %219 = vector.broadcast %218 : vector<32x1xf32> to vector<32x16xf32>
    %220 = arith.subf %169, %219 : vector<32x16xf32>
    %221 = arith.mulf %220, %220 : vector<32x16xf32>
    %cst_83 = arith.constant dense<0.000000e+00> : vector<32xf32>
    %222 = vector.multi_reduction <add>, %221, %cst_83 [1] : vector<32x16xf32> to vector<32xf32>
    %223 = vector.shape_cast %222 : vector<32xf32> to vector<32x1xf32>
    %cst_84 = arith.constant 1.600000e+01 : f32
    %224 = vector.broadcast %cst_84 : f32 to vector<32x1xf32>
    %225 = arith.divf %223, %224 : vector<32x1xf32>
    %226 = vector.broadcast %218 : vector<32x1xf32> to vector<32x16xf32>
    %227 = arith.subf %169, %226 : vector<32x16xf32>
    %cst_85 = arith.constant 9.99999974E-6 : f32
    %228 = vector.broadcast %cst_85 : f32 to vector<32x1xf32>
    %229 = arith.addf %225, %228 : vector<32x1xf32>
    %230 = math.rsqrt %229 : vector<32x1xf32>
    %231 = vector.broadcast %230 : vector<32x1xf32> to vector<32x16xf32>
    %232 = arith.mulf %227, %231 : vector<32x16xf32>
    %233 = vector.broadcast %52 : vector<1x16xf32> to vector<32x16xf32>
    %234 = arith.mulf %232, %233 : vector<32x16xf32>
    %235 = vector.broadcast %53 : vector<1x16xf32> to vector<32x16xf32>
    %236 = arith.addf %234, %235 : vector<32x16xf32>
    %237 = vector.shape_cast %192 : vector<16x16xf32> to vector<2x8x16xf32>
    %238 = vector.shape_cast %236 : vector<32x16xf32> to vector<2x16x16xf32>
    %239 = vector.shape_cast %214 : vector<16x16xf32> to vector<2x8x16xf32>
    %240 = vector.shape_cast %170 : vector<32x16xf32> to vector<2x16x16xf32>
    %241 = vector.shape_cast %168 : vector<16x16xf32> to vector<2x8x16xf32>
    "tpu.trace_start"() <{level = 10 : i32, message = "bqd,bkd->bqk"}> : () -> ()
    %cst_86 = arith.constant dense<0.000000e+00> : vector<2x8x16xf32>
    %242 = tpu.matmul %237, %238, %cst_86 {dimension_numbers = #tpu.dot_dimension_numbers<[2], [2], [1], [1], [0, 0, 0, 1, 1, 1], [0], [0]>} : vector<2x8x16xf32>, vector<2x16x16xf32>, vector<2x8x16xf32> -> vector<2x8x16xf32>
    %cst_87 = arith.constant dense<0.000000e+00> : vector<2x8x8xf32>
    %243 = tpu.matmul %237, %239, %cst_87 {dimension_numbers = #tpu.dot_dimension_numbers<[2], [2], [1], [1], [0, 0, 0, 1, 1, 1], [0], [0]>} : vector<2x8x16xf32>, vector<2x8x16xf32>, vector<2x8x8xf32> -> vector<2x8x8xf32>
    "tpu.trace_stop"() : () -> ()
    %cst_88 = arith.constant dense<0xFF800000> : vector<2x8xf32>
    %244 = vector.multi_reduction <maximumf>, %242, %cst_88 [2] : vector<2x8x16xf32> to vector<2x8xf32>
    %245 = vector.shape_cast %244 : vector<2x8xf32> to vector<2x8x1xf32>
    %cst_89 = arith.constant dense<0xFF800000> : vector<2x8xf32>
    %246 = vector.multi_reduction <maximumf>, %243, %cst_89 [2] : vector<2x8x8xf32> to vector<2x8xf32>
    %247 = vector.shape_cast %246 : vector<2x8xf32> to vector<2x8x1xf32>
    %248 = arith.maximumf %245, %247 : vector<2x8x1xf32>
    %249 = vector.broadcast %248 : vector<2x8x1xf32> to vector<2x8x16xf32>
    %250 = arith.subf %242, %249 : vector<2x8x16xf32>
    %251 = math.exp %250 : vector<2x8x16xf32>
    %252 = vector.broadcast %248 : vector<2x8x1xf32> to vector<2x8x8xf32>
    %253 = arith.subf %243, %252 : vector<2x8x8xf32>
    %254 = math.exp %253 : vector<2x8x8xf32>
    %cst_90 = arith.constant dense<0.000000e+00> : vector<2x8xf32>
    %255 = vector.multi_reduction <add>, %251, %cst_90 [2] : vector<2x8x16xf32> to vector<2x8xf32>
    %256 = vector.shape_cast %255 : vector<2x8xf32> to vector<2x8x1xf32>
    %cst_91 = arith.constant dense<0.000000e+00> : vector<2x8xf32>
    %257 = vector.multi_reduction <add>, %254, %cst_91 [2] : vector<2x8x8xf32> to vector<2x8xf32>
    %258 = vector.shape_cast %257 : vector<2x8xf32> to vector<2x8x1xf32>
    %259 = arith.addf %256, %258 : vector<2x8x1xf32>
    "tpu.trace_start"() <{level = 10 : i32, message = "bqk,bkd->bqd"}> : () -> ()
    %cst_92 = arith.constant dense<0.000000e+00> : vector<2x8x16xf32>
    %260 = tpu.matmul %251, %240, %cst_92 {dimension_numbers = #tpu.dot_dimension_numbers<[2], [1], [1], [2], [0, 0, 0, 1, 1, 2], [0], [0]>} : vector<2x8x16xf32>, vector<2x16x16xf32>, vector<2x8x16xf32> -> vector<2x8x16xf32>
    %cst_93 = arith.constant dense<0.000000e+00> : vector<2x8x16xf32>
    %261 = tpu.matmul %254, %241, %cst_93 {dimension_numbers = #tpu.dot_dimension_numbers<[2], [1], [1], [2], [0, 0, 0, 1, 1, 2], [0], [0]>} : vector<2x8x8xf32>, vector<2x8x16xf32>, vector<2x8x16xf32> -> vector<2x8x16xf32>
    "tpu.trace_stop"() : () -> ()
    %262 = arith.addf %260, %261 : vector<2x8x16xf32>
    %263 = tpu.reciprocal %259 : vector<2x8x1xf32> -> vector<2x8x1xf32>
    %264 = vector.broadcast %263 : vector<2x8x1xf32> to vector<2x8x16xf32>
    %265 = arith.mulf %262, %264 : vector<2x8x16xf32>
    %266 = vector.shape_cast %265 : vector<2x8x16xf32> to vector<16x16xf32>
    %cst_94 = arith.constant dense<0.000000e+00> : vector<16x32xf32>
    %267 = tpu.matmul %266, %165, %cst_94 {dimension_numbers = #tpu.dot_dimension_numbers<[1], [0], [0], [1], [0, 0, 1, 1], [], []>} : vector<16x16xf32>, vector<16x32xf32>, vector<16x32xf32> -> vector<16x32xf32>
    %268 = arith.addf %161, %267 : vector<16x32xf32>
    %c32 = arith.constant 32 : index
    %c0_95 = arith.constant 0 : index
    %269 = vector.load %arg5[%c32, %c0_95] : memref<192x32xf32, #tpu.memory_space<vmem>>, vector<16x32xf32>
    %c96 = arith.constant 96 : index
    %c0_96 = arith.constant 0 : index
    %270 = vector.load %arg5[%c96, %c0_96] : memref<192x32xf32, #tpu.memory_space<vmem>>, vector<16x32xf32>
    %c160 = arith.constant 160 : index
    %c0_97 = arith.constant 0 : index
    %271 = vector.load %arg5[%c160, %c0_97] : memref<192x32xf32, #tpu.memory_space<vmem>>, vector<16x32xf32>
    %c32_98 = arith.constant 32 : index
    %c0_99 = arith.constant 0 : index
    %272 = vector.load %arg6[%c32_98, %c0_99] : memref<64x32xf32, #tpu.memory_space<vmem>>, vector<16x32xf32>
    %cst_100 = arith.constant dense<0.000000e+00> : vector<16x16xf32>
    %273 = tpu.matmul %49, %269, %cst_100 {dimension_numbers = #tpu.dot_dimension_numbers<[1], [1], [0], [0], [0, 0, 1, 0], [], []>} : vector<16x32xf32>, vector<16x32xf32>, vector<16x16xf32> -> vector<16x16xf32>
    %cst_101 = arith.constant dense<0.000000e+00> : vector<16x16xf32>
    %274 = tpu.matmul %49, %270, %cst_101 {dimension_numbers = #tpu.dot_dimension_numbers<[1], [1], [0], [0], [0, 0, 1, 0], [], []>} : vector<16x32xf32>, vector<16x32xf32>, vector<16x16xf32> -> vector<16x16xf32>
    %cst_102 = arith.constant dense<0.000000e+00> : vector<16x16xf32>
    %275 = tpu.matmul %49, %271, %cst_102 {dimension_numbers = #tpu.dot_dimension_numbers<[1], [1], [0], [0], [0, 0, 1, 0], [], []>} : vector<16x32xf32>, vector<16x32xf32>, vector<16x16xf32> -> vector<16x16xf32>
    %cst_103 = arith.constant dense<0.000000e+00> : vector<32x16xf32>
    %276 = tpu.matmul %24, %270, %cst_103 {dimension_numbers = #tpu.dot_dimension_numbers<[1], [1], [0], [0], [0, 0, 1, 0], [], []>} : vector<32x32xf32>, vector<16x32xf32>, vector<32x16xf32> -> vector<32x16xf32>
    %cst_104 = arith.constant dense<0.000000e+00> : vector<32x16xf32>
    %277 = tpu.matmul %24, %271, %cst_104 {dimension_numbers = #tpu.dot_dimension_numbers<[1], [1], [0], [0], [0, 0, 1, 0], [], []>} : vector<32x32xf32>, vector<16x32xf32>, vector<32x16xf32> -> vector<32x16xf32>
    %cst_105 = arith.constant dense<0.000000e+00> : vector<16xf32>
    %278 = vector.multi_reduction <add>, %273, %cst_105 [1] : vector<16x16xf32> to vector<16xf32>
    %279 = vector.shape_cast %278 : vector<16xf32> to vector<16x1xf32>
    %cst_106 = arith.constant 1.600000e+01 : f32
    %280 = vector.broadcast %cst_106 : f32 to vector<16x1xf32>
    %281 = arith.divf %279, %280 : vector<16x1xf32>
    %282 = vector.broadcast %281 : vector<16x1xf32> to vector<16x16xf32>
    %283 = arith.subf %273, %282 : vector<16x16xf32>
    %284 = arith.mulf %283, %283 : vector<16x16xf32>
    %cst_107 = arith.constant dense<0.000000e+00> : vector<16xf32>
    %285 = vector.multi_reduction <add>, %284, %cst_107 [1] : vector<16x16xf32> to vector<16xf32>
    %286 = vector.shape_cast %285 : vector<16xf32> to vector<16x1xf32>
    %cst_108 = arith.constant 1.600000e+01 : f32
    %287 = vector.broadcast %cst_108 : f32 to vector<16x1xf32>
    %288 = arith.divf %286, %287 : vector<16x1xf32>
    %289 = vector.broadcast %281 : vector<16x1xf32> to vector<16x16xf32>
    %290 = arith.subf %273, %289 : vector<16x16xf32>
    %cst_109 = arith.constant 9.99999974E-6 : f32
    %291 = vector.broadcast %cst_109 : f32 to vector<16x1xf32>
    %292 = arith.addf %288, %291 : vector<16x1xf32>
    %293 = math.rsqrt %292 : vector<16x1xf32>
    %294 = vector.broadcast %293 : vector<16x1xf32> to vector<16x16xf32>
    %295 = arith.mulf %290, %294 : vector<16x16xf32>
    %296 = vector.broadcast %50 : vector<1x16xf32> to vector<16x16xf32>
    %297 = arith.mulf %295, %296 : vector<16x16xf32>
    %298 = vector.broadcast %51 : vector<1x16xf32> to vector<16x16xf32>
    %299 = arith.addf %297, %298 : vector<16x16xf32>
    %cst_110 = arith.constant dense<0.000000e+00> : vector<16xf32>
    %300 = vector.multi_reduction <add>, %274, %cst_110 [1] : vector<16x16xf32> to vector<16xf32>
    %301 = vector.shape_cast %300 : vector<16xf32> to vector<16x1xf32>
    %cst_111 = arith.constant 1.600000e+01 : f32
    %302 = vector.broadcast %cst_111 : f32 to vector<16x1xf32>
    %303 = arith.divf %301, %302 : vector<16x1xf32>
    %304 = vector.broadcast %303 : vector<16x1xf32> to vector<16x16xf32>
    %305 = arith.subf %274, %304 : vector<16x16xf32>
    %306 = arith.mulf %305, %305 : vector<16x16xf32>
    %cst_112 = arith.constant dense<0.000000e+00> : vector<16xf32>
    %307 = vector.multi_reduction <add>, %306, %cst_112 [1] : vector<16x16xf32> to vector<16xf32>
    %308 = vector.shape_cast %307 : vector<16xf32> to vector<16x1xf32>
    %cst_113 = arith.constant 1.600000e+01 : f32
    %309 = vector.broadcast %cst_113 : f32 to vector<16x1xf32>
    %310 = arith.divf %308, %309 : vector<16x1xf32>
    %311 = vector.broadcast %303 : vector<16x1xf32> to vector<16x16xf32>
    %312 = arith.subf %274, %311 : vector<16x16xf32>
    %cst_114 = arith.constant 9.99999974E-6 : f32
    %313 = vector.broadcast %cst_114 : f32 to vector<16x1xf32>
    %314 = arith.addf %310, %313 : vector<16x1xf32>
    %315 = math.rsqrt %314 : vector<16x1xf32>
    %316 = vector.broadcast %315 : vector<16x1xf32> to vector<16x16xf32>
    %317 = arith.mulf %312, %316 : vector<16x16xf32>
    %318 = vector.broadcast %52 : vector<1x16xf32> to vector<16x16xf32>
    %319 = arith.mulf %317, %318 : vector<16x16xf32>
    %320 = vector.broadcast %53 : vector<1x16xf32> to vector<16x16xf32>
    %321 = arith.addf %319, %320 : vector<16x16xf32>
    %cst_115 = arith.constant dense<0.000000e+00> : vector<32xf32>
    %322 = vector.multi_reduction <add>, %276, %cst_115 [1] : vector<32x16xf32> to vector<32xf32>
    %323 = vector.shape_cast %322 : vector<32xf32> to vector<32x1xf32>
    %cst_116 = arith.constant 1.600000e+01 : f32
    %324 = vector.broadcast %cst_116 : f32 to vector<32x1xf32>
    %325 = arith.divf %323, %324 : vector<32x1xf32>
    %326 = vector.broadcast %325 : vector<32x1xf32> to vector<32x16xf32>
    %327 = arith.subf %276, %326 : vector<32x16xf32>
    %328 = arith.mulf %327, %327 : vector<32x16xf32>
    %cst_117 = arith.constant dense<0.000000e+00> : vector<32xf32>
    %329 = vector.multi_reduction <add>, %328, %cst_117 [1] : vector<32x16xf32> to vector<32xf32>
    %330 = vector.shape_cast %329 : vector<32xf32> to vector<32x1xf32>
    %cst_118 = arith.constant 1.600000e+01 : f32
    %331 = vector.broadcast %cst_118 : f32 to vector<32x1xf32>
    %332 = arith.divf %330, %331 : vector<32x1xf32>
    %333 = vector.broadcast %325 : vector<32x1xf32> to vector<32x16xf32>
    %334 = arith.subf %276, %333 : vector<32x16xf32>
    %cst_119 = arith.constant 9.99999974E-6 : f32
    %335 = vector.broadcast %cst_119 : f32 to vector<32x1xf32>
    %336 = arith.addf %332, %335 : vector<32x1xf32>
    %337 = math.rsqrt %336 : vector<32x1xf32>
    %338 = vector.broadcast %337 : vector<32x1xf32> to vector<32x16xf32>
    %339 = arith.mulf %334, %338 : vector<32x16xf32>
    %340 = vector.broadcast %52 : vector<1x16xf32> to vector<32x16xf32>
    %341 = arith.mulf %339, %340 : vector<32x16xf32>
    %342 = vector.broadcast %53 : vector<1x16xf32> to vector<32x16xf32>
    %343 = arith.addf %341, %342 : vector<32x16xf32>
    %344 = vector.shape_cast %299 : vector<16x16xf32> to vector<2x8x16xf32>
    %345 = vector.shape_cast %343 : vector<32x16xf32> to vector<2x16x16xf32>
    %346 = vector.shape_cast %321 : vector<16x16xf32> to vector<2x8x16xf32>
    %347 = vector.shape_cast %277 : vector<32x16xf32> to vector<2x16x16xf32>
    %348 = vector.shape_cast %275 : vector<16x16xf32> to vector<2x8x16xf32>
    "tpu.trace_start"() <{level = 10 : i32, message = "bqd,bkd->bqk"}> : () -> ()
    %cst_120 = arith.constant dense<0.000000e+00> : vector<2x8x16xf32>
    %349 = tpu.matmul %344, %345, %cst_120 {dimension_numbers = #tpu.dot_dimension_numbers<[2], [2], [1], [1], [0, 0, 0, 1, 1, 1], [0], [0]>} : vector<2x8x16xf32>, vector<2x16x16xf32>, vector<2x8x16xf32> -> vector<2x8x16xf32>
    %cst_121 = arith.constant dense<0.000000e+00> : vector<2x8x8xf32>
    %350 = tpu.matmul %344, %346, %cst_121 {dimension_numbers = #tpu.dot_dimension_numbers<[2], [2], [1], [1], [0, 0, 0, 1, 1, 1], [0], [0]>} : vector<2x8x16xf32>, vector<2x8x16xf32>, vector<2x8x8xf32> -> vector<2x8x8xf32>
    "tpu.trace_stop"() : () -> ()
    %cst_122 = arith.constant dense<0xFF800000> : vector<2x8xf32>
    %351 = vector.multi_reduction <maximumf>, %349, %cst_122 [2] : vector<2x8x16xf32> to vector<2x8xf32>
    %352 = vector.shape_cast %351 : vector<2x8xf32> to vector<2x8x1xf32>
    %cst_123 = arith.constant dense<0xFF800000> : vector<2x8xf32>
    %353 = vector.multi_reduction <maximumf>, %350, %cst_123 [2] : vector<2x8x8xf32> to vector<2x8xf32>
    %354 = vector.shape_cast %353 : vector<2x8xf32> to vector<2x8x1xf32>
    %355 = arith.maximumf %352, %354 : vector<2x8x1xf32>
    %356 = vector.broadcast %355 : vector<2x8x1xf32> to vector<2x8x16xf32>
    %357 = arith.subf %349, %356 : vector<2x8x16xf32>
    %358 = math.exp %357 : vector<2x8x16xf32>
    %359 = vector.broadcast %355 : vector<2x8x1xf32> to vector<2x8x8xf32>
    %360 = arith.subf %350, %359 : vector<2x8x8xf32>
    %361 = math.exp %360 : vector<2x8x8xf32>
    %cst_124 = arith.constant dense<0.000000e+00> : vector<2x8xf32>
    %362 = vector.multi_reduction <add>, %358, %cst_124 [2] : vector<2x8x16xf32> to vector<2x8xf32>
    %363 = vector.shape_cast %362 : vector<2x8xf32> to vector<2x8x1xf32>
    %cst_125 = arith.constant dense<0.000000e+00> : vector<2x8xf32>
    %364 = vector.multi_reduction <add>, %361, %cst_125 [2] : vector<2x8x8xf32> to vector<2x8xf32>
    %365 = vector.shape_cast %364 : vector<2x8xf32> to vector<2x8x1xf32>
    %366 = arith.addf %363, %365 : vector<2x8x1xf32>
    "tpu.trace_start"() <{level = 10 : i32, message = "bqk,bkd->bqd"}> : () -> ()
    %cst_126 = arith.constant dense<0.000000e+00> : vector<2x8x16xf32>
    %367 = tpu.matmul %358, %347, %cst_126 {dimension_numbers = #tpu.dot_dimension_numbers<[2], [1], [1], [2], [0, 0, 0, 1, 1, 2], [0], [0]>} : vector<2x8x16xf32>, vector<2x16x16xf32>, vector<2x8x16xf32> -> vector<2x8x16xf32>
    %cst_127 = arith.constant dense<0.000000e+00> : vector<2x8x16xf32>
    %368 = tpu.matmul %361, %348, %cst_127 {dimension_numbers = #tpu.dot_dimension_numbers<[2], [1], [1], [2], [0, 0, 0, 1, 1, 2], [0], [0]>} : vector<2x8x8xf32>, vector<2x8x16xf32>, vector<2x8x16xf32> -> vector<2x8x16xf32>
    "tpu.trace_stop"() : () -> ()
    %369 = arith.addf %367, %368 : vector<2x8x16xf32>
    %370 = tpu.reciprocal %366 : vector<2x8x1xf32> -> vector<2x8x1xf32>
    %371 = vector.broadcast %370 : vector<2x8x1xf32> to vector<2x8x16xf32>
    %372 = arith.mulf %369, %371 : vector<2x8x16xf32>
    %373 = vector.shape_cast %372 : vector<2x8x16xf32> to vector<16x16xf32>
    %cst_128 = arith.constant dense<0.000000e+00> : vector<16x32xf32>
    %374 = tpu.matmul %373, %272, %cst_128 {dimension_numbers = #tpu.dot_dimension_numbers<[1], [0], [0], [1], [0, 0, 1, 1], [], []>} : vector<16x16xf32>, vector<16x32xf32>, vector<16x32xf32> -> vector<16x32xf32>
    %375 = arith.addf %268, %374 : vector<16x32xf32>
    %c48 = arith.constant 48 : index
    %c0_129 = arith.constant 0 : index
    %376 = vector.load %arg5[%c48, %c0_129] : memref<192x32xf32, #tpu.memory_space<vmem>>, vector<16x32xf32>
    %c112 = arith.constant 112 : index
    %c0_130 = arith.constant 0 : index
    %377 = vector.load %arg5[%c112, %c0_130] : memref<192x32xf32, #tpu.memory_space<vmem>>, vector<16x32xf32>
    %c176 = arith.constant 176 : index
    %c0_131 = arith.constant 0 : index
    %378 = vector.load %arg5[%c176, %c0_131] : memref<192x32xf32, #tpu.memory_space<vmem>>, vector<16x32xf32>
    %c48_132 = arith.constant 48 : index
    %c0_133 = arith.constant 0 : index
    %379 = vector.load %arg6[%c48_132, %c0_133] : memref<64x32xf32, #tpu.memory_space<vmem>>, vector<16x32xf32>
    %cst_134 = arith.constant dense<0.000000e+00> : vector<16x16xf32>
    %380 = tpu.matmul %49, %376, %cst_134 {dimension_numbers = #tpu.dot_dimension_numbers<[1], [1], [0], [0], [0, 0, 1, 0], [], []>} : vector<16x32xf32>, vector<16x32xf32>, vector<16x16xf32> -> vector<16x16xf32>
    %cst_135 = arith.constant dense<0.000000e+00> : vector<16x16xf32>
    %381 = tpu.matmul %49, %377, %cst_135 {dimension_numbers = #tpu.dot_dimension_numbers<[1], [1], [0], [0], [0, 0, 1, 0], [], []>} : vector<16x32xf32>, vector<16x32xf32>, vector<16x16xf32> -> vector<16x16xf32>
    %cst_136 = arith.constant dense<0.000000e+00> : vector<16x16xf32>
    %382 = tpu.matmul %49, %378, %cst_136 {dimension_numbers = #tpu.dot_dimension_numbers<[1], [1], [0], [0], [0, 0, 1, 0], [], []>} : vector<16x32xf32>, vector<16x32xf32>, vector<16x16xf32> -> vector<16x16xf32>
    %cst_137 = arith.constant dense<0.000000e+00> : vector<32x16xf32>
    %383 = tpu.matmul %24, %377, %cst_137 {dimension_numbers = #tpu.dot_dimension_numbers<[1], [1], [0], [0], [0, 0, 1, 0], [], []>} : vector<32x32xf32>, vector<16x32xf32>, vector<32x16xf32> -> vector<32x16xf32>
    %cst_138 = arith.constant dense<0.000000e+00> : vector<32x16xf32>
    %384 = tpu.matmul %24, %378, %cst_138 {dimension_numbers = #tpu.dot_dimension_numbers<[1], [1], [0], [0], [0, 0, 1, 0], [], []>} : vector<32x32xf32>, vector<16x32xf32>, vector<32x16xf32> -> vector<32x16xf32>
    %cst_139 = arith.constant dense<0.000000e+00> : vector<16xf32>
    %385 = vector.multi_reduction <add>, %380, %cst_139 [1] : vector<16x16xf32> to vector<16xf32>
    %386 = vector.shape_cast %385 : vector<16xf32> to vector<16x1xf32>
    %cst_140 = arith.constant 1.600000e+01 : f32
    %387 = vector.broadcast %cst_140 : f32 to vector<16x1xf32>
    %388 = arith.divf %386, %387 : vector<16x1xf32>
    %389 = vector.broadcast %388 : vector<16x1xf32> to vector<16x16xf32>
    %390 = arith.subf %380, %389 : vector<16x16xf32>
    %391 = arith.mulf %390, %390 : vector<16x16xf32>
    %cst_141 = arith.constant dense<0.000000e+00> : vector<16xf32>
    %392 = vector.multi_reduction <add>, %391, %cst_141 [1] : vector<16x16xf32> to vector<16xf32>
    %393 = vector.shape_cast %392 : vector<16xf32> to vector<16x1xf32>
    %cst_142 = arith.constant 1.600000e+01 : f32
    %394 = vector.broadcast %cst_142 : f32 to vector<16x1xf32>
    %395 = arith.divf %393, %394 : vector<16x1xf32>
    %396 = vector.broadcast %388 : vector<16x1xf32> to vector<16x16xf32>
    %397 = arith.subf %380, %396 : vector<16x16xf32>
    %cst_143 = arith.constant 9.99999974E-6 : f32
    %398 = vector.broadcast %cst_143 : f32 to vector<16x1xf32>
    %399 = arith.addf %395, %398 : vector<16x1xf32>
    %400 = math.rsqrt %399 : vector<16x1xf32>
    %401 = vector.broadcast %400 : vector<16x1xf32> to vector<16x16xf32>
    %402 = arith.mulf %397, %401 : vector<16x16xf32>
    %403 = vector.broadcast %50 : vector<1x16xf32> to vector<16x16xf32>
    %404 = arith.mulf %402, %403 : vector<16x16xf32>
    %405 = vector.broadcast %51 : vector<1x16xf32> to vector<16x16xf32>
    %406 = arith.addf %404, %405 : vector<16x16xf32>
    %cst_144 = arith.constant dense<0.000000e+00> : vector<16xf32>
    %407 = vector.multi_reduction <add>, %381, %cst_144 [1] : vector<16x16xf32> to vector<16xf32>
    %408 = vector.shape_cast %407 : vector<16xf32> to vector<16x1xf32>
    %cst_145 = arith.constant 1.600000e+01 : f32
    %409 = vector.broadcast %cst_145 : f32 to vector<16x1xf32>
    %410 = arith.divf %408, %409 : vector<16x1xf32>
    %411 = vector.broadcast %410 : vector<16x1xf32> to vector<16x16xf32>
    %412 = arith.subf %381, %411 : vector<16x16xf32>
    %413 = arith.mulf %412, %412 : vector<16x16xf32>
    %cst_146 = arith.constant dense<0.000000e+00> : vector<16xf32>
    %414 = vector.multi_reduction <add>, %413, %cst_146 [1] : vector<16x16xf32> to vector<16xf32>
    %415 = vector.shape_cast %414 : vector<16xf32> to vector<16x1xf32>
    %cst_147 = arith.constant 1.600000e+01 : f32
    %416 = vector.broadcast %cst_147 : f32 to vector<16x1xf32>
    %417 = arith.divf %415, %416 : vector<16x1xf32>
    %418 = vector.broadcast %410 : vector<16x1xf32> to vector<16x16xf32>
    %419 = arith.subf %381, %418 : vector<16x16xf32>
    %cst_148 = arith.constant 9.99999974E-6 : f32
    %420 = vector.broadcast %cst_148 : f32 to vector<16x1xf32>
    %421 = arith.addf %417, %420 : vector<16x1xf32>
    %422 = math.rsqrt %421 : vector<16x1xf32>
    %423 = vector.broadcast %422 : vector<16x1xf32> to vector<16x16xf32>
    %424 = arith.mulf %419, %423 : vector<16x16xf32>
    %425 = vector.broadcast %52 : vector<1x16xf32> to vector<16x16xf32>
    %426 = arith.mulf %424, %425 : vector<16x16xf32>
    %427 = vector.broadcast %53 : vector<1x16xf32> to vector<16x16xf32>
    %428 = arith.addf %426, %427 : vector<16x16xf32>
    %cst_149 = arith.constant dense<0.000000e+00> : vector<32xf32>
    %429 = vector.multi_reduction <add>, %383, %cst_149 [1] : vector<32x16xf32> to vector<32xf32>
    %430 = vector.shape_cast %429 : vector<32xf32> to vector<32x1xf32>
    %cst_150 = arith.constant 1.600000e+01 : f32
    %431 = vector.broadcast %cst_150 : f32 to vector<32x1xf32>
    %432 = arith.divf %430, %431 : vector<32x1xf32>
    %433 = vector.broadcast %432 : vector<32x1xf32> to vector<32x16xf32>
    %434 = arith.subf %383, %433 : vector<32x16xf32>
    %435 = arith.mulf %434, %434 : vector<32x16xf32>
    %cst_151 = arith.constant dense<0.000000e+00> : vector<32xf32>
    %436 = vector.multi_reduction <add>, %435, %cst_151 [1] : vector<32x16xf32> to vector<32xf32>
    %437 = vector.shape_cast %436 : vector<32xf32> to vector<32x1xf32>
    %cst_152 = arith.constant 1.600000e+01 : f32
    %438 = vector.broadcast %cst_152 : f32 to vector<32x1xf32>
    %439 = arith.divf %437, %438 : vector<32x1xf32>
    %440 = vector.broadcast %432 : vector<32x1xf32> to vector<32x16xf32>
    %441 = arith.subf %383, %440 : vector<32x16xf32>
    %cst_153 = arith.constant 9.99999974E-6 : f32
    %442 = vector.broadcast %cst_153 : f32 to vector<32x1xf32>
    %443 = arith.addf %439, %442 : vector<32x1xf32>
    %444 = math.rsqrt %443 : vector<32x1xf32>
    %445 = vector.broadcast %444 : vector<32x1xf32> to vector<32x16xf32>
    %446 = arith.mulf %441, %445 : vector<32x16xf32>
    %447 = vector.broadcast %52 : vector<1x16xf32> to vector<32x16xf32>
    %448 = arith.mulf %446, %447 : vector<32x16xf32>
    %449 = vector.broadcast %53 : vector<1x16xf32> to vector<32x16xf32>
    %450 = arith.addf %448, %449 : vector<32x16xf32>
    %451 = vector.shape_cast %406 : vector<16x16xf32> to vector<2x8x16xf32>
    %452 = vector.shape_cast %450 : vector<32x16xf32> to vector<2x16x16xf32>
    %453 = vector.shape_cast %428 : vector<16x16xf32> to vector<2x8x16xf32>
    %454 = vector.shape_cast %384 : vector<32x16xf32> to vector<2x16x16xf32>
    %455 = vector.shape_cast %382 : vector<16x16xf32> to vector<2x8x16xf32>
    "tpu.trace_start"() <{level = 10 : i32, message = "bqd,bkd->bqk"}> : () -> ()
    %cst_154 = arith.constant dense<0.000000e+00> : vector<2x8x16xf32>
    %456 = tpu.matmul %451, %452, %cst_154 {dimension_numbers = #tpu.dot_dimension_numbers<[2], [2], [1], [1], [0, 0, 0, 1, 1, 1], [0], [0]>} : vector<2x8x16xf32>, vector<2x16x16xf32>, vector<2x8x16xf32> -> vector<2x8x16xf32>
    %cst_155 = arith.constant dense<0.000000e+00> : vector<2x8x8xf32>
    %457 = tpu.matmul %451, %453, %cst_155 {dimension_numbers = #tpu.dot_dimension_numbers<[2], [2], [1], [1], [0, 0, 0, 1, 1, 1], [0], [0]>} : vector<2x8x16xf32>, vector<2x8x16xf32>, vector<2x8x8xf32> -> vector<2x8x8xf32>
    "tpu.trace_stop"() : () -> ()
    %cst_156 = arith.constant dense<0xFF800000> : vector<2x8xf32>
    %458 = vector.multi_reduction <maximumf>, %456, %cst_156 [2] : vector<2x8x16xf32> to vector<2x8xf32>
    %459 = vector.shape_cast %458 : vector<2x8xf32> to vector<2x8x1xf32>
    %cst_157 = arith.constant dense<0xFF800000> : vector<2x8xf32>
    %460 = vector.multi_reduction <maximumf>, %457, %cst_157 [2] : vector<2x8x8xf32> to vector<2x8xf32>
    %461 = vector.shape_cast %460 : vector<2x8xf32> to vector<2x8x1xf32>
    %462 = arith.maximumf %459, %461 : vector<2x8x1xf32>
    %463 = vector.broadcast %462 : vector<2x8x1xf32> to vector<2x8x16xf32>
    %464 = arith.subf %456, %463 : vector<2x8x16xf32>
    %465 = math.exp %464 : vector<2x8x16xf32>
    %466 = vector.broadcast %462 : vector<2x8x1xf32> to vector<2x8x8xf32>
    %467 = arith.subf %457, %466 : vector<2x8x8xf32>
    %468 = math.exp %467 : vector<2x8x8xf32>
    %cst_158 = arith.constant dense<0.000000e+00> : vector<2x8xf32>
    %469 = vector.multi_reduction <add>, %465, %cst_158 [2] : vector<2x8x16xf32> to vector<2x8xf32>
    %470 = vector.shape_cast %469 : vector<2x8xf32> to vector<2x8x1xf32>
    %cst_159 = arith.constant dense<0.000000e+00> : vector<2x8xf32>
    %471 = vector.multi_reduction <add>, %468, %cst_159 [2] : vector<2x8x8xf32> to vector<2x8xf32>
    %472 = vector.shape_cast %471 : vector<2x8xf32> to vector<2x8x1xf32>
    %473 = arith.addf %470, %472 : vector<2x8x1xf32>
    "tpu.trace_start"() <{level = 10 : i32, message = "bqk,bkd->bqd"}> : () -> ()
    %cst_160 = arith.constant dense<0.000000e+00> : vector<2x8x16xf32>
    %474 = tpu.matmul %465, %454, %cst_160 {dimension_numbers = #tpu.dot_dimension_numbers<[2], [1], [1], [2], [0, 0, 0, 1, 1, 2], [0], [0]>} : vector<2x8x16xf32>, vector<2x16x16xf32>, vector<2x8x16xf32> -> vector<2x8x16xf32>
    %cst_161 = arith.constant dense<0.000000e+00> : vector<2x8x16xf32>
    %475 = tpu.matmul %468, %455, %cst_161 {dimension_numbers = #tpu.dot_dimension_numbers<[2], [1], [1], [2], [0, 0, 0, 1, 1, 2], [0], [0]>} : vector<2x8x8xf32>, vector<2x8x16xf32>, vector<2x8x16xf32> -> vector<2x8x16xf32>
    "tpu.trace_stop"() : () -> ()
    %476 = arith.addf %474, %475 : vector<2x8x16xf32>
    %477 = tpu.reciprocal %473 : vector<2x8x1xf32> -> vector<2x8x1xf32>
    %478 = vector.broadcast %477 : vector<2x8x1xf32> to vector<2x8x16xf32>
    %479 = arith.mulf %476, %478 : vector<2x8x16xf32>
    %480 = vector.shape_cast %479 : vector<2x8x16xf32> to vector<16x16xf32>
    %cst_162 = arith.constant dense<0.000000e+00> : vector<16x32xf32>
    %481 = tpu.matmul %480, %379, %cst_162 {dimension_numbers = #tpu.dot_dimension_numbers<[1], [0], [0], [1], [0, 0, 1, 1], [], []>} : vector<16x16xf32>, vector<16x32xf32>, vector<16x32xf32> -> vector<16x32xf32>
    %482 = arith.addf %375, %481 : vector<16x32xf32>
    %c0_163 = arith.constant 0 : index
    %c0_164 = arith.constant 0 : index
    %483 = vector.load %arg7[%c0_163, %c0_164] : memref<16x32xf32, #tpu.memory_space<vmem>>, vector<16x32xf32>
    tpu.vector_store %arg7[%c0_163, %c0_164], %482 {strides = array<i32>} : memref<16x32xf32, #tpu.memory_space<vmem>>, vector<16x32xf32>,
    return
  }
  func.func @transform_0(%arg0: i32) -> (i32, i32) {
    %c0_i32 = arith.constant 0 : i32
    %c0_i32_0 = arith.constant 0 : i32
    %c0_i32_1 = arith.constant 0 : i32
    return %c0_i32, %c0_i32_0 : i32, i32
  }
  func.func @transform_1(%arg0: i32) -> (i32, i32) {
    %c0_i32 = arith.constant 0 : i32
    %c0_i32_0 = arith.constant 0 : i32
    %c0_i32_1 = arith.constant 0 : i32
    return %c0_i32, %c0_i32_0 : i32, i32
  }
  func.func @transform_2(%arg0: i32) -> (i32, i32) {
    %c0_i32 = arith.constant 0 : i32
    %c0_i32_0 = arith.constant 0 : i32
    %c0_i32_1 = arith.constant 0 : i32
    return %c0_i32, %c0_i32_0 : i32, i32
  }
  func.func @transform_3(%arg0: i32) -> (i32, i32) {
    %c0_i32 = arith.constant 0 : i32
    %c0_i32_0 = arith.constant 0 : i32
    %c0_i32_1 = arith.constant 0 : i32
    return %c0_i32, %c0_i32_0 : i32, i32
  }
  func.func @transform_4(%arg0: i32) -> (i32, i32) {
    %c0_i32 = arith.constant 0 : i32
    %c0_i32_0 = arith.constant 0 : i32
    %c0_i32_1 = arith.constant 0 : i32
    return %c0_i32, %c0_i32_0 : i32, i32
  }
  func.func @transform_5(%arg0: i32) -> (i32, i32) {
    %c0_i32 = arith.constant 0 : i32
    %c0_i32_0 = arith.constant 0 : i32
    %c0_i32_1 = arith.constant 0 : i32
    return %c0_i32, %c0_i32_0 : i32, i32
  }
  func.func @transform_6(%arg0: i32) -> (i32, i32) {
    %c0_i32 = arith.constant 0 : i32
    %c0_i32_0 = arith.constant 0 : i32
    %c0_i32_1 = arith.constant 0 : i32
    return %c0_i32, %c0_i32_0 : i32, i32
  }
}

</mosaic_0001>

<llo_original>
// kernel: perceiver_attention_qk.1
$region0: #{perceiver_attention_qk.1}
  #allocation0 [shape = 'u32[]', space=smem, size = 0x4, offset = 0x4, fixed_abs, tag = 'smem constant byte address 0x4 - core index']
  #allocation1 [shape = 'u32[144,128]{1,0:T(1,128)}', space=vmem, size = 0x12000, scoped, tag = 'internal scratch']
  %s0 = inlined_call_operand.vmem [shape: f32[32,32], index: 0, kind: input, shape index: {}]
  %s1 = inlined_call_operand.vmem [shape: f32[16,32], index: 1, kind: input, shape index: {}]
  %s2 = inlined_call_operand.vmem [shape: f32[4,32], index: 2, kind: input, shape index: {}]
  %s3 = inlined_call_operand.vmem [shape: f32[4,16], index: 3, kind: input, shape index: {}]
  %s4 = inlined_call_operand.vmem [shape: f32[192,32], index: 4, kind: input, shape index: {}]
  %s5 = inlined_call_operand.vmem [shape: f32[64,32], index: 5, kind: input, shape index: {}]
  %s6 = inlined_call_operand.hbm [shape: f32[16,32], index: 6, kind: output, shape index: {}]
  %s7 = sld [smem:[#allocation0]]
  $region34: #{perceiver_attention_qk.1} parent=0
    _
  %s9 = ssub.s32 1, %s7
  %s10 = scalar_select 0, %s9, %s7
  $region1: #{perceiver_attention_qk.1} parent=0
    #allocation2 [shape = 'u8[8192]{0}', space=vmem, size = 0x2000, scoped, tag = 'output window, operand 0, single buffered']
    #allocation3 [shape = 's32[1]{0}', space=sflag, size = 0x4, scoped, tag = 'scoped memory for perceiver_attention_qk.1']
    %11 = vsyncpa [#allocation3], 0
    // Predicated region
    $region2: #{perceiver_attention_qk.1} parent=1 // pred_check
      _
    $region3: #{perceiver_attention_qk.1} parent=1 // pred_check_branch
      %13 = sbr.rel (0) target = $region5
    $region4: #{perceiver_attention_qk.1} parent=1 // pred_region
      _
    $region5: #{perceiver_attention_qk.1} parent=1 // pred_fallthru
      _
    // Predicated region
    $region6: #{perceiver_attention_qk.1} parent=1 // pred_check
      _
    $region7: #{perceiver_attention_qk.1} parent=1 // pred_check_branch
      %15 = sbr.rel (0) target = $region9
    $region8: #{perceiver_attention_qk.1} parent=1 // pred_region
      _
    $region9: #{perceiver_attention_qk.1} parent=1 // pred_fallthru
      _
    // Predicated region
    $region10: #{perceiver_attention_qk.1} parent=1 // pred_check
      _
    $region11: #{perceiver_attention_qk.1} parent=1 // pred_check_branch
      %17 = sbr.rel (0) target = $region13
    $region12: #{perceiver_attention_qk.1} parent=1 // pred_region
      _
    $region13: #{perceiver_attention_qk.1} parent=1 // pred_fallthru
      _
    // Predicated region
    $region14: #{perceiver_attention_qk.1} parent=1 // pred_check
      _
    $region15: #{perceiver_attention_qk.1} parent=1 // pred_check_branch
      %19 = sbr.rel (0) target = $region17
    $region16: #{perceiver_attention_qk.1} parent=1 // pred_region
      _
    $region17: #{perceiver_attention_qk.1} parent=1 // pred_fallthru
      _
    // Predicated region
    $region18: #{perceiver_attention_qk.1} parent=1 // pred_check
      _
    $region19: #{perceiver_attention_qk.1} parent=1 // pred_check_branch
      %21 = sbr.rel (0) target = $region21
    $region20: #{perceiver_attention_qk.1} parent=1 // pred_region
      _
    $region21: #{perceiver_attention_qk.1} parent=1 // pred_fallthru
      _
    // Predicated region
    $region22: #{perceiver_attention_qk.1} parent=1 // pred_check
      _
    $region23: #{perceiver_attention_qk.1} parent=1 // pred_check_branch
      %23 = sbr.rel (0) target = $region25
    $region24: #{perceiver_attention_qk.1} parent=1 // pred_region
      _
    $region25: #{perceiver_attention_qk.1} parent=1 // pred_fallthru
      _
    %v24 = vld [vmem:[%s0] sm:$0xff]
    %v25 = vld [vmem:[%s0 + $0x8] sm:$0xff]
    %v26 = vld [vmem:[%s0 + $0x10] sm:$0xff]
    %v27 = vld [vmem:[%s0 + $0x18] sm:$0xff]
    %v28 = vld [vmem:[%s2] sm:$0x1]
    %v29 = vld [vmem:[%s2 + $0x1] sm:$0x1]
    %vm30 = vcmask 261120
    %v31 = vsel %vm30, %v24, 0.0
    %32 = vadd.xlane.f32.xlu0 %v31
    %v33 = vpop.xlane.xlu0 %32
    %v34 = vsel %vm30, %v25, 0.0
    %35 = vadd.xlane.f32.xlu0 %v34
    %v36 = vpop.xlane.xlu0 %35
    %v37 = vsel %vm30, %v26, 0.0
    %38 = vadd.xlane.f32.xlu0 %v37
    %v39 = vpop.xlane.xlu0 %38
    %v40 = vsel %vm30, %v27, 0.0
    %41 = vadd.xlane.f32.xlu0 %v40
    %v42 = vpop.xlane.xlu0 %41
    %v43 = vrcp.pop 32.0
    %v44 = vmul.f32 %v33, %v43
    %v45 = vmul.f32 %v36, %v43
    %v46 = vmul.f32 %v39, %v43
    %v47 = vmul.f32 %v42, %v43
    %v48 = vsub.f32 %v24, %v44
    %v49 = vsub.f32 %v25, %v45
    %v50 = vsub.f32 %v26, %v46
    %v51 = vsub.f32 %v27, %v47
    %v52 = vmul.f32 %v48, %v48
    %v53 = vmul.f32 %v49, %v49
    %v54 = vmul.f32 %v50, %v50
    %v55 = vmul.f32 %v51, %v51
    %v56 = vsel %vm30, %v52, 0.0
    %57 = vadd.xlane.f32.xlu0 %v56
    %v58 = vpop.xlane.xlu0 %57
    %v59 = vsel %vm30, %v53, 0.0
    %60 = vadd.xlane.f32.xlu0 %v59
    %v61 = vpop.xlane.xlu0 %60
    %v62 = vsel %vm30, %v54, 0.0
    %63 = vadd.xlane.f32.xlu0 %v62
    %v64 = vpop.xlane.xlu0 %63
    %v65 = vsel %vm30, %v55, 0.0
    %66 = vadd.xlane.f32.xlu0 %v65
    %v67 = vpop.xlane.xlu0 %66
    %v68 = vmul.f32 %v58, %v43
    %v69 = vmul.f32 %v61, %v43
    %v70 = vmul.f32 %v64, %v43
    %v71 = vmul.f32 %v67, %v43
    %v72 = vadd.f32 %v68, 1e-05
    %v73 = vadd.f32 %v69, 1e-05
    %v74 = vadd.f32 %v70, 1e-05
    %v75 = vadd.f32 %v71, 1e-05
    %v76 = vrsqrt.pop %v72
    %v77 = vrsqrt.pop %v73
    %v78 = vrsqrt.pop %v74
    %v79 = vrsqrt.pop %v75
    %v80 = vmul.f32 %v48, %v76
    %v81 = vmul.f32 %v49, %v77
    %v82 = vmul.f32 %v50, %v78
    %v83 = vmul.f32 %v51, %v79
    %v84 = vlaneseq
    %v85 = vshrl.u32 %v84, 7
    %v86 = vsub.s32 0, %v85
    %v87 = vrot.slane %v28, %v86
    %v88 = vmul.f32 %v80, %v87
    %v89 = vmul.f32 %v81, %v87
    %v90 = vmul.f32 %v82, %v87
    %v91 = vmul.f32 %v83, %v87
    %v92 = vlaneseq
    %v93 = vshrl.u32 %v92, 7
    %v94 = vsub.s32 0, %v93
    %v95 = vrot.slane %v29, %v94
    %v96 = vadd.f32 %v88, %v95
    %v97 = vadd.f32 %v89, %v95
    %v98 = vadd.f32 %v90, %v95
    %v99 = vadd.f32 %v91, %v95
    %v100 = vld [vmem:[%s1] sm:$0xff]
    %v101 = vld [vmem:[%s1 + $0x8] sm:$0xff]
    %v102 = vld [vmem:[%s2 + $0x2] sm:$0x1]
    %v103 = vld [vmem:[%s2 + $0x3] sm:$0x1]
    %v104 = vsel %vm30, %v100, 0.0
    %105 = vadd.xlane.f32.xlu0 %v104
    %v106 = vpop.xlane.xlu0 %105
    %v107 = vsel %vm30, %v101, 0.0
    %108 = vadd.xlane.f32.xlu0 %v107
    %v109 = vpop.xlane.xlu0 %108
    %v110 = vmul.f32 %v106, %v43
    %v111 = vmul.f32 %v109, %v43
    %v112 = vsub.f32 %v100, %v110
    %v113 = vsub.f32 %v101, %v111
    %v114 = vmul.f32 %v112, %v112
    %v115 = vmul.f32 %v113, %v113
    %v116 = vsel %vm30, %v114, 0.0
    %117 = vadd.xlane.f32.xlu0 %v116
    %v118 = vpop.xlane.xlu0 %117
    %v119 = vsel %vm30, %v115, 0.0
    %120 = vadd.xlane.f32.xlu0 %v119
    %v121 = vpop.xlane.xlu0 %120
    %v122 = vmul.f32 %v118, %v43
    %v123 = vmul.f32 %v121, %v43
    %v124 = vadd.f32 %v122, 1e-05
    %v125 = vadd.f32 %v123, 1e-05
    %v126 = vrsqrt.pop %v124
    %v127 = vrsqrt.pop %v125
    %v128 = vmul.f32 %v112, %v126
    %v129 = vmul.f32 %v113, %v127
    %v130 = vlaneseq
    %v131 = vshrl.u32 %v130, 7
    %v132 = vsub.s32 0, %v131
    %v133 = vrot.slane %v102, %v132
    %v134 = vmul.f32 %v128, %v133
    %v135 = vmul.f32 %v129, %v133
    %v136 = vlaneseq
    %v137 = vshrl.u32 %v136, 7
    %v138 = vsub.s32 0, %v137
    %v139 = vrot.slane %v103, %v138
    %v140 = vadd.f32 %v134, %v139
    %v141 = vadd.f32 %v135, %v139
    %v142 = vld [vmem:[%s3] sm:$0x1]
    %v143 = vld [vmem:[%s3 + $0x1] sm:$0x1]
    %v144 = vld [vmem:[%s3 + $0x2] sm:$0x1]
    %v145 = vld [vmem:[%s3 + $0x3] sm:$0x1]
    %v146 = vld [vmem:[%s4] sm:$0xff]
    %v147 = vld [vmem:[%s4 + $0x8] sm:$0xff]
    %v148 = vld [vmem:[%s4 + $0x40] sm:$0xff]
    %v149 = vld [vmem:[%s4 + $0x48] sm:$0xff]
    %v150 = vld [vmem:[%s4 + $0x80] sm:$0xff]
    %v151 = vld [vmem:[%s4 + $0x88] sm:$0xff]
    %v152 = vld [vmem:[%s5] sm:$0xff]
    %v153 = vld [vmem:[%s5 + $0x8] sm:$0xff]
    %v155 = vsel %vm30, %v140, 0
    %v158 = vsel %vm30, %v141, 0
    %v161 = vsel %vm30, %v146, 0
    %v164 = vsel %vm30, %v147, 0
    %166 = vmatprep.subr.mxu0 0.0
    %167 = vmatpush1.xpose.msra.mxu0 0.0
    %168 = vmatprep.subr.mxu0 0.0
    %169 = vmatpush1.xpose.msra.mxu0 0.0
    %170 = vmatprep.subr.mxu0 0.0
    %171 = vmatpush1.xpose.msra.mxu0 0.0
    %172 = vmatprep.subr.mxu0 0.0
    %173 = vmatpush1.xpose.msra.mxu0 0.0
    %174 = vmatprep.subr.mxu0 0.0
    %175 = vmatpush1.xpose.msra.mxu0 0.0
    %176 = vmatprep.subr.mxu0 0.0
    %177 = vmatpush1.xpose.msra.mxu0 0.0
    %178 = vmatprep.subr.mxu0 0.0
    %179 = vmatpush1.xpose.msra.mxu0 0.0
    %180 = vmatprep.subr.mxu0 0.0
    %181 = vmatpush1.xpose.msra.mxu0 0.0
    %182 = vmatprep.subr.mxu0 0.0
    %183 = vmatpush1.xpose.msra.mxu0 0.0
    %184 = vmatprep.subr.mxu0 0.0
    %185 = vmatpush1.xpose.msra.mxu0 0.0
    %186 = vmatprep.subr.mxu0 0.0
    %187 = vmatpush1.xpose.msra.mxu0 0.0
    %188 = vmatprep.subr.mxu0 0.0
    %189 = vmatpush1.xpose.msra.mxu0 0.0
    %190 = vmatprep.subr.mxu0 0.0
    %191 = vmatpush1.xpose.msra.mxu0 0.0
    %192 = vmatprep.subr.mxu0 0.0
    %193 = vmatpush1.xpose.msra.mxu0 0.0
    %194 = vmatprep.subr.mxu0 0.0
    %195 = vmatpush1.xpose.msra.mxu0 %v164
    %196 = vmatprep.subr.mxu0 0.0
    %197 = vmatpush1.xpose.msra.mxu0 %v161
    %198 = vmatprep.subr.mxu0 0.0
    %199 = vmatpush2.xpose.msra.mxu0 0.0
    %200 = vmatprep.subr.mxu0 0.0
    %201 = vmatpush2.xpose.msra.mxu0 0.0
    %202 = vmatprep.subr.mxu0 0.0
    %203 = vmatpush2.xpose.msra.mxu0 0.0
    %204 = vmatprep.subr.mxu0 0.0
    %205 = vmatpush2.xpose.msra.mxu0 0.0
    %206 = vmatprep.subr.mxu0 0.0
    %207 = vmatpush2.xpose.msra.mxu0 0.0
    %208 = vmatprep.subr.mxu0 0.0
    %209 = vmatpush2.xpose.msra.mxu0 0.0
    %210 = vmatprep.subr.mxu0 0.0
    %211 = vmatpush2.xpose.msra.mxu0 0.0
    %212 = vmatprep.subr.mxu0 0.0
    %213 = vmatpush2.xpose.msra.mxu0 0.0
    %214 = vmatprep.subr.mxu0 0.0
    %215 = vmatpush2.xpose.msra.mxu0 0.0
    %216 = vmatprep.subr.mxu0 0.0
    %217 = vmatpush2.xpose.msra.mxu0 0.0
    %218 = vmatprep.subr.mxu0 0.0
    %219 = vmatpush2.xpose.msra.mxu0 0.0
    %220 = vmatprep.subr.mxu0 0.0
    %221 = vmatpush2.xpose.msra.mxu0 0.0
    %222 = vmatprep.subr.mxu0 0.0
    %223 = vmatpush2.xpose.msra.mxu0 0.0
    %224 = vmatprep.subr.mxu0 0.0
    %225 = vmatpush2.xpose.msra.mxu0 0.0
    %226 = vmatprep.subr.mxu0 0.0
    %227 = vmatpush2.xpose.msra.mxu0 0.0
    %228 = vmatprep.subr.mxu0 0.0
    %229 = vmatpush2.xpose.msra.mxu0 0.0
    %230 = vmatprep.mubr.f32.mxu0 0.0
    %231 = vmatmul.mubr.f32.gmra.mxu0 %v155
    %v232 = vpop.f32.mrf.mxu0
    %v233 = vadd.f32 0.0, %v232
    %v234 = vpop.f32.mrf.mxu0
    %235 = vmatprep.mubr.f32.mxu0 0.0
    %236 = vmatmul.mubr.f32.gmra.mxu0 %v158
    %v237 = vpop.f32.mrf.mxu0
    %v238 = vadd.f32 0.0, %v237
    %v239 = vpop.f32.mrf.mxu0
    %240 = vdwg.mxu0
    %v242 = vsel %vm30, %v148, 0
    %v245 = vsel %vm30, %v149, 0
    %247 = vmatprep.subr.mxu0 0.0
    %248 = vmatpush1.xpose.msra.mxu0 0.0
    %249 = vmatprep.subr.mxu0 0.0
    %250 = vmatpush1.xpose.msra.mxu0 0.0
    %251 = vmatprep.subr.mxu0 0.0
    %252 = vmatpush1.xpose.msra.mxu0 0.0
    %253 = vmatprep.subr.mxu0 0.0
    %254 = vmatpush1.xpose.msra.mxu0 0.0
    %255 = vmatprep.subr.mxu0 0.0
    %256 = vmatpush1.xpose.msra.mxu0 0.0
    %257 = vmatprep.subr.mxu0 0.0
    %258 = vmatpush1.xpose.msra.mxu0 0.0
    %259 = vmatprep.subr.mxu0 0.0
    %260 = vmatpush1.xpose.msra.mxu0 0.0
    %261 = vmatprep.subr.mxu0 0.0
    %262 = vmatpush1.xpose.msra.mxu0 0.0
    %263 = vmatprep.subr.mxu0 0.0
    %264 = vmatpush1.xpose.msra.mxu0 0.0
    %265 = vmatprep.subr.mxu0 0.0
    %266 = vmatpush1.xpose.msra.mxu0 0.0
    %267 = vmatprep.subr.mxu0 0.0
    %268 = vmatpush1.xpose.msra.mxu0 0.0
    %269 = vmatprep.subr.mxu0 0.0
    %270 = vmatpush1.xpose.msra.mxu0 0.0
    %271 = vmatprep.subr.mxu0 0.0
    %272 = vmatpush1.xpose.msra.mxu0 0.0
    %273 = vmatprep.subr.mxu0 0.0
    %274 = vmatpush1.xpose.msra.mxu0 0.0
    %275 = vmatprep.subr.mxu0 0.0
    %276 = vmatpush1.xpose.msra.mxu0 %v245
    %277 = vmatprep.subr.mxu0 0.0
    %278 = vmatpush1.xpose.msra.mxu0 %v242
    %279 = vmatprep.subr.mxu0 0.0
    %280 = vmatpush2.xpose.msra.mxu0 0.0
    %281 = vmatprep.subr.mxu0 0.0
    %282 = vmatpush2.xpose.msra.mxu0 0.0
    %283 = vmatprep.subr.mxu0 0.0
    %284 = vmatpush2.xpose.msra.mxu0 0.0
    %285 = vmatprep.subr.mxu0 0.0
    %286 = vmatpush2.xpose.msra.mxu0 0.0
    %287 = vmatprep.subr.mxu0 0.0
    %288 = vmatpush2.xpose.msra.mxu0 0.0
    %289 = vmatprep.subr.mxu0 0.0
    %290 = vmatpush2.xpose.msra.mxu0 0.0
    %291 = vmatprep.subr.mxu0 0.0
    %292 = vmatpush2.xpose.msra.mxu0 0.0
    %293 = vmatprep.subr.mxu0 0.0
    %294 = vmatpush2.xpose.msra.mxu0 0.0
    %295 = vmatprep.subr.mxu0 0.0
    %296 = vmatpush2.xpose.msra.mxu0 0.0
    %297 = vmatprep.subr.mxu0 0.0
    %298 = vmatpush2.xpose.msra.mxu0 0.0
    %299 = vmatprep.subr.mxu0 0.0
    %300 = vmatpush2.xpose.msra.mxu0 0.0
    %301 = vmatprep.subr.mxu0 0.0
    %302 = vmatpush2.xpose.msra.mxu0 0.0
    %303 = vmatprep.subr.mxu0 0.0
    %304 = vmatpush2.xpose.msra.mxu0 0.0
    %305 = vmatprep.subr.mxu0 0.0
    %306 = vmatpush2.xpose.msra.mxu0 0.0
    %307 = vmatprep.subr.mxu0 0.0
    %308 = vmatpush2.xpose.msra.mxu0 0.0
    %309 = vmatprep.subr.mxu0 0.0
    %310 = vmatpush2.xpose.msra.mxu0 0.0
    %311 = vmatprep.mubr.f32.mxu0 0.0
    %312 = vmatmul.mubr.f32.gmra.mxu0 %v155
    %v313 = vpop.f32.mrf.mxu0
    %v314 = vadd.f32 0.0, %v313
    %v315 = vpop.f32.mrf.mxu0
    %316 = vmatprep.mubr.f32.mxu0 0.0
    %317 = vmatmul.mubr.f32.gmra.mxu0 %v158
    %v318 = vpop.f32.mrf.mxu0
    %v319 = vadd.f32 0.0, %v318
    %v320 = vpop.f32.mrf.mxu0
    %321 = vdwg.mxu0
    %v323 = vsel %vm30, %v150, 0
    %v326 = vsel %vm30, %v151, 0
    %328 = vmatprep.subr.mxu0 0.0
    %329 = vmatpush1.xpose.msra.mxu0 0.0
    %330 = vmatprep.subr.mxu0 0.0
    %331 = vmatpush1.xpose.msra.mxu0 0.0
    %332 = vmatprep.subr.mxu0 0.0
    %333 = vmatpush1.xpose.msra.mxu0 0.0
    %334 = vmatprep.subr.mxu0 0.0
    %335 = vmatpush1.xpose.msra.mxu0 0.0
    %336 = vmatprep.subr.mxu0 0.0
    %337 = vmatpush1.xpose.msra.mxu0 0.0
    %338 = vmatprep.subr.mxu0 0.0
    %339 = vmatpush1.xpose.msra.mxu0 0.0
    %340 = vmatprep.subr.mxu0 0.0
    %341 = vmatpush1.xpose.msra.mxu0 0.0
    %342 = vmatprep.subr.mxu0 0.0
    %343 = vmatpush1.xpose.msra.mxu0 0.0
    %344 = vmatprep.subr.mxu0 0.0
    %345 = vmatpush1.xpose.msra.mxu0 0.0
    %346 = vmatprep.subr.mxu0 0.0
    %347 = vmatpush1.xpose.msra.mxu0 0.0
    %348 = vmatprep.subr.mxu0 0.0
    %349 = vmatpush1.xpose.msra.mxu0 0.0
    %350 = vmatprep.subr.mxu0 0.0
    %351 = vmatpush1.xpose.msra.mxu0 0.0
    %352 = vmatprep.subr.mxu0 0.0
    %353 = vmatpush1.xpose.msra.mxu0 0.0
    %354 = vmatprep.subr.mxu0 0.0
    %355 = vmatpush1.xpose.msra.mxu0 0.0
    %356 = vmatprep.subr.mxu0 0.0
    %357 = vmatpush1.xpose.msra.mxu0 %v326
    %358 = vmatprep.subr.mxu0 0.0
    %359 = vmatpush1.xpose.msra.mxu0 %v323
    %360 = vmatprep.subr.mxu0 0.0
    %361 = vmatpush2.xpose.msra.mxu0 0.0
    %362 = vmatprep.subr.mxu0 0.0
    %363 = vmatpush2.xpose.msra.mxu0 0.0
    %364 = vmatprep.subr.mxu0 0.0
    %365 = vmatpush2.xpose.msra.mxu0 0.0
    %366 = vmatprep.subr.mxu0 0.0
    %367 = vmatpush2.xpose.msra.mxu0 0.0
    %368 = vmatprep.subr.mxu0 0.0
    %369 = vmatpush2.xpose.msra.mxu0 0.0
    %370 = vmatprep.subr.mxu0 0.0
    %371 = vmatpush2.xpose.msra.mxu0 0.0
    %372 = vmatprep.subr.mxu0 0.0
    %373 = vmatpush2.xpose.msra.mxu0 0.0
    %374 = vmatprep.subr.mxu0 0.0
    %375 = vmatpush2.xpose.msra.mxu0 0.0
    %376 = vmatprep.subr.mxu0 0.0
    %377 = vmatpush2.xpose.msra.mxu0 0.0
    %378 = vmatprep.subr.mxu0 0.0
    %379 = vmatpush2.xpose.msra.mxu0 0.0
    %380 = vmatprep.subr.mxu0 0.0
    %381 = vmatpush2.xpose.msra.mxu0 0.0
    %382 = vmatprep.subr.mxu0 0.0
    %383 = vmatpush2.xpose.msra.mxu0 0.0
    %384 = vmatprep.subr.mxu0 0.0
    %385 = vmatpush2.xpose.msra.mxu0 0.0
    %386 = vmatprep.subr.mxu0 0.0
    %387 = vmatpush2.xpose.msra.mxu0 0.0
    %388 = vmatprep.subr.mxu0 0.0
    %389 = vmatpush2.xpose.msra.mxu0 0.0
    %390 = vmatprep.subr.mxu0 0.0
    %391 = vmatpush2.xpose.msra.mxu0 0.0
    %392 = vmatprep.mubr.f32.mxu0 0.0
    %393 = vmatmul.mubr.f32.gmra.mxu0 %v155
    %v394 = vpop.f32.mrf.mxu0
    %v395 = vadd.f32 0.0, %v394
    %v396 = vpop.f32.mrf.mxu0
    %397 = vmatprep.mubr.f32.mxu0 0.0
    %398 = vmatmul.mubr.f32.gmra.mxu0 %v158
    %v399 = vpop.f32.mrf.mxu0
    %v400 = vadd.f32 0.0, %v399
    %v401 = vpop.f32.mrf.mxu0
    %402 = vdwg.mxu0
    %v404 = vsel %vm30, %v96, 0
    %v407 = vsel %vm30, %v97, 0
    %v410 = vsel %vm30, %v98, 0
    %v413 = vsel %vm30, %v99, 0
    %415 = vmatprep.subr.mxu0 0.0
    %416 = vmatpush1.xpose.msra.mxu0 0.0
    %417 = vmatprep.subr.mxu0 0.0
    %418 = vmatpush1.xpose.msra.mxu0 0.0
    %419 = vmatprep.subr.mxu0 0.0
    %420 = vmatpush1.xpose.msra.mxu0 0.0
    %421 = vmatprep.subr.mxu0 0.0
    %422 = vmatpush1.xpose.msra.mxu0 0.0
    %423 = vmatprep.subr.mxu0 0.0
    %424 = vmatpush1.xpose.msra.mxu0 0.0
    %425 = vmatprep.subr.mxu0 0.0
    %426 = vmatpush1.xpose.msra.mxu0 0.0
    %427 = vmatprep.subr.mxu0 0.0
    %428 = vmatpush1.xpose.msra.mxu0 0.0
    %429 = vmatprep.subr.mxu0 0.0
    %430 = vmatpush1.xpose.msra.mxu0 0.0
    %431 = vmatprep.subr.mxu0 0.0
    %432 = vmatpush1.xpose.msra.mxu0 0.0
    %433 = vmatprep.subr.mxu0 0.0
    %434 = vmatpush1.xpose.msra.mxu0 0.0
    %435 = vmatprep.subr.mxu0 0.0
    %436 = vmatpush1.xpose.msra.mxu0 0.0
    %437 = vmatprep.subr.mxu0 0.0
    %438 = vmatpush1.xpose.msra.mxu0 0.0
    %439 = vmatprep.subr.mxu0 0.0
    %440 = vmatpush1.xpose.msra.mxu0 0.0
    %441 = vmatprep.subr.mxu0 0.0
    %442 = vmatpush1.xpose.msra.mxu0 0.0
    %443 = vmatprep.subr.mxu0 0.0
    %444 = vmatpush1.xpose.msra.mxu0 %v245
    %445 = vmatprep.subr.mxu0 0.0
    %446 = vmatpush1.xpose.msra.mxu0 %v242
    %447 = vmatprep.subr.mxu0 0.0
    %448 = vmatpush2.xpose.msra.mxu0 0.0
    %449 = vmatprep.subr.mxu0 0.0
    %450 = vmatpush2.xpose.msra.mxu0 0.0
    %451 = vmatprep.subr.mxu0 0.0
    %452 = vmatpush2.xpose.msra.mxu0 0.0
    %453 = vmatprep.subr.mxu0 0.0
    %454 = vmatpush2.xpose.msra.mxu0 0.0
    %455 = vmatprep.subr.mxu0 0.0
    %456 = vmatpush2.xpose.msra.mxu0 0.0
    %457 = vmatprep.subr.mxu0 0.0
    %458 = vmatpush2.xpose.msra.mxu0 0.0
    %459 = vmatprep.subr.mxu0 0.0
    %460 = vmatpush2.xpose.msra.mxu0 0.0
    %461 = vmatprep.subr.mxu0 0.0
    %462 = vmatpush2.xpose.msra.mxu0 0.0
    %463 = vmatprep.subr.mxu0 0.0
    %464 = vmatpush2.xpose.msra.mxu0 0.0
    %465 = vmatprep.subr.mxu0 0.0
    %466 = vmatpush2.xpose.msra.mxu0 0.0
    %467 = vmatprep.subr.mxu0 0.0
    %468 = vmatpush2.xpose.msra.mxu0 0.0
    %469 = vmatprep.subr.mxu0 0.0
    %470 = vmatpush2.xpose.msra.mxu0 0.0
    %471 = vmatprep.subr.mxu0 0.0
    %472 = vmatpush2.xpose.msra.mxu0 0.0
    %473 = vmatprep.subr.mxu0 0.0
    %474 = vmatpush2.xpose.msra.mxu0 0.0
    %475 = vmatprep.subr.mxu0 0.0
    %476 = vmatpush2.xpose.msra.mxu0 0.0
    %477 = vmatprep.subr.mxu0 0.0
    %478 = vmatpush2.xpose.msra.mxu0 0.0
    %479 = vmatprep.mubr.f32.mxu0 0.0
    %480 = vmatmul.mubr.f32.gmra.mxu0 %v404
    %v481 = vpop.f32.mrf.mxu0
    %v482 = vadd.f32 0.0, %v481
    %v483 = vpop.f32.mrf.mxu0
    %484 = vmatprep.mubr.f32.mxu0 0.0
    %485 = vmatmul.mubr.f32.gmra.mxu0 %v407
    %v486 = vpop.f32.mrf.mxu0
    %v487 = vadd.f32 0.0, %v486
    %v488 = vpop.f32.mrf.mxu0
    %489 = vmatprep.mubr.f32.mxu0 0.0
    %490 = vmatmul.mubr.f32.gmra.mxu0 %v410
    %v491 = vpop.f32.mrf.mxu0
    %v492 = vadd.f32 0.0, %v491
    %v493 = vpop.f32.mrf.mxu0
    %494 = vmatprep.mubr.f32.mxu0 0.0
    %495 = vmatmul.mubr.f32.gmra.mxu0 %v413
    %v496 = vpop.f32.mrf.mxu0
    %v497 = vadd.f32 0.0, %v496
    %v498 = vpop.f32.mrf.mxu0
    %499 = vdwg.mxu0
    %500 = vmatprep.subr.mxu0 0.0
    %501 = vmatpush1.xpose.msra.mxu0 0.0
    %502 = vmatprep.subr.mxu0 0.0
    %503 = vmatpush1.xpose.msra.mxu0 0.0
    %504 = vmatprep.subr.mxu0 0.0
    %505 = vmatpush1.xpose.msra.mxu0 0.0
    %506 = vmatprep.subr.mxu0 0.0
    %507 = vmatpush1.xpose.msra.mxu0 0.0
    %508 = vmatprep.subr.mxu0 0.0
    %509 = vmatpush1.xpose.msra.mxu0 0.0
    %510 = vmatprep.subr.mxu0 0.0
    %511 = vmatpush1.xpose.msra.mxu0 0.0
    %512 = vmatprep.subr.mxu0 0.0
    %513 = vmatpush1.xpose.msra.mxu0 0.0
    %514 = vmatprep.subr.mxu0 0.0
    %515 = vmatpush1.xpose.msra.mxu0 0.0
    %516 = vmatprep.subr.mxu0 0.0
    %517 = vmatpush1.xpose.msra.mxu0 0.0
    %518 = vmatprep.subr.mxu0 0.0
    %519 = vmatpush1.xpose.msra.mxu0 0.0
    %520 = vmatprep.subr.mxu0 0.0
    %521 = vmatpush1.xpose.msra.mxu0 0.0
    %522 = vmatprep.subr.mxu0 0.0
    %523 = vmatpush1.xpose.msra.mxu0 0.0
    %524 = vmatprep.subr.mxu0 0.0
    %525 = vmatpush1.xpose.msra.mxu0 0.0
    %526 = vmatprep.subr.mxu0 0.0
    %527 = vmatpush1.xpose.msra.mxu0 0.0
    %528 = vmatprep.subr.mxu0 0.0
    %529 = vmatpush1.xpose.msra.mxu0 %v326
    %530 = vmatprep.subr.mxu0 0.0
    %531 = vmatpush1.xpose.msra.mxu0 %v323
    %532 = vmatprep.subr.mxu0 0.0
    %533 = vmatpush2.xpose.msra.mxu0 0.0
    %534 = vmatprep.subr.mxu0 0.0
    %535 = vmatpush2.xpose.msra.mxu0 0.0
    %536 = vmatprep.subr.mxu0 0.0
    %537 = vmatpush2.xpose.msra.mxu0 0.0
    %538 = vmatprep.subr.mxu0 0.0
    %539 = vmatpush2.xpose.msra.mxu0 0.0
    %540 = vmatprep.subr.mxu0 0.0
    %541 = vmatpush2.xpose.msra.mxu0 0.0
    %542 = vmatprep.subr.mxu0 0.0
    %543 = vmatpush2.xpose.msra.mxu0 0.0
    %544 = vmatprep.subr.mxu0 0.0
    %545 = vmatpush2.xpose.msra.mxu0 0.0
    %546 = vmatprep.subr.mxu0 0.0
    %547 = vmatpush2.xpose.msra.mxu0 0.0
    %548 = vmatprep.subr.mxu0 0.0
    %549 = vmatpush2.xpose.msra.mxu0 0.0
    %550 = vmatprep.subr.mxu0 0.0
    %551 = vmatpush2.xpose.msra.mxu0 0.0
    %552 = vmatprep.subr.mxu0 0.0
    %553 = vmatpush2.xpose.msra.mxu0 0.0
    %554 = vmatprep.subr.mxu0 0.0
    %555 = vmatpush2.xpose.msra.mxu0 0.0
    %556 = vmatprep.subr.mxu0 0.0
    %557 = vmatpush2.xpose.msra.mxu0 0.0
    %558 = vmatprep.subr.mxu0 0.0
    %559 = vmatpush2.xpose.msra.mxu0 0.0
    %560 = vmatprep.subr.mxu0 0.0
    %561 = vmatpush2.xpose.msra.mxu0 0.0
    %562 = vmatprep.subr.mxu0 0.0
    %563 = vmatpush2.xpose.msra.mxu0 0.0
    %564 = vmatprep.mubr.f32.mxu0 0.0
    %565 = vmatmul.mubr.f32.gmra.mxu0 %v404
    %v566 = vpop.f32.mrf.mxu0
    %v567 = vadd.f32 0.0, %v566
    %v568 = vpop.f32.mrf.mxu0
    %569 = vmatprep.mubr.f32.mxu0 0.0
    %570 = vmatmul.mubr.f32.gmra.mxu0 %v407
    %v571 = vpop.f32.mrf.mxu0
    %v572 = vadd.f32 0.0, %v571
    %v573 = vpop.f32.mrf.mxu0
    %574 = vmatprep.mubr.f32.mxu0 0.0
    %575 = vmatmul.mubr.f32.gmra.mxu0 %v410
    %v576 = vpop.f32.mrf.mxu0
    %v577 = vadd.f32 0.0, %v576
    %v578 = vpop.f32.mrf.mxu0
    %579 = vmatprep.mubr.f32.mxu0 0.0
    %580 = vmatmul.mubr.f32.gmra.mxu0 %v413
    %v581 = vpop.f32.mrf.mxu0
    %v582 = vadd.f32 0.0, %v581
    %v583 = vpop.f32.mrf.mxu0
    %584 = vdwg.mxu0
    %vm585 = vcmask 130048
    %v586 = vsel %vm585, %v233, 0.0
    %587 = vadd.xlane.f32.xlu0 %v586
    %v588 = vpop.xlane.xlu0 %587
    %v589 = vsel %vm585, %v238, 0.0
    %590 = vadd.xlane.f32.xlu0 %v589
    %v591 = vpop.xlane.xlu0 %590
    %v592 = vrcp.pop 16.0
    %v593 = vmul.f32 %v588, %v592
    %v594 = vmul.f32 %v591, %v592
    %v595 = vsub.f32 %v233, %v593
    %v596 = vsub.f32 %v238, %v594
    %v597 = vmul.f32 %v595, %v595
    %v598 = vmul.f32 %v596, %v596
    %v599 = vsel %vm585, %v597, 0.0
    %600 = vadd.xlane.f32.xlu0 %v599
    %v601 = vpop.xlane.xlu0 %600
    %v602 = vsel %vm585, %v598, 0.0
    %603 = vadd.xlane.f32.xlu0 %v602
    %v604 = vpop.xlane.xlu0 %603
    %v605 = vmul.f32 %v601, %v592
    %v606 = vmul.f32 %v604, %v592
    %v607 = vadd.f32 %v605, 1e-05
    %v608 = vadd.f32 %v606, 1e-05
    %v609 = vrsqrt.pop %v607
    %v610 = vrsqrt.pop %v608
    %v611 = vmul.f32 %v595, %v609
    %v612 = vmul.f32 %v596, %v610
    %v613 = vlaneseq
    %v614 = vshrl.u32 %v613, 7
    %v615 = vsub.s32 0, %v614
    %v616 = vrot.slane %v142, %v615
    %v617 = vmul.f32 %v611, %v616
    %v618 = vmul.f32 %v612, %v616
    %v619 = vlaneseq
    %v620 = vshrl.u32 %v619, 7
    %v621 = vsub.s32 0, %v620
    %v622 = vrot.slane %v143, %v621
    %v623 = vadd.f32 %v617, %v622
    %v624 = vadd.f32 %v618, %v622
    %v625 = vsel %vm585, %v314, 0.0
    %626 = vadd.xlane.f32.xlu0 %v625
    %v627 = vpop.xlane.xlu0 %626
    %v628 = vsel %vm585, %v319, 0.0
    %629 = vadd.xlane.f32.xlu0 %v628
    %v630 = vpop.xlane.xlu0 %629
    %v631 = vmul.f32 %v627, %v592
    %v632 = vmul.f32 %v630, %v592
    %v633 = vsub.f32 %v314, %v631
    %v634 = vsub.f32 %v319, %v632
    %v635 = vmul.f32 %v633, %v633
    %v636 = vmul.f32 %v634, %v634
    %v637 = vsel %vm585, %v635, 0.0
    %638 = vadd.xlane.f32.xlu0 %v637
    %v639 = vpop.xlane.xlu0 %638
    %v640 = vsel %vm585, %v636, 0.0
    %641 = vadd.xlane.f32.xlu0 %v640
    %v642 = vpop.xlane.xlu0 %641
    %v643 = vmul.f32 %v639, %v592
    %v644 = vmul.f32 %v642, %v592
    %v645 = vadd.f32 %v643, 1e-05
    %v646 = vadd.f32 %v644, 1e-05
    %v647 = vrsqrt.pop %v645
    %v648 = vrsqrt.pop %v646
    %v649 = vmul.f32 %v633, %v647
    %v650 = vmul.f32 %v634, %v648
    %v651 = vlaneseq
    %v652 = vshrl.u32 %v651, 7
    %v653 = vsub.s32 0, %v652
    %v654 = vrot.slane %v144, %v653
    %v655 = vmul.f32 %v649, %v654
    %v656 = vmul.f32 %v650, %v654
    %v657 = vlaneseq
    %v658 = vshrl.u32 %v657, 7
    %v659 = vsub.s32 0, %v658
    %v660 = vrot.slane %v145, %v659
    %v661 = vadd.f32 %v655, %v660
    %v662 = vadd.f32 %v656, %v660
    %v663 = vsel %vm585, %v482, 0.0
    %664 = vadd.xlane.f32.xlu0 %v663
    %v665 = vpop.xlane.xlu0 %664
    %v666 = vsel %vm585, %v487, 0.0
    %667 = vadd.xlane.f32.xlu0 %v666
    %v668 = vpop.xlane.xlu0 %667
    %v669 = vsel %vm585, %v492, 0.0
    %670 = vadd.xlane.f32.xlu0 %v669
    %v671 = vpop.xlane.xlu0 %670
    %v672 = vsel %vm585, %v497, 0.0
    %673 = vadd.xlane.f32.xlu0 %v672
    %v674 = vpop.xlane.xlu0 %673
    %v675 = vmul.f32 %v665, %v592
    %v676 = vmul.f32 %v668, %v592
    %v677 = vmul.f32 %v671, %v592
    %v678 = vmul.f32 %v674, %v592
    %v679 = vsub.f32 %v482, %v675
    %v680 = vsub.f32 %v487, %v676
    %v681 = vsub.f32 %v492, %v677
    %v682 = vsub.f32 %v497, %v678
    %v683 = vmul.f32 %v679, %v679
    %v684 = vmul.f32 %v680, %v680
    %v685 = vmul.f32 %v681, %v681
    %v686 = vmul.f32 %v682, %v682
    %v687 = vsel %vm585, %v683, 0.0
    %688 = vadd.xlane.f32.xlu0 %v687
    %v689 = vpop.xlane.xlu0 %688
    %v690 = vsel %vm585, %v684, 0.0
    %691 = vadd.xlane.f32.xlu0 %v690
    %v692 = vpop.xlane.xlu0 %691
    %v693 = vsel %vm585, %v685, 0.0
    %694 = vadd.xlane.f32.xlu0 %v693
    %v695 = vpop.xlane.xlu0 %694
    %v696 = vsel %vm585, %v686, 0.0
    %697 = vadd.xlane.f32.xlu0 %v696
    %v698 = vpop.xlane.xlu0 %697
    %v699 = vmul.f32 %v689, %v592
    %v700 = vmul.f32 %v692, %v592
    %v701 = vmul.f32 %v695, %v592
    %v702 = vmul.f32 %v698, %v592
    %v703 = vadd.f32 %v699, 1e-05
    %v704 = vadd.f32 %v700, 1e-05
    %v705 = vadd.f32 %v701, 1e-05
    %v706 = vadd.f32 %v702, 1e-05
    %v707 = vrsqrt.pop %v703
    %v708 = vrsqrt.pop %v704
    %v709 = vrsqrt.pop %v705
    %v710 = vrsqrt.pop %v706
    %v711 = vmul.f32 %v679, %v707
    %v712 = vmul.f32 %v680, %v708
    %v713 = vmul.f32 %v681, %v709
    %v714 = vmul.f32 %v682, %v710
    %v715 = vmul.f32 %v711, %v654
    %v716 = vmul.f32 %v712, %v654
    %v717 = vmul.f32 %v713, %v654
    %v718 = vmul.f32 %v714, %v654
    %v719 = vadd.f32 %v715, %v660
    %v720 = vadd.f32 %v716, %v660
    %v721 = vadd.f32 %v717, %v660
    %v722 = vadd.f32 %v718, %v660
    %v724 = vsel %vm585, %v623, 0
    %v727 = vsel %vm585, %v719, 0
    %v730 = vsel %vm585, %v720, 0
    %732 = vmatprep.subr.mxu0 0.0
    %733 = vmatpush1.xpose.msra.mxu0 0.0
    %734 = vmatprep.subr.mxu0 0.0
    %735 = vmatpush1.xpose.msra.mxu0 0.0
    %736 = vmatprep.subr.mxu0 0.0
    %737 = vmatpush1.xpose.msra.mxu0 0.0
    %738 = vmatprep.subr.mxu0 0.0
    %739 = vmatpush1.xpose.msra.mxu0 0.0
    %740 = vmatprep.subr.mxu0 0.0
    %741 = vmatpush1.xpose.msra.mxu0 0.0
    %742 = vmatprep.subr.mxu0 0.0
    %743 = vmatpush1.xpose.msra.mxu0 0.0
    %744 = vmatprep.subr.mxu0 0.0
    %745 = vmatpush1.xpose.msra.mxu0 0.0
    %746 = vmatprep.subr.mxu0 0.0
    %747 = vmatpush1.xpose.msra.mxu0 0.0
    %748 = vmatprep.subr.mxu0 0.0
    %749 = vmatpush1.xpose.msra.mxu0 0.0
    %750 = vmatprep.subr.mxu0 0.0
    %751 = vmatpush1.xpose.msra.mxu0 0.0
    %752 = vmatprep.subr.mxu0 0.0
    %753 = vmatpush1.xpose.msra.mxu0 0.0
    %754 = vmatprep.subr.mxu0 0.0
    %755 = vmatpush1.xpose.msra.mxu0 0.0
    %756 = vmatprep.subr.mxu0 0.0
    %757 = vmatpush1.xpose.msra.mxu0 0.0
    %758 = vmatprep.subr.mxu0 0.0
    %759 = vmatpush1.xpose.msra.mxu0 0.0
    %760 = vmatprep.subr.mxu0 0.0
    %761 = vmatpush1.xpose.msra.mxu0 %v730
    %762 = vmatprep.subr.mxu0 0.0
    %763 = vmatpush1.xpose.msra.mxu0 %v727
    %764 = vmatprep.subr.mxu0 0.0
    %765 = vmatpush2.xpose.msra.mxu0 0.0
    %766 = vmatprep.subr.mxu0 0.0
    %767 = vmatpush2.xpose.msra.mxu0 0.0
    %768 = vmatprep.subr.mxu0 0.0
    %769 = vmatpush2.xpose.msra.mxu0 0.0
    %770 = vmatprep.subr.mxu0 0.0
    %771 = vmatpush2.xpose.msra.mxu0 0.0
    %772 = vmatprep.subr.mxu0 0.0
    %773 = vmatpush2.xpose.msra.mxu0 0.0
    %774 = vmatprep.subr.mxu0 0.0
    %775 = vmatpush2.xpose.msra.mxu0 0.0
    %776 = vmatprep.subr.mxu0 0.0
    %777 = vmatpush2.xpose.msra.mxu0 0.0
    %778 = vmatprep.subr.mxu0 0.0
    %779 = vmatpush2.xpose.msra.mxu0 0.0
    %780 = vmatprep.subr.mxu0 0.0
    %781 = vmatpush2.xpose.msra.mxu0 0.0
    %782 = vmatprep.subr.mxu0 0.0
    %783 = vmatpush2.xpose.msra.mxu0 0.0
    %784 = vmatprep.subr.mxu0 0.0
    %785 = vmatpush2.xpose.msra.mxu0 0.0
    %786 = vmatprep.subr.mxu0 0.0
    %787 = vmatpush2.xpose.msra.mxu0 0.0
    %788 = vmatprep.subr.mxu0 0.0
    %789 = vmatpush2.xpose.msra.mxu0 0.0
    %790 = vmatprep.subr.mxu0 0.0
    %791 = vmatpush2.xpose.msra.mxu0 0.0
    %792 = vmatprep.subr.mxu0 0.0
    %793 = vmatpush2.xpose.msra.mxu0 0.0
    %794 = vmatprep.subr.mxu0 0.0
    %795 = vmatpush2.xpose.msra.mxu0 0.0
    %796 = vmatprep.mubr.f32.mxu0 0.0
    %797 = vmatmul.mubr.f32.gmra.mxu0 %v724
    %v798 = vpop.f32.mrf.mxu0
    %v799 = vadd.f32 0.0, %v798
    %v800 = vpop.f32.mrf.mxu0
    %801 = vdwg.mxu0
    %v803 = vsel %vm585, %v624, 0
    %v806 = vsel %vm585, %v721, 0
    %v809 = vsel %vm585, %v722, 0
    %811 = vmatprep.subr.mxu0 0.0
    %812 = vmatpush1.xpose.msra.mxu0 0.0
    %813 = vmatprep.subr.mxu0 0.0
    %814 = vmatpush1.xpose.msra.mxu0 0.0
    %815 = vmatprep.subr.mxu0 0.0
    %816 = vmatpush1.xpose.msra.mxu0 0.0
    %817 = vmatprep.subr.mxu0 0.0
    %818 = vmatpush1.xpose.msra.mxu0 0.0
    %819 = vmatprep.subr.mxu0 0.0
    %820 = vmatpush1.xpose.msra.mxu0 0.0
    %821 = vmatprep.subr.mxu0 0.0
    %822 = vmatpush1.xpose.msra.mxu0 0.0
    %823 = vmatprep.subr.mxu0 0.0
    %824 = vmatpush1.xpose.msra.mxu0 0.0
    %825 = vmatprep.subr.mxu0 0.0
    %826 = vmatpush1.xpose.msra.mxu0 0.0
    %827 = vmatprep.subr.mxu0 0.0
    %828 = vmatpush1.xpose.msra.mxu0 0.0
    %829 = vmatprep.subr.mxu0 0.0
    %830 = vmatpush1.xpose.msra.mxu0 0.0
    %831 = vmatprep.subr.mxu0 0.0
    %832 = vmatpush1.xpose.msra.mxu0 0.0
    %833 = vmatprep.subr.mxu0 0.0
    %834 = vmatpush1.xpose.msra.mxu0 0.0
    %835 = vmatprep.subr.mxu0 0.0
    %836 = vmatpush1.xpose.msra.mxu0 0.0
    %837 = vmatprep.subr.mxu0 0.0
    %838 = vmatpush1.xpose.msra.mxu0 0.0
    %839 = vmatprep.subr.mxu0 0.0
    %840 = vmatpush1.xpose.msra.mxu0 %v809
    %841 = vmatprep.subr.mxu0 0.0
    %842 = vmatpush1.xpose.msra.mxu0 %v806
    %843 = vmatprep.subr.mxu0 0.0
    %844 = vmatpush2.xpose.msra.mxu0 0.0
    %845 = vmatprep.subr.mxu0 0.0
    %846 = vmatpush2.xpose.msra.mxu0 0.0
    %847 = vmatprep.subr.mxu0 0.0
    %848 = vmatpush2.xpose.msra.mxu0 0.0
    %849 = vmatprep.subr.mxu0 0.0
    %850 = vmatpush2.xpose.msra.mxu0 0.0
    %851 = vmatprep.subr.mxu0 0.0
    %852 = vmatpush2.xpose.msra.mxu0 0.0
    %853 = vmatprep.subr.mxu0 0.0
    %854 = vmatpush2.xpose.msra.mxu0 0.0
    %855 = vmatprep.subr.mxu0 0.0
    %856 = vmatpush2.xpose.msra.mxu0 0.0
    %857 = vmatprep.subr.mxu0 0.0
    %858 = vmatpush2.xpose.msra.mxu0 0.0
    %859 = vmatprep.subr.mxu0 0.0
    %860 = vmatpush2.xpose.msra.mxu0 0.0
    %861 = vmatprep.subr.mxu0 0.0
    %862 = vmatpush2.xpose.msra.mxu0 0.0
    %863 = vmatprep.subr.mxu0 0.0
    %864 = vmatpush2.xpose.msra.mxu0 0.0
    %865 = vmatprep.subr.mxu0 0.0
    %866 = vmatpush2.xpose.msra.mxu0 0.0
    %867 = vmatprep.subr.mxu0 0.0
    %868 = vmatpush2.xpose.msra.mxu0 0.0
    %869 = vmatprep.subr.mxu0 0.0
    %870 = vmatpush2.xpose.msra.mxu0 0.0
    %871 = vmatprep.subr.mxu0 0.0
    %872 = vmatpush2.xpose.msra.mxu0 0.0
    %873 = vmatprep.subr.mxu0 0.0
    %874 = vmatpush2.xpose.msra.mxu0 0.0
    %875 = vmatprep.mubr.f32.mxu0 0.0
    %876 = vmatmul.mubr.f32.gmra.mxu0 %v803
    %v877 = vpop.f32.mrf.mxu0
    %v878 = vadd.f32 0.0, %v877
    %v879 = vpop.f32.mrf.mxu0
    %880 = vdwg.mxu0
    %v882 = vsel %vm585, %v661, 0
    %884 = vmatprep.subr.mxu0 0.0
    %885 = vmatpush1.xpose.msra.mxu0 0.0
    %886 = vmatprep.subr.mxu0 0.0
    %887 = vmatpush1.xpose.msra.mxu0 0.0
    %888 = vmatprep.subr.mxu0 0.0
    %889 = vmatpush1.xpose.msra.mxu0 0.0
    %890 = vmatprep.subr.mxu0 0.0
    %891 = vmatpush1.xpose.msra.mxu0 0.0
    %892 = vmatprep.subr.mxu0 0.0
    %893 = vmatpush1.xpose.msra.mxu0 0.0
    %894 = vmatprep.subr.mxu0 0.0
    %895 = vmatpush1.xpose.msra.mxu0 0.0
    %896 = vmatprep.subr.mxu0 0.0
    %897 = vmatpush1.xpose.msra.mxu0 0.0
    %898 = vmatprep.subr.mxu0 0.0
    %899 = vmatpush1.xpose.msra.mxu0 0.0
    %900 = vmatprep.subr.mxu0 0.0
    %901 = vmatpush1.xpose.msra.mxu0 0.0
    %902 = vmatprep.subr.mxu0 0.0
    %903 = vmatpush1.xpose.msra.mxu0 0.0
    %904 = vmatprep.subr.mxu0 0.0
    %905 = vmatpush1.xpose.msra.mxu0 0.0
    %906 = vmatprep.subr.mxu0 0.0
    %907 = vmatpush1.xpose.msra.mxu0 0.0
    %908 = vmatprep.subr.mxu0 0.0
    %909 = vmatpush1.xpose.msra.mxu0 0.0
    %910 = vmatprep.subr.mxu0 0.0
    %911 = vmatpush1.xpose.msra.mxu0 0.0
    %912 = vmatprep.subr.mxu0 0.0
    %913 = vmatpush1.xpose.msra.mxu0 0.0
    %914 = vmatprep.subr.mxu0 0.0
    %915 = vmatpush1.xpose.msra.mxu0 %v882
    %916 = vmatprep.subr.mxu0 0.0
    %917 = vmatpush2.xpose.msra.mxu0 0.0
    %918 = vmatprep.subr.mxu0 0.0
    %919 = vmatpush2.xpose.msra.mxu0 0.0
    %920 = vmatprep.subr.mxu0 0.0
    %921 = vmatpush2.xpose.msra.mxu0 0.0
    %922 = vmatprep.subr.mxu0 0.0
    %923 = vmatpush2.xpose.msra.mxu0 0.0
    %924 = vmatprep.subr.mxu0 0.0
    %925 = vmatpush2.xpose.msra.mxu0 0.0
    %926 = vmatprep.subr.mxu0 0.0
    %927 = vmatpush2.xpose.msra.mxu0 0.0
    %928 = vmatprep.subr.mxu0 0.0
    %929 = vmatpush2.xpose.msra.mxu0 0.0
    %930 = vmatprep.subr.mxu0 0.0
    %931 = vmatpush2.xpose.msra.mxu0 0.0
    %932 = vmatprep.subr.mxu0 0.0
    %933 = vmatpush2.xpose.msra.mxu0 0.0
    %934 = vmatprep.subr.mxu0 0.0
    %935 = vmatpush2.xpose.msra.mxu0 0.0
    %936 = vmatprep.subr.mxu0 0.0
    %937 = vmatpush2.xpose.msra.mxu0 0.0
    %938 = vmatprep.subr.mxu0 0.0
    %939 = vmatpush2.xpose.msra.mxu0 0.0
    %940 = vmatprep.subr.mxu0 0.0
    %941 = vmatpush2.xpose.msra.mxu0 0.0
    %942 = vmatprep.subr.mxu0 0.0
    %943 = vmatpush2.xpose.msra.mxu0 0.0
    %944 = vmatprep.subr.mxu0 0.0
    %945 = vmatpush2.xpose.msra.mxu0 0.0
    %946 = vmatprep.subr.mxu0 0.0
    %947 = vmatpush2.xpose.msra.mxu0 0.0
    %948 = vmatprep.mubr.f32.mxu0 0.0
    %949 = vmatmul.mubr.f32.gmra.mxu0 %v724
    %v950 = vpop.f32.mrf.mxu0
    %v951 = vadd.f32 0.0, %v950
    %v952 = vpop.f32.mrf.mxu0
    %953 = vdwg.mxu0
    %v955 = vsel %vm585, %v662, 0
    %957 = vmatprep.subr.mxu0 0.0
    %958 = vmatpush1.xpose.msra.mxu0 0.0
    %959 = vmatprep.subr.mxu0 0.0
    %960 = vmatpush1.xpose.msra.mxu0 0.0
    %961 = vmatprep.subr.mxu0 0.0
    %962 = vmatpush1.xpose.msra.mxu0 0.0
    %963 = vmatprep.subr.mxu0 0.0
    %964 = vmatpush1.xpose.msra.mxu0 0.0
    %965 = vmatprep.subr.mxu0 0.0
    %966 = vmatpush1.xpose.msra.mxu0 0.0
    %967 = vmatprep.subr.mxu0 0.0
    %968 = vmatpush1.xpose.msra.mxu0 0.0
    %969 = vmatprep.subr.mxu0 0.0
    %970 = vmatpush1.xpose.msra.mxu0 0.0
    %971 = vmatprep.subr.mxu0 0.0
    %972 = vmatpush1.xpose.msra.mxu0 0.0
    %973 = vmatprep.subr.mxu0 0.0
    %974 = vmatpush1.xpose.msra.mxu0 0.0
    %975 = vmatprep.subr.mxu0 0.0
    %976 = vmatpush1.xpose.msra.mxu0 0.0
    %977 = vmatprep.subr.mxu0 0.0
    %978 = vmatpush1.xpose.msra.mxu0 0.0
    %979 = vmatprep.subr.mxu0 0.0
    %980 = vmatpush1.xpose.msra.mxu0 0.0
    %981 = vmatprep.subr.mxu0 0.0
    %982 = vmatpush1.xpose.msra.mxu0 0.0
    %983 = vmatprep.subr.mxu0 0.0
    %984 = vmatpush1.xpose.msra.mxu0 0.0
    %985 = vmatprep.subr.mxu0 0.0
    %986 = vmatpush1.xpose.msra.mxu0 0.0
    %987 = vmatprep.subr.mxu0 0.0
    %988 = vmatpush1.xpose.msra.mxu0 %v955
    %989 = vmatprep.subr.mxu0 0.0
    %990 = vmatpush2.xpose.msra.mxu0 0.0
    %991 = vmatprep.subr.mxu0 0.0
    %992 = vmatpush2.xpose.msra.mxu0 0.0
    %993 = vmatprep.subr.mxu0 0.0
    %994 = vmatpush2.xpose.msra.mxu0 0.0
    %995 = vmatprep.subr.mxu0 0.0
    %996 = vmatpush2.xpose.msra.mxu0 0.0
    %997 = vmatprep.subr.mxu0 0.0
    %998 = vmatpush2.xpose.msra.mxu0 0.0
    %999 = vmatprep.subr.mxu0 0.0
    %1000 = vmatpush2.xpose.msra.mxu0 0.0
    %1001 = vmatprep.subr.mxu0 0.0
    %1002 = vmatpush2.xpose.msra.mxu0 0.0
    %1003 = vmatprep.subr.mxu0 0.0
    %1004 = vmatpush2.xpose.msra.mxu0 0.0
    %1005 = vmatprep.subr.mxu0 0.0
    %1006 = vmatpush2.xpose.msra.mxu0 0.0
    %1007 = vmatprep.subr.mxu0 0.0
    %1008 = vmatpush2.xpose.msra.mxu0 0.0
    %1009 = vmatprep.subr.mxu0 0.0
    %1010 = vmatpush2.xpose.msra.mxu0 0.0
    %1011 = vmatprep.subr.mxu0 0.0
    %1012 = vmatpush2.xpose.msra.mxu0 0.0
    %1013 = vmatprep.subr.mxu0 0.0
    %1014 = vmatpush2.xpose.msra.mxu0 0.0
    %1015 = vmatprep.subr.mxu0 0.0
    %1016 = vmatpush2.xpose.msra.mxu0 0.0
    %1017 = vmatprep.subr.mxu0 0.0
    %1018 = vmatpush2.xpose.msra.mxu0 0.0
    %1019 = vmatprep.subr.mxu0 0.0
    %1020 = vmatpush2.xpose.msra.mxu0 0.0
    %1021 = vmatprep.mubr.f32.mxu0 0.0
    %1022 = vmatmul.mubr.f32.gmra.mxu0 %v803
    %v1023 = vpop.f32.mrf.mxu0
    %v1024 = vadd.f32 0.0, %v1023
    %v1025 = vpop.f32.mrf.mxu0
    %1026 = vdwg.mxu0
    %v1027 = vsel %vm585, %v799, -inf
    %1028 = vmax.xlane.f32.xlu0 %v1027
    %v1029 = vpop.xlane.xlu0 %1028
    %v1030 = vsel %vm585, %v878, -inf
    %1031 = vmax.xlane.f32.xlu0 %v1030
    %v1032 = vpop.xlane.xlu0 %1031
    %vm1033 = vcmask 64512
    %v1034 = vsel %vm1033, %v951, -inf
    %1035 = vmax.xlane.f32.xlu0 %v1034
    %v1036 = vpop.xlane.xlu0 %1035
    %v1037 = vsel %vm1033, %v1024, -inf
    %1038 = vmax.xlane.f32.xlu0 %v1037
    %v1039 = vpop.xlane.xlu0 %1038
    %v1040 = vmax.f32 %v1029, %v1036
    %v1041 = vmax.f32 %v1032, %v1039
    %v1042 = vsub.f32 %v799, %v1040
    %v1043 = vsub.f32 %v878, %v1041
    %v1044 = vmul.f32 %v1042, 1.442695
    %v1045 = vpow.pop %v1044
    %v1046 = vmul.f32 %v1043, 1.442695
    %v1047 = vpow.pop %v1046
    %v1048 = vsub.f32 %v951, %v1040
    %v1049 = vsub.f32 %v1024, %v1041
    %v1050 = vmul.f32 %v1048, 1.442695
    %v1051 = vpow.pop %v1050
    %v1052 = vmul.f32 %v1049, 1.442695
    %v1053 = vpow.pop %v1052
    %v1054 = vsel %vm585, %v1045, 0.0
    %1055 = vadd.xlane.f32.xlu0 %v1054
    %v1056 = vpop.xlane.xlu0 %1055
    %v1057 = vsel %vm585, %v1047, 0.0
    %1058 = vadd.xlane.f32.xlu0 %v1057
    %v1059 = vpop.xlane.xlu0 %1058
    %v1060 = vsel %vm1033, %v1051, 0.0
    %1061 = vadd.xlane.f32.xlu0 %v1060
    %v1062 = vpop.xlane.xlu0 %1061
    %v1063 = vsel %vm1033, %v1053, 0.0
    %1064 = vadd.xlane.f32.xlu0 %v1063
    %v1065 = vpop.xlane.xlu0 %1064
    %v1066 = vadd.f32 %v1056, %v1062
    %v1067 = vadd.f32 %v1059, %v1065
    %v1069 = vsel %vm1033, %v1051, 0
    %1071 = vmatprep.subr.mxu0 0.0
    %1072 = vmatpush1.msra.mxu0 0.0
    %1073 = vmatprep.subr.mxu0 0.0
    %1074 = vmatpush1.msra.mxu0 0.0
    %1075 = vmatprep.subr.mxu0 0.0
    %1076 = vmatpush1.msra.mxu0 0.0
    %1077 = vmatprep.subr.mxu0 0.0
    %1078 = vmatpush1.msra.mxu0 0.0
    %1079 = vmatprep.subr.mxu0 0.0
    %1080 = vmatpush1.msra.mxu0 0.0
    %1081 = vmatprep.subr.mxu0 0.0
    %1082 = vmatpush1.msra.mxu0 0.0
    %1083 = vmatprep.subr.mxu0 0.0
    %1084 = vmatpush1.msra.mxu0 0.0
    %1085 = vmatprep.subr.mxu0 0.0
    %1086 = vmatpush1.msra.mxu0 0.0
    %1087 = vmatprep.subr.mxu0 0.0
    %1088 = vmatpush1.msra.mxu0 0.0
    %1089 = vmatprep.subr.mxu0 0.0
    %1090 = vmatpush1.msra.mxu0 0.0
    %1091 = vmatprep.subr.mxu0 0.0
    %1092 = vmatpush1.msra.mxu0 0.0
    %1093 = vmatprep.subr.mxu0 0.0
    %1094 = vmatpush1.msra.mxu0 0.0
    %1095 = vmatprep.subr.mxu0 0.0
    %1096 = vmatpush1.msra.mxu0 0.0
    %1097 = vmatprep.subr.mxu0 0.0
    %1098 = vmatpush1.msra.mxu0 0.0
    %1099 = vmatprep.subr.mxu0 0.0
    %1100 = vmatpush1.msra.mxu0 0.0
    %1101 = vmatprep.subr.mxu0 0.0
    %1102 = vmatpush1.msra.mxu0 %v395
    %1103 = vmatprep.subr.mxu0 0.0
    %1104 = vmatpush2.msra.mxu0 0.0
    %1105 = vmatprep.subr.mxu0 0.0
    %1106 = vmatpush2.msra.mxu0 0.0
    %1107 = vmatprep.subr.mxu0 0.0
    %1108 = vmatpush2.msra.mxu0 0.0
    %1109 = vmatprep.subr.mxu0 0.0
    %1110 = vmatpush2.msra.mxu0 0.0
    %1111 = vmatprep.subr.mxu0 0.0
    %1112 = vmatpush2.msra.mxu0 0.0
    %1113 = vmatprep.subr.mxu0 0.0
    %1114 = vmatpush2.msra.mxu0 0.0
    %1115 = vmatprep.subr.mxu0 0.0
    %1116 = vmatpush2.msra.mxu0 0.0
    %1117 = vmatprep.subr.mxu0 0.0
    %1118 = vmatpush2.msra.mxu0 0.0
    %1119 = vmatprep.subr.mxu0 0.0
    %1120 = vmatpush2.msra.mxu0 0.0
    %1121 = vmatprep.subr.mxu0 0.0
    %1122 = vmatpush2.msra.mxu0 0.0
    %1123 = vmatprep.subr.mxu0 0.0
    %1124 = vmatpush2.msra.mxu0 0.0
    %1125 = vmatprep.subr.mxu0 0.0
    %1126 = vmatpush2.msra.mxu0 0.0
    %1127 = vmatprep.subr.mxu0 0.0
    %1128 = vmatpush2.msra.mxu0 0.0
    %1129 = vmatprep.subr.mxu0 0.0
    %1130 = vmatpush2.msra.mxu0 0.0
    %1131 = vmatprep.subr.mxu0 0.0
    %1132 = vmatpush2.msra.mxu0 0.0
    %1133 = vmatprep.subr.mxu0 0.0
    %1134 = vmatpush2.msra.mxu0 0.0
    %1135 = vmatprep.mubr.f32.mxu0 0.0
    %1136 = vmatmul.mubr.f32.gmra.mxu0 %v1069
    %v1137 = vpop.f32.mrf.mxu0
    %v1138 = vadd.f32 0.0, %v1137
    %v1139 = vpop.f32.mrf.mxu0
    %1140 = vdwg.mxu0
    %v1142 = vsel %vm1033, %v1053, 0
    %1144 = vmatprep.subr.mxu0 0.0
    %1145 = vmatpush1.msra.mxu0 0.0
    %1146 = vmatprep.subr.mxu0 0.0
    %1147 = vmatpush1.msra.mxu0 0.0
    %1148 = vmatprep.subr.mxu0 0.0
    %1149 = vmatpush1.msra.mxu0 0.0
    %1150 = vmatprep.subr.mxu0 0.0
    %1151 = vmatpush1.msra.mxu0 0.0
    %1152 = vmatprep.subr.mxu0 0.0
    %1153 = vmatpush1.msra.mxu0 0.0
    %1154 = vmatprep.subr.mxu0 0.0
    %1155 = vmatpush1.msra.mxu0 0.0
    %1156 = vmatprep.subr.mxu0 0.0
    %1157 = vmatpush1.msra.mxu0 0.0
    %1158 = vmatprep.subr.mxu0 0.0
    %1159 = vmatpush1.msra.mxu0 0.0
    %1160 = vmatprep.subr.mxu0 0.0
    %1161 = vmatpush1.msra.mxu0 0.0
    %1162 = vmatprep.subr.mxu0 0.0
    %1163 = vmatpush1.msra.mxu0 0.0
    %1164 = vmatprep.subr.mxu0 0.0
    %1165 = vmatpush1.msra.mxu0 0.0
    %1166 = vmatprep.subr.mxu0 0.0
    %1167 = vmatpush1.msra.mxu0 0.0
    %1168 = vmatprep.subr.mxu0 0.0
    %1169 = vmatpush1.msra.mxu0 0.0
    %1170 = vmatprep.subr.mxu0 0.0
    %1171 = vmatpush1.msra.mxu0 0.0
    %1172 = vmatprep.subr.mxu0 0.0
    %1173 = vmatpush1.msra.mxu0 0.0
    %1174 = vmatprep.subr.mxu0 0.0
    %1175 = vmatpush1.msra.mxu0 %v400
    %1176 = vmatprep.subr.mxu0 0.0
    %1177 = vmatpush2.msra.mxu0 0.0
    %1178 = vmatprep.subr.mxu0 0.0
    %1179 = vmatpush2.msra.mxu0 0.0
    %1180 = vmatprep.subr.mxu0 0.0
    %1181 = vmatpush2.msra.mxu0 0.0
    %1182 = vmatprep.subr.mxu0 0.0
    %1183 = vmatpush2.msra.mxu0 0.0
    %1184 = vmatprep.subr.mxu0 0.0
    %1185 = vmatpush2.msra.mxu0 0.0
    %1186 = vmatprep.subr.mxu0 0.0
    %1187 = vmatpush2.msra.mxu0 0.0
    %1188 = vmatprep.subr.mxu0 0.0
    %1189 = vmatpush2.msra.mxu0 0.0
    %1190 = vmatprep.subr.mxu0 0.0
    %1191 = vmatpush2.msra.mxu0 0.0
    %1192 = vmatprep.subr.mxu0 0.0
    %1193 = vmatpush2.msra.mxu0 0.0
    %1194 = vmatprep.subr.mxu0 0.0
    %1195 = vmatpush2.msra.mxu0 0.0
    %1196 = vmatprep.subr.mxu0 0.0
    %1197 = vmatpush2.msra.mxu0 0.0
    %1198 = vmatprep.subr.mxu0 0.0
    %1199 = vmatpush2.msra.mxu0 0.0
    %1200 = vmatprep.subr.mxu0 0.0
    %1201 = vmatpush2.msra.mxu0 0.0
    %1202 = vmatprep.subr.mxu0 0.0
    %1203 = vmatpush2.msra.mxu0 0.0
    %1204 = vmatprep.subr.mxu0 0.0
    %1205 = vmatpush2.msra.mxu0 0.0
    %1206 = vmatprep.subr.mxu0 0.0
    %1207 = vmatpush2.msra.mxu0 0.0
    %1208 = vmatprep.mubr.f32.mxu0 0.0
    %1209 = vmatmul.mubr.f32.gmra.mxu0 %v1142
    %v1210 = vpop.f32.mrf.mxu0
    %v1211 = vadd.f32 0.0, %v1210
    %v1212 = vpop.f32.mrf.mxu0
    %1213 = vdwg.mxu0
    %v1215 = vsel %vm585, %v1045, 0
    %1217 = vmatprep.subr.mxu0 0.0
    %1218 = vmatpush1.msra.mxu0 0.0
    %1219 = vmatprep.subr.mxu0 0.0
    %1220 = vmatpush1.msra.mxu0 0.0
    %1221 = vmatprep.subr.mxu0 0.0
    %1222 = vmatpush1.msra.mxu0 0.0
    %1223 = vmatprep.subr.mxu0 0.0
    %1224 = vmatpush1.msra.mxu0 0.0
    %1225 = vmatprep.subr.mxu0 0.0
    %1226 = vmatpush1.msra.mxu0 0.0
    %1227 = vmatprep.subr.mxu0 0.0
    %1228 = vmatpush1.msra.mxu0 0.0
    %1229 = vmatprep.subr.mxu0 0.0
    %1230 = vmatpush1.msra.mxu0 0.0
    %1231 = vmatprep.subr.mxu0 0.0
    %1232 = vmatpush1.msra.mxu0 0.0
    %1233 = vmatprep.subr.mxu0 0.0
    %1234 = vmatpush1.msra.mxu0 0.0
    %1235 = vmatprep.subr.mxu0 0.0
    %1236 = vmatpush1.msra.mxu0 0.0
    %1237 = vmatprep.subr.mxu0 0.0
    %1238 = vmatpush1.msra.mxu0 0.0
    %1239 = vmatprep.subr.mxu0 0.0
    %1240 = vmatpush1.msra.mxu0 0.0
    %1241 = vmatprep.subr.mxu0 0.0
    %1242 = vmatpush1.msra.mxu0 0.0
    %1243 = vmatprep.subr.mxu0 0.0
    %1244 = vmatpush1.msra.mxu0 0.0
    %1245 = vmatprep.subr.mxu0 0.0
    %1246 = vmatpush1.msra.mxu0 %v572
    %1247 = vmatprep.subr.mxu0 0.0
    %1248 = vmatpush1.msra.mxu0 %v567
    %1249 = vmatprep.subr.mxu0 0.0
    %1250 = vmatpush2.msra.mxu0 0.0
    %1251 = vmatprep.subr.mxu0 0.0
    %1252 = vmatpush2.msra.mxu0 0.0
    %1253 = vmatprep.subr.mxu0 0.0
    %1254 = vmatpush2.msra.mxu0 0.0
    %1255 = vmatprep.subr.mxu0 0.0
    %1256 = vmatpush2.msra.mxu0 0.0
    %1257 = vmatprep.subr.mxu0 0.0
    %1258 = vmatpush2.msra.mxu0 0.0
    %1259 = vmatprep.subr.mxu0 0.0
    %1260 = vmatpush2.msra.mxu0 0.0
    %1261 = vmatprep.subr.mxu0 0.0
    %1262 = vmatpush2.msra.mxu0 0.0
    %1263 = vmatprep.subr.mxu0 0.0
    %1264 = vmatpush2.msra.mxu0 0.0
    %1265 = vmatprep.subr.mxu0 0.0
    %1266 = vmatpush2.msra.mxu0 0.0
    %1267 = vmatprep.subr.mxu0 0.0
    %1268 = vmatpush2.msra.mxu0 0.0
    %1269 = vmatprep.subr.mxu0 0.0
    %1270 = vmatpush2.msra.mxu0 0.0
    %1271 = vmatprep.subr.mxu0 0.0
    %1272 = vmatpush2.msra.mxu0 0.0
    %1273 = vmatprep.subr.mxu0 0.0
    %1274 = vmatpush2.msra.mxu0 0.0
    %1275 = vmatprep.subr.mxu0 0.0
    %1276 = vmatpush2.msra.mxu0 0.0
    %1277 = vmatprep.subr.mxu0 0.0
    %1278 = vmatpush2.msra.mxu0 0.0
    %1279 = vmatprep.subr.mxu0 0.0
    %1280 = vmatpush2.msra.mxu0 0.0
    %1281 = vmatprep.mubr.f32.mxu0 0.0
    %1282 = vmatmul.mubr.f32.gmra.mxu0 %v1215
    %v1283 = vpop.f32.mrf.mxu0
    %v1284 = vadd.f32 %v1138, %v1283
    %v1285 = vpop.f32.mrf.mxu0
    %1286 = vdwg.mxu0
    %v1288 = vsel %vm585, %v1047, 0
    %1290 = vmatprep.subr.mxu0 0.0
    %1291 = vmatpush1.msra.mxu0 0.0
    %1292 = vmatprep.subr.mxu0 0.0
    %1293 = vmatpush1.msra.mxu0 0.0
    %1294 = vmatprep.subr.mxu0 0.0
    %1295 = vmatpush1.msra.mxu0 0.0
    %1296 = vmatprep.subr.mxu0 0.0
    %1297 = vmatpush1.msra.mxu0 0.0
    %1298 = vmatprep.subr.mxu0 0.0
    %1299 = vmatpush1.msra.mxu0 0.0
    %1300 = vmatprep.subr.mxu0 0.0
    %1301 = vmatpush1.msra.mxu0 0.0
    %1302 = vmatprep.subr.mxu0 0.0
    %1303 = vmatpush1.msra.mxu0 0.0
    %1304 = vmatprep.subr.mxu0 0.0
    %1305 = vmatpush1.msra.mxu0 0.0
    %1306 = vmatprep.subr.mxu0 0.0
    %1307 = vmatpush1.msra.mxu0 0.0
    %1308 = vmatprep.subr.mxu0 0.0
    %1309 = vmatpush1.msra.mxu0 0.0
    %1310 = vmatprep.subr.mxu0 0.0
    %1311 = vmatpush1.msra.mxu0 0.0
    %1312 = vmatprep.subr.mxu0 0.0
    %1313 = vmatpush1.msra.mxu0 0.0
    %1314 = vmatprep.subr.mxu0 0.0
    %1315 = vmatpush1.msra.mxu0 0.0
    %1316 = vmatprep.subr.mxu0 0.0
    %1317 = vmatpush1.msra.mxu0 0.0
    %1318 = vmatprep.subr.mxu0 0.0
    %1319 = vmatpush1.msra.mxu0 %v582
    %1320 = vmatprep.subr.mxu0 0.0
    %1321 = vmatpush1.msra.mxu0 %v577
    %1322 = vmatprep.subr.mxu0 0.0
    %1323 = vmatpush2.msra.mxu0 0.0
    %1324 = vmatprep.subr.mxu0 0.0
    %1325 = vmatpush2.msra.mxu0 0.0
    %1326 = vmatprep.subr.mxu0 0.0
    %1327 = vmatpush2.msra.mxu0 0.0
    %1328 = vmatprep.subr.mxu0 0.0
    %1329 = vmatpush2.msra.mxu0 0.0
    %1330 = vmatprep.subr.mxu0 0.0
    %1331 = vmatpush2.msra.mxu0 0.0
    %1332 = vmatprep.subr.mxu0 0.0
    %1333 = vmatpush2.msra.mxu0 0.0
    %1334 = vmatprep.subr.mxu0 0.0
    %1335 = vmatpush2.msra.mxu0 0.0
    %1336 = vmatprep.subr.mxu0 0.0
    %1337 = vmatpush2.msra.mxu0 0.0
    %1338 = vmatprep.subr.mxu0 0.0
    %1339 = vmatpush2.msra.mxu0 0.0
    %1340 = vmatprep.subr.mxu0 0.0
    %1341 = vmatpush2.msra.mxu0 0.0
    %1342 = vmatprep.subr.mxu0 0.0
    %1343 = vmatpush2.msra.mxu0 0.0
    %1344 = vmatprep.subr.mxu0 0.0
    %1345 = vmatpush2.msra.mxu0 0.0
    %1346 = vmatprep.subr.mxu0 0.0
    %1347 = vmatpush2.msra.mxu0 0.0
    %1348 = vmatprep.subr.mxu0 0.0
    %1349 = vmatpush2.msra.mxu0 0.0
    %1350 = vmatprep.subr.mxu0 0.0
    %1351 = vmatpush2.msra.mxu0 0.0
    %1352 = vmatprep.subr.mxu0 0.0
    %1353 = vmatpush2.msra.mxu0 0.0
    %1354 = vmatprep.mubr.f32.mxu0 0.0
    %1355 = vmatmul.mubr.f32.gmra.mxu0 %v1288
    %v1356 = vpop.f32.mrf.mxu0
    %v1357 = vadd.f32 %v1211, %v1356
    %v1358 = vpop.f32.mrf.mxu0
    %1359 = vdwg.mxu0
    %v1360 = vrcp.pop %v1066
    %v1361 = vrcp.pop %v1067
    %v1362 = vmul.f32 %v1284, %v1360
    %v1363 = vmul.f32 %v1357, %v1361
    %v1364 = vld [vmem:[%s4 + $0x10] sm:$0xff]
    %v1365 = vld [vmem:[%s4 + $0x18] sm:$0xff]
    %v1366 = vld [vmem:[%s4 + $0x50] sm:$0xff]
    %v1367 = vld [vmem:[%s4 + $0x58] sm:$0xff]
    %v1368 = vld [vmem:[%s4 + $0x90] sm:$0xff]
    %v1369 = vld [vmem:[%s4 + $0x98] sm:$0xff]
    %v1370 = vld [vmem:[%s5 + $0x10] sm:$0xff]
    %v1371 = vld [vmem:[%s5 + $0x18] sm:$0xff]
    %v1373 = vsel %vm30, %v1364, 0
    %v1376 = vsel %vm30, %v1365, 0
    %1378 = vmatprep.subr.mxu0 0.0
    %1379 = vmatpush1.xpose.msra.mxu0 0.0
    %1380 = vmatprep.subr.mxu0 0.0
    %1381 = vmatpush1.xpose.msra.mxu0 0.0
    %1382 = vmatprep.subr.mxu0 0.0
    %1383 = vmatpush1.xpose.msra.mxu0 0.0
    %1384 = vmatprep.subr.mxu0 0.0
    %1385 = vmatpush1.xpose.msra.mxu0 0.0
    %1386 = vmatprep.subr.mxu0 0.0
    %1387 = vmatpush1.xpose.msra.mxu0 0.0
    %1388 = vmatprep.subr.mxu0 0.0
    %1389 = vmatpush1.xpose.msra.mxu0 0.0
    %1390 = vmatprep.subr.mxu0 0.0
    %1391 = vmatpush1.xpose.msra.mxu0 0.0
    %1392 = vmatprep.subr.mxu0 0.0
    %1393 = vmatpush1.xpose.msra.mxu0 0.0
    %1394 = vmatprep.subr.mxu0 0.0
    %1395 = vmatpush1.xpose.msra.mxu0 0.0
    %1396 = vmatprep.subr.mxu0 0.0
    %1397 = vmatpush1.xpose.msra.mxu0 0.0
    %1398 = vmatprep.subr.mxu0 0.0
    %1399 = vmatpush1.xpose.msra.mxu0 0.0
    %1400 = vmatprep.subr.mxu0 0.0
    %1401 = vmatpush1.xpose.msra.mxu0 0.0
    %1402 = vmatprep.subr.mxu0 0.0
    %1403 = vmatpush1.xpose.msra.mxu0 0.0
    %1404 = vmatprep.subr.mxu0 0.0
    %1405 = vmatpush1.xpose.msra.mxu0 0.0
    %1406 = vmatprep.subr.mxu0 0.0
    %1407 = vmatpush1.xpose.msra.mxu0 %v1376
    %1408 = vmatprep.subr.mxu0 0.0
    %1409 = vmatpush1.xpose.msra.mxu0 %v1373
    %1410 = vmatprep.subr.mxu0 0.0
    %1411 = vmatpush2.xpose.msra.mxu0 0.0
    %1412 = vmatprep.subr.mxu0 0.0
    %1413 = vmatpush2.xpose.msra.mxu0 0.0
    %1414 = vmatprep.subr.mxu0 0.0
    %1415 = vmatpush2.xpose.msra.mxu0 0.0
    %1416 = vmatprep.subr.mxu0 0.0
    %1417 = vmatpush2.xpose.msra.mxu0 0.0
    %1418 = vmatprep.subr.mxu0 0.0
    %1419 = vmatpush2.xpose.msra.mxu0 0.0
    %1420 = vmatprep.subr.mxu0 0.0
    %1421 = vmatpush2.xpose.msra.mxu0 0.0
    %1422 = vmatprep.subr.mxu0 0.0
    %1423 = vmatpush2.xpose.msra.mxu0 0.0
    %1424 = vmatprep.subr.mxu0 0.0
    %1425 = vmatpush2.xpose.msra.mxu0 0.0
    %1426 = vmatprep.subr.mxu0 0.0
    %1427 = vmatpush2.xpose.msra.mxu0 0.0
    %1428 = vmatprep.subr.mxu0 0.0
    %1429 = vmatpush2.xpose.msra.mxu0 0.0
    %1430 = vmatprep.subr.mxu0 0.0
    %1431 = vmatpush2.xpose.msra.mxu0 0.0
    %1432 = vmatprep.subr.mxu0 0.0
    %1433 = vmatpush2.xpose.msra.mxu0 0.0
    %1434 = vmatprep.subr.mxu0 0.0
    %1435 = vmatpush2.xpose.msra.mxu0 0.0
    %1436 = vmatprep.subr.mxu0 0.0
    %1437 = vmatpush2.xpose.msra.mxu0 0.0
    %1438 = vmatprep.subr.mxu0 0.0
    %1439 = vmatpush2.xpose.msra.mxu0 0.0
    %1440 = vmatprep.subr.mxu0 0.0
    %1441 = vmatpush2.xpose.msra.mxu0 0.0
    %1442 = vmatprep.mubr.f32.mxu0 0.0
    %1443 = vmatmul.mubr.f32.gmra.mxu0 %v155
    %v1444 = vpop.f32.mrf.mxu0
    %v1445 = vadd.f32 0.0, %v1444
    %v1446 = vpop.f32.mrf.mxu0
    %1447 = vmatprep.mubr.f32.mxu0 0.0
    %1448 = vmatmul.mubr.f32.gmra.mxu0 %v158
    %v1449 = vpop.f32.mrf.mxu0
    %v1450 = vadd.f32 0.0, %v1449
    %v1451 = vpop.f32.mrf.mxu0
    %1452 = vdwg.mxu0
    %v1454 = vsel %vm30, %v1366, 0
    %v1457 = vsel %vm30, %v1367, 0
    %1459 = vmatprep.subr.mxu0 0.0
    %1460 = vmatpush1.xpose.msra.mxu0 0.0
    %1461 = vmatprep.subr.mxu0 0.0
    %1462 = vmatpush1.xpose.msra.mxu0 0.0
    %1463 = vmatprep.subr.mxu0 0.0
    %1464 = vmatpush1.xpose.msra.mxu0 0.0
    %1465 = vmatprep.subr.mxu0 0.0
    %1466 = vmatpush1.xpose.msra.mxu0 0.0
    %1467 = vmatprep.subr.mxu0 0.0
    %1468 = vmatpush1.xpose.msra.mxu0 0.0
    %1469 = vmatprep.subr.mxu0 0.0
    %1470 = vmatpush1.xpose.msra.mxu0 0.0
    %1471 = vmatprep.subr.mxu0 0.0
    %1472 = vmatpush1.xpose.msra.mxu0 0.0
    %1473 = vmatprep.subr.mxu0 0.0
    %1474 = vmatpush1.xpose.msra.mxu0 0.0
    %1475 = vmatprep.subr.mxu0 0.0
    %1476 = vmatpush1.xpose.msra.mxu0 0.0
    %1477 = vmatprep.subr.mxu0 0.0
    %1478 = vmatpush1.xpose.msra.mxu0 0.0
    %1479 = vmatprep.subr.mxu0 0.0
    %1480 = vmatpush1.xpose.msra.mxu0 0.0
    %1481 = vmatprep.subr.mxu0 0.0
    %1482 = vmatpush1.xpose.msra.mxu0 0.0
    %1483 = vmatprep.subr.mxu0 0.0
    %1484 = vmatpush1.xpose.msra.mxu0 0.0
    %1485 = vmatprep.subr.mxu0 0.0
    %1486 = vmatpush1.xpose.msra.mxu0 0.0
    %1487 = vmatprep.subr.mxu0 0.0
    %1488 = vmatpush1.xpose.msra.mxu0 %v1457
    %1489 = vmatprep.subr.mxu0 0.0
    %1490 = vmatpush1.xpose.msra.mxu0 %v1454
    %1491 = vmatprep.subr.mxu0 0.0
    %1492 = vmatpush2.xpose.msra.mxu0 0.0
    %1493 = vmatprep.subr.mxu0 0.0
    %1494 = vmatpush2.xpose.msra.mxu0 0.0
    %1495 = vmatprep.subr.mxu0 0.0
    %1496 = vmatpush2.xpose.msra.mxu0 0.0
    %1497 = vmatprep.subr.mxu0 0.0
    %1498 = vmatpush2.xpose.msra.mxu0 0.0
    %1499 = vmatprep.subr.mxu0 0.0
    %1500 = vmatpush2.xpose.msra.mxu0 0.0
    %1501 = vmatprep.subr.mxu0 0.0
    %1502 = vmatpush2.xpose.msra.mxu0 0.0
    %1503 = vmatprep.subr.mxu0 0.0
    %1504 = vmatpush2.xpose.msra.mxu0 0.0
    %1505 = vmatprep.subr.mxu0 0.0
    %1506 = vmatpush2.xpose.msra.mxu0 0.0
    %1507 = vmatprep.subr.mxu0 0.0
    %1508 = vmatpush2.xpose.msra.mxu0 0.0
    %1509 = vmatprep.subr.mxu0 0.0
    %1510 = vmatpush2.xpose.msra.mxu0 0.0
    %1511 = vmatprep.subr.mxu0 0.0
    %1512 = vmatpush2.xpose.msra.mxu0 0.0
    %1513 = vmatprep.subr.mxu0 0.0
    %1514 = vmatpush2.xpose.msra.mxu0 0.0
    %1515 = vmatprep.subr.mxu0 0.0
    %1516 = vmatpush2.xpose.msra.mxu0 0.0
    %1517 = vmatprep.subr.mxu0 0.0
    %1518 = vmatpush2.xpose.msra.mxu0 0.0
    %1519 = vmatprep.subr.mxu0 0.0
    %1520 = vmatpush2.xpose.msra.mxu0 0.0
    %1521 = vmatprep.subr.mxu0 0.0
    %1522 = vmatpush2.xpose.msra.mxu0 0.0
    %1523 = vmatprep.mubr.f32.mxu0 0.0
    %1524 = vmatmul.mubr.f32.gmra.mxu0 %v155
    %v1525 = vpop.f32.mrf.mxu0
    %v1526 = vadd.f32 0.0, %v1525
    %v1527 = vpop.f32.mrf.mxu0
    %1528 = vmatprep.mubr.f32.mxu0 0.0
    %1529 = vmatmul.mubr.f32.gmra.mxu0 %v158
    %v1530 = vpop.f32.mrf.mxu0
    %v1531 = vadd.f32 0.0, %v1530
    %v1532 = vpop.f32.mrf.mxu0
    %1533 = vdwg.mxu0
    %v1535 = vsel %vm30, %v1368, 0
    %v1538 = vsel %vm30, %v1369, 0
    %1540 = vmatprep.subr.mxu0 0.0
    %1541 = vmatpush1.xpose.msra.mxu0 0.0
    %1542 = vmatprep.subr.mxu0 0.0
    %1543 = vmatpush1.xpose.msra.mxu0 0.0
    %1544 = vmatprep.subr.mxu0 0.0
    %1545 = vmatpush1.xpose.msra.mxu0 0.0
    %1546 = vmatprep.subr.mxu0 0.0
    %1547 = vmatpush1.xpose.msra.mxu0 0.0
    %1548 = vmatprep.subr.mxu0 0.0
    %1549 = vmatpush1.xpose.msra.mxu0 0.0
    %1550 = vmatprep.subr.mxu0 0.0
    %1551 = vmatpush1.xpose.msra.mxu0 0.0
    %1552 = vmatprep.subr.mxu0 0.0
    %1553 = vmatpush1.xpose.msra.mxu0 0.0
    %1554 = vmatprep.subr.mxu0 0.0
    %1555 = vmatpush1.xpose.msra.mxu0 0.0
    %1556 = vmatprep.subr.mxu0 0.0
    %1557 = vmatpush1.xpose.msra.mxu0 0.0
    %1558 = vmatprep.subr.mxu0 0.0
    %1559 = vmatpush1.xpose.msra.mxu0 0.0
    %1560 = vmatprep.subr.mxu0 0.0
    %1561 = vmatpush1.xpose.msra.mxu0 0.0
    %1562 = vmatprep.subr.mxu0 0.0
    %1563 = vmatpush1.xpose.msra.mxu0 0.0
    %1564 = vmatprep.subr.mxu0 0.0
    %1565 = vmatpush1.xpose.msra.mxu0 0.0
    %1566 = vmatprep.subr.mxu0 0.0
    %1567 = vmatpush1.xpose.msra.mxu0 0.0
    %1568 = vmatprep.subr.mxu0 0.0
    %1569 = vmatpush1.xpose.msra.mxu0 %v1538
    %1570 = vmatprep.subr.mxu0 0.0
    %1571 = vmatpush1.xpose.msra.mxu0 %v1535
    %1572 = vmatprep.subr.mxu0 0.0
    %1573 = vmatpush2.xpose.msra.mxu0 0.0
    %1574 = vmatprep.subr.mxu0 0.0
    %1575 = vmatpush2.xpose.msra.mxu0 0.0
    %1576 = vmatprep.subr.mxu0 0.0
    %1577 = vmatpush2.xpose.msra.mxu0 0.0
    %1578 = vmatprep.subr.mxu0 0.0
    %1579 = vmatpush2.xpose.msra.mxu0 0.0
    %1580 = vmatprep.subr.mxu0 0.0
    %1581 = vmatpush2.xpose.msra.mxu0 0.0
    %1582 = vmatprep.subr.mxu0 0.0
    %1583 = vmatpush2.xpose.msra.mxu0 0.0
    %1584 = vmatprep.subr.mxu0 0.0
    %1585 = vmatpush2.xpose.msra.mxu0 0.0
    %1586 = vmatprep.subr.mxu0 0.0
    %1587 = vmatpush2.xpose.msra.mxu0 0.0
    %1588 = vmatprep.subr.mxu0 0.0
    %1589 = vmatpush2.xpose.msra.mxu0 0.0
    %1590 = vmatprep.subr.mxu0 0.0
    %1591 = vmatpush2.xpose.msra.mxu0 0.0
    %1592 = vmatprep.subr.mxu0 0.0
    %1593 = vmatpush2.xpose.msra.mxu0 0.0
    %1594 = vmatprep.subr.mxu0 0.0
    %1595 = vmatpush2.xpose.msra.mxu0 0.0
    %1596 = vmatprep.subr.mxu0 0.0
    %1597 = vmatpush2.xpose.msra.mxu0 0.0
    %1598 = vmatprep.subr.mxu0 0.0
    %1599 = vmatpush2.xpose.msra.mxu0 0.0
    %1600 = vmatprep.subr.mxu0 0.0
    %1601 = vmatpush2.xpose.msra.mxu0 0.0
    %1602 = vmatprep.subr.mxu0 0.0
    %1603 = vmatpush2.xpose.msra.mxu0 0.0
    %1604 = vmatprep.mubr.f32.mxu0 0.0
    %1605 = vmatmul.mubr.f32.gmra.mxu0 %v155
    %v1606 = vpop.f32.mrf.mxu0
    %v1607 = vadd.f32 0.0, %v1606
    %v1608 = vpop.f32.mrf.mxu0
    %1609 = vmatprep.mubr.f32.mxu0 0.0
    %1610 = vmatmul.mubr.f32.gmra.mxu0 %v158
    %v1611 = vpop.f32.mrf.mxu0
    %v1612 = vadd.f32 0.0, %v1611
    %v1613 = vpop.f32.mrf.mxu0
    %1614 = vdwg.mxu0
    %1615 = vmatprep.subr.mxu0 0.0
    %1616 = vmatpush1.xpose.msra.mxu0 0.0
    %1617 = vmatprep.subr.mxu0 0.0
    %1618 = vmatpush1.xpose.msra.mxu0 0.0
    %1619 = vmatprep.subr.mxu0 0.0
    %1620 = vmatpush1.xpose.msra.mxu0 0.0
    %1621 = vmatprep.subr.mxu0 0.0
    %1622 = vmatpush1.xpose.msra.mxu0 0.0
    %1623 = vmatprep.subr.mxu0 0.0
    %1624 = vmatpush1.xpose.msra.mxu0 0.0
    %1625 = vmatprep.subr.mxu0 0.0
    %1626 = vmatpush1.xpose.msra.mxu0 0.0
    %1627 = vmatprep.subr.mxu0 0.0
    %1628 = vmatpush1.xpose.msra.mxu0 0.0
    %1629 = vmatprep.subr.mxu0 0.0
    %1630 = vmatpush1.xpose.msra.mxu0 0.0
    %1631 = vmatprep.subr.mxu0 0.0
    %1632 = vmatpush1.xpose.msra.mxu0 0.0
    %1633 = vmatprep.subr.mxu0 0.0
    %1634 = vmatpush1.xpose.msra.mxu0 0.0
    %1635 = vmatprep.subr.mxu0 0.0
    %1636 = vmatpush1.xpose.msra.mxu0 0.0
    %1637 = vmatprep.subr.mxu0 0.0
    %1638 = vmatpush1.xpose.msra.mxu0 0.0
    %1639 = vmatprep.subr.mxu0 0.0
    %1640 = vmatpush1.xpose.msra.mxu0 0.0
    %1641 = vmatprep.subr.mxu0 0.0
    %1642 = vmatpush1.xpose.msra.mxu0 0.0
    %1643 = vmatprep.subr.mxu0 0.0
    %1644 = vmatpush1.xpose.msra.mxu0 %v1457
    %1645 = vmatprep.subr.mxu0 0.0
    %1646 = vmatpush1.xpose.msra.mxu0 %v1454
    %1647 = vmatprep.subr.mxu0 0.0
    %1648 = vmatpush2.xpose.msra.mxu0 0.0
    %1649 = vmatprep.subr.mxu0 0.0
    %1650 = vmatpush2.xpose.msra.mxu0 0.0
    %1651 = vmatprep.subr.mxu0 0.0
    %1652 = vmatpush2.xpose.msra.mxu0 0.0
    %1653 = vmatprep.subr.mxu0 0.0
    %1654 = vmatpush2.xpose.msra.mxu0 0.0
    %1655 = vmatprep.subr.mxu0 0.0
    %1656 = vmatpush2.xpose.msra.mxu0 0.0
    %1657 = vmatprep.subr.mxu0 0.0
    %1658 = vmatpush2.xpose.msra.mxu0 0.0
    %1659 = vmatprep.subr.mxu0 0.0
    %1660 = vmatpush2.xpose.msra.mxu0 0.0
    %1661 = vmatprep.subr.mxu0 0.0
    %1662 = vmatpush2.xpose.msra.mxu0 0.0
    %1663 = vmatprep.subr.mxu0 0.0
    %1664 = vmatpush2.xpose.msra.mxu0 0.0
    %1665 = vmatprep.subr.mxu0 0.0
    %1666 = vmatpush2.xpose.msra.mxu0 0.0
    %1667 = vmatprep.subr.mxu0 0.0
    %1668 = vmatpush2.xpose.msra.mxu0 0.0
    %1669 = vmatprep.subr.mxu0 0.0
    %1670 = vmatpush2.xpose.msra.mxu0 0.0
    %1671 = vmatprep.subr.mxu0 0.0
    %1672 = vmatpush2.xpose.msra.mxu0 0.0
    %1673 = vmatprep.subr.mxu0 0.0
    %1674 = vmatpush2.xpose.msra.mxu0 0.0
    %1675 = vmatprep.subr.mxu0 0.0
    %1676 = vmatpush2.xpose.msra.mxu0 0.0
    %1677 = vmatprep.subr.mxu0 0.0
    %1678 = vmatpush2.xpose.msra.mxu0 0.0
    %1679 = vmatprep.mubr.f32.mxu0 0.0
    %1680 = vmatmul.mubr.f32.gmra.mxu0 %v404
    %v1681 = vpop.f32.mrf.mxu0
    %v1682 = vadd.f32 0.0, %v1681
    %v1683 = vpop.f32.mrf.mxu0
    %1684 = vmatprep.mubr.f32.mxu0 0.0
    %1685 = vmatmul.mubr.f32.gmra.mxu0 %v407
    %v1686 = vpop.f32.mrf.mxu0
    %v1687 = vadd.f32 0.0, %v1686
    %v1688 = vpop.f32.mrf.mxu0
    %1689 = vmatprep.mubr.f32.mxu0 0.0
    %1690 = vmatmul.mubr.f32.gmra.mxu0 %v410
    %v1691 = vpop.f32.mrf.mxu0
    %v1692 = vadd.f32 0.0, %v1691
    %v1693 = vpop.f32.mrf.mxu0
    %1694 = vmatprep.mubr.f32.mxu0 0.0
    %1695 = vmatmul.mubr.f32.gmra.mxu0 %v413
    %v1696 = vpop.f32.mrf.mxu0
    %v1697 = vadd.f32 0.0, %v1696
    %v1698 = vpop.f32.mrf.mxu0
    %1699 = vdwg.mxu0
    %1700 = vmatprep.subr.mxu0 0.0
    %1701 = vmatpush1.xpose.msra.mxu0 0.0
    %1702 = vmatprep.subr.mxu0 0.0
    %1703 = vmatpush1.xpose.msra.mxu0 0.0
    %1704 = vmatprep.subr.mxu0 0.0
    %1705 = vmatpush1.xpose.msra.mxu0 0.0
    %1706 = vmatprep.subr.mxu0 0.0
    %1707 = vmatpush1.xpose.msra.mxu0 0.0
    %1708 = vmatprep.subr.mxu0 0.0
    %1709 = vmatpush1.xpose.msra.mxu0 0.0
    %1710 = vmatprep.subr.mxu0 0.0
    %1711 = vmatpush1.xpose.msra.mxu0 0.0
    %1712 = vmatprep.subr.mxu0 0.0
    %1713 = vmatpush1.xpose.msra.mxu0 0.0
    %1714 = vmatprep.subr.mxu0 0.0
    %1715 = vmatpush1.xpose.msra.mxu0 0.0
    %1716 = vmatprep.subr.mxu0 0.0
    %1717 = vmatpush1.xpose.msra.mxu0 0.0
    %1718 = vmatprep.subr.mxu0 0.0
    %1719 = vmatpush1.xpose.msra.mxu0 0.0
    %1720 = vmatprep.subr.mxu0 0.0
    %1721 = vmatpush1.xpose.msra.mxu0 0.0
    %1722 = vmatprep.subr.mxu0 0.0
    %1723 = vmatpush1.xpose.msra.mxu0 0.0
    %1724 = vmatprep.subr.mxu0 0.0
    %1725 = vmatpush1.xpose.msra.mxu0 0.0
    %1726 = vmatprep.subr.mxu0 0.0
    %1727 = vmatpush1.xpose.msra.mxu0 0.0
    %1728 = vmatprep.subr.mxu0 0.0
    %1729 = vmatpush1.xpose.msra.mxu0 %v1538
    %1730 = vmatprep.subr.mxu0 0.0
    %1731 = vmatpush1.xpose.msra.mxu0 %v1535
    %1732 = vmatprep.subr.mxu0 0.0
    %1733 = vmatpush2.xpose.msra.mxu0 0.0
    %1734 = vmatprep.subr.mxu0 0.0
    %1735 = vmatpush2.xpose.msra.mxu0 0.0
    %1736 = vmatprep.subr.mxu0 0.0
    %1737 = vmatpush2.xpose.msra.mxu0 0.0
    %1738 = vmatprep.subr.mxu0 0.0
    %1739 = vmatpush2.xpose.msra.mxu0 0.0
    %1740 = vmatprep.subr.mxu0 0.0
    %1741 = vmatpush2.xpose.msra.mxu0 0.0
    %1742 = vmatprep.subr.mxu0 0.0
    %1743 = vmatpush2.xpose.msra.mxu0 0.0
    %1744 = vmatprep.subr.mxu0 0.0
    %1745 = vmatpush2.xpose.msra.mxu0 0.0
    %1746 = vmatprep.subr.mxu0 0.0
    %1747 = vmatpush2.xpose.msra.mxu0 0.0
    %1748 = vmatprep.subr.mxu0 0.0
    %1749 = vmatpush2.xpose.msra.mxu0 0.0
    %1750 = vmatprep.subr.mxu0 0.0
    %1751 = vmatpush2.xpose.msra.mxu0 0.0
    %1752 = vmatprep.subr.mxu0 0.0
    %1753 = vmatpush2.xpose.msra.mxu0 0.0
    %1754 = vmatprep.subr.mxu0 0.0
    %1755 = vmatpush2.xpose.msra.mxu0 0.0
    %1756 = vmatprep.subr.mxu0 0.0
    %1757 = vmatpush2.xpose.msra.mxu0 0.0
    %1758 = vmatprep.subr.mxu0 0.0
    %1759 = vmatpush2.xpose.msra.mxu0 0.0
    %1760 = vmatprep.subr.mxu0 0.0
    %1761 = vmatpush2.xpose.msra.mxu0 0.0
    %1762 = vmatprep.subr.mxu0 0.0
    %1763 = vmatpush2.xpose.msra.mxu0 0.0
    %1764 = vmatprep.mubr.f32.mxu0 0.0
    %1765 = vmatmul.mubr.f32.gmra.mxu0 %v404
    %v1766 = vpop.f32.mrf.mxu0
    %v1767 = vadd.f32 0.0, %v1766
    %v1768 = vpop.f32.mrf.mxu0
    %1769 = vmatprep.mubr.f32.mxu0 0.0
    %1770 = vmatmul.mubr.f32.gmra.mxu0 %v407
    %v1771 = vpop.f32.mrf.mxu0
    %v1772 = vadd.f32 0.0, %v1771
    %v1773 = vpop.f32.mrf.mxu0
    %1774 = vmatprep.mubr.f32.mxu0 0.0
    %1775 = vmatmul.mubr.f32.gmra.mxu0 %v410
    %v1776 = vpop.f32.mrf.mxu0
    %v1777 = vadd.f32 0.0, %v1776
    %v1778 = vpop.f32.mrf.mxu0
    %1779 = vmatprep.mubr.f32.mxu0 0.0
    %1780 = vmatmul.mubr.f32.gmra.mxu0 %v413
    %v1781 = vpop.f32.mrf.mxu0
    %v1782 = vadd.f32 0.0, %v1781
    %v1783 = vpop.f32.mrf.mxu0
    %1784 = vdwg.mxu0
    %v1785 = vsel %vm585, %v1445, 0.0
    %1786 = vadd.xlane.f32.xlu0 %v1785
    %v1787 = vpop.xlane.xlu0 %1786
    %v1788 = vsel %vm585, %v1450, 0.0
    %1789 = vadd.xlane.f32.xlu0 %v1788
    %v1790 = vpop.xlane.xlu0 %1789
    %v1791 = vmul.f32 %v1787, %v592
    %v1792 = vmul.f32 %v1790, %v592
    %v1793 = vsub.f32 %v1445, %v1791
    %v1794 = vsub.f32 %v1450, %v1792
    %v1795 = vmul.f32 %v1793, %v1793
    %v1796 = vmul.f32 %v1794, %v1794
    %v1797 = vsel %vm585, %v1795, 0.0
    %1798 = vadd.xlane.f32.xlu0 %v1797
    %v1799 = vpop.xlane.xlu0 %1798
    %v1800 = vsel %vm585, %v1796, 0.0
    %1801 = vadd.xlane.f32.xlu0 %v1800
    %v1802 = vpop.xlane.xlu0 %1801
    %v1803 = vmul.f32 %v1799, %v592
    %v1804 = vmul.f32 %v1802, %v592
    %v1805 = vadd.f32 %v1803, 1e-05
    %v1806 = vadd.f32 %v1804, 1e-05
    %v1807 = vrsqrt.pop %v1805
    %v1808 = vrsqrt.pop %v1806
    %v1809 = vmul.f32 %v1793, %v1807
    %v1810 = vmul.f32 %v1794, %v1808
    %v1811 = vmul.f32 %v1809, %v616
    %v1812 = vmul.f32 %v1810, %v616
    %v1813 = vadd.f32 %v1811, %v622
    %v1814 = vadd.f32 %v1812, %v622
    %v1815 = vsel %vm585, %v1526, 0.0
    %1816 = vadd.xlane.f32.xlu0 %v1815
    %v1817 = vpop.xlane.xlu0 %1816
    %v1818 = vsel %vm585, %v1531, 0.0
    %1819 = vadd.xlane.f32.xlu0 %v1818
    %v1820 = vpop.xlane.xlu0 %1819
    %v1821 = vmul.f32 %v1817, %v592
    %v1822 = vmul.f32 %v1820, %v592
    %v1823 = vsub.f32 %v1526, %v1821
    %v1824 = vsub.f32 %v1531, %v1822
    %v1825 = vmul.f32 %v1823, %v1823
    %v1826 = vmul.f32 %v1824, %v1824
    %v1827 = vsel %vm585, %v1825, 0.0
    %1828 = vadd.xlane.f32.xlu0 %v1827
    %v1829 = vpop.xlane.xlu0 %1828
    %v1830 = vsel %vm585, %v1826, 0.0
    %1831 = vadd.xlane.f32.xlu0 %v1830
    %v1832 = vpop.xlane.xlu0 %1831
    %v1833 = vmul.f32 %v1829, %v592
    %v1834 = vmul.f32 %v1832, %v592
    %v1835 = vadd.f32 %v1833, 1e-05
    %v1836 = vadd.f32 %v1834, 1e-05
    %v1837 = vrsqrt.pop %v1835
    %v1838 = vrsqrt.pop %v1836
    %v1839 = vmul.f32 %v1823, %v1837
    %v1840 = vmul.f32 %v1824, %v1838
    %v1841 = vmul.f32 %v1839, %v654
    %v1842 = vmul.f32 %v1840, %v654
    %v1843 = vadd.f32 %v1841, %v660
    %v1844 = vadd.f32 %v1842, %v660
    %v1845 = vsel %vm585, %v1682, 0.0
    %1846 = vadd.xlane.f32.xlu0 %v1845
    %v1847 = vpop.xlane.xlu0 %1846
    %v1848 = vsel %vm585, %v1687, 0.0
    %1849 = vadd.xlane.f32.xlu0 %v1848
    %v1850 = vpop.xlane.xlu0 %1849
    %v1851 = vsel %vm585, %v1692, 0.0
    %1852 = vadd.xlane.f32.xlu0 %v1851
    %v1853 = vpop.xlane.xlu0 %1852
    %v1854 = vsel %vm585, %v1697, 0.0
    %1855 = vadd.xlane.f32.xlu0 %v1854
    %v1856 = vpop.xlane.xlu0 %1855
    %v1857 = vmul.f32 %v1847, %v592
    %v1858 = vmul.f32 %v1850, %v592
    %v1859 = vmul.f32 %v1853, %v592
    %v1860 = vmul.f32 %v1856, %v592
    %v1861 = vsub.f32 %v1682, %v1857
    %v1862 = vsub.f32 %v1687, %v1858
    %v1863 = vsub.f32 %v1692, %v1859
    %v1864 = vsub.f32 %v1697, %v1860
    %v1865 = vmul.f32 %v1861, %v1861
    %v1866 = vmul.f32 %v1862, %v1862
    %v1867 = vmul.f32 %v1863, %v1863
    %v1868 = vmul.f32 %v1864, %v1864
    %v1869 = vsel %vm585, %v1865, 0.0
    %1870 = vadd.xlane.f32.xlu0 %v1869
    %v1871 = vpop.xlane.xlu0 %1870
    %v1872 = vsel %vm585, %v1866, 0.0
    %1873 = vadd.xlane.f32.xlu0 %v1872
    %v1874 = vpop.xlane.xlu0 %1873
    %v1875 = vsel %vm585, %v1867, 0.0
    %1876 = vadd.xlane.f32.xlu0 %v1875
    %v1877 = vpop.xlane.xlu0 %1876
    %v1878 = vsel %vm585, %v1868, 0.0
    %1879 = vadd.xlane.f32.xlu0 %v1878
    %v1880 = vpop.xlane.xlu0 %1879
    %v1881 = vmul.f32 %v1871, %v592
    %v1882 = vmul.f32 %v1874, %v592
    %v1883 = vmul.f32 %v1877, %v592
    %v1884 = vmul.f32 %v1880, %v592
    %v1885 = vadd.f32 %v1881, 1e-05
    %v1886 = vadd.f32 %v1882, 1e-05
    %v1887 = vadd.f32 %v1883, 1e-05
    %v1888 = vadd.f32 %v1884, 1e-05
    %v1889 = vrsqrt.pop %v1885
    %v1890 = vrsqrt.pop %v1886
    %v1891 = vrsqrt.pop %v1887
    %v1892 = vrsqrt.pop %v1888
    %v1893 = vmul.f32 %v1861, %v1889
    %v1894 = vmul.f32 %v1862, %v1890
    %v1895 = vmul.f32 %v1863, %v1891
    %v1896 = vmul.f32 %v1864, %v1892
    %v1897 = vmul.f32 %v1893, %v654
    %v1898 = vmul.f32 %v1894, %v654
    %v1899 = vmul.f32 %v1895, %v654
    %v1900 = vmul.f32 %v1896, %v654
    %v1901 = vadd.f32 %v1897, %v660
    %v1902 = vadd.f32 %v1898, %v660
    %v1903 = vadd.f32 %v1899, %v660
    %v1904 = vadd.f32 %v1900, %v660
    %v1906 = vsel %vm585, %v1813, 0
    %v1909 = vsel %vm585, %v1901, 0
    %v1912 = vsel %vm585, %v1902, 0
    %1914 = vmatprep.subr.mxu0 0.0
    %1915 = vmatpush1.xpose.msra.mxu0 0.0
    %1916 = vmatprep.subr.mxu0 0.0
    %1917 = vmatpush1.xpose.msra.mxu0 0.0
    %1918 = vmatprep.subr.mxu0 0.0
    %1919 = vmatpush1.xpose.msra.mxu0 0.0
    %1920 = vmatprep.subr.mxu0 0.0
    %1921 = vmatpush1.xpose.msra.mxu0 0.0
    %1922 = vmatprep.subr.mxu0 0.0
    %1923 = vmatpush1.xpose.msra.mxu0 0.0
    %1924 = vmatprep.subr.mxu0 0.0
    %1925 = vmatpush1.xpose.msra.mxu0 0.0
    %1926 = vmatprep.subr.mxu0 0.0
    %1927 = vmatpush1.xpose.msra.mxu0 0.0
    %1928 = vmatprep.subr.mxu0 0.0
    %1929 = vmatpush1.xpose.msra.mxu0 0.0
    %1930 = vmatprep.subr.mxu0 0.0
    %1931 = vmatpush1.xpose.msra.mxu0 0.0
    %1932 = vmatprep.subr.mxu0 0.0
    %1933 = vmatpush1.xpose.msra.mxu0 0.0
    %1934 = vmatprep.subr.mxu0 0.0
    %1935 = vmatpush1.xpose.msra.mxu0 0.0
    %1936 = vmatprep.subr.mxu0 0.0
    %1937 = vmatpush1.xpose.msra.mxu0 0.0
    %1938 = vmatprep.subr.mxu0 0.0
    %1939 = vmatpush1.xpose.msra.mxu0 0.0
    %1940 = vmatprep.subr.mxu0 0.0
    %1941 = vmatpush1.xpose.msra.mxu0 0.0
    %1942 = vmatprep.subr.mxu0 0.0
    %1943 = vmatpush1.xpose.msra.mxu0 %v1912
    %1944 = vmatprep.subr.mxu0 0.0
    %1945 = vmatpush1.xpose.msra.mxu0 %v1909
    %1946 = vmatprep.subr.mxu0 0.0
    %1947 = vmatpush2.xpose.msra.mxu0 0.0
    %1948 = vmatprep.subr.mxu0 0.0
    %1949 = vmatpush2.xpose.msra.mxu0 0.0
    %1950 = vmatprep.subr.mxu0 0.0
    %1951 = vmatpush2.xpose.msra.mxu0 0.0
    %1952 = vmatprep.subr.mxu0 0.0
    %1953 = vmatpush2.xpose.msra.mxu0 0.0
    %1954 = vmatprep.subr.mxu0 0.0
    %1955 = vmatpush2.xpose.msra.mxu0 0.0
    %1956 = vmatprep.subr.mxu0 0.0
    %1957 = vmatpush2.xpose.msra.mxu0 0.0
    %1958 = vmatprep.subr.mxu0 0.0
    %1959 = vmatpush2.xpose.msra.mxu0 0.0
    %1960 = vmatprep.subr.mxu0 0.0
    %1961 = vmatpush2.xpose.msra.mxu0 0.0
    %1962 = vmatprep.subr.mxu0 0.0
    %1963 = vmatpush2.xpose.msra.mxu0 0.0
    %1964 = vmatprep.subr.mxu0 0.0
    %1965 = vmatpush2.xpose.msra.mxu0 0.0
    %1966 = vmatprep.subr.mxu0 0.0
    %1967 = vmatpush2.xpose.msra.mxu0 0.0
    %1968 = vmatprep.subr.mxu0 0.0
    %1969 = vmatpush2.xpose.msra.mxu0 0.0
    %1970 = vmatprep.subr.mxu0 0.0
    %1971 = vmatpush2.xpose.msra.mxu0 0.0
    %1972 = vmatprep.subr.mxu0 0.0
    %1973 = vmatpush2.xpose.msra.mxu0 0.0
    %1974 = vmatprep.subr.mxu0 0.0
    %1975 = vmatpush2.xpose.msra.mxu0 0.0
    %1976 = vmatprep.subr.mxu0 0.0
    %1977 = vmatpush2.xpose.msra.mxu0 0.0
    %1978 = vmatprep.mubr.f32.mxu0 0.0
    %1979 = vmatmul.mubr.f32.gmra.mxu0 %v1906
    %v1980 = vpop.f32.mrf.mxu0
    %v1981 = vadd.f32 0.0, %v1980
    %v1982 = vpop.f32.mrf.mxu0
    %1983 = vdwg.mxu0
    %v1985 = vsel %vm585, %v1814, 0
    %v1988 = vsel %vm585, %v1903, 0
    %v1991 = vsel %vm585, %v1904, 0
    %1993 = vmatprep.subr.mxu0 0.0
    %1994 = vmatpush1.xpose.msra.mxu0 0.0
    %1995 = vmatprep.subr.mxu0 0.0
    %1996 = vmatpush1.xpose.msra.mxu0 0.0
    %1997 = vmatprep.subr.mxu0 0.0
    %1998 = vmatpush1.xpose.msra.mxu0 0.0
    %1999 = vmatprep.subr.mxu0 0.0
    %2000 = vmatpush1.xpose.msra.mxu0 0.0
    %2001 = vmatprep.subr.mxu0 0.0
    %2002 = vmatpush1.xpose.msra.mxu0 0.0
    %2003 = vmatprep.subr.mxu0 0.0
    %2004 = vmatpush1.xpose.msra.mxu0 0.0
    %2005 = vmatprep.subr.mxu0 0.0
    %2006 = vmatpush1.xpose.msra.mxu0 0.0
    %2007 = vmatprep.subr.mxu0 0.0
    %2008 = vmatpush1.xpose.msra.mxu0 0.0
    %2009 = vmatprep.subr.mxu0 0.0
    %2010 = vmatpush1.xpose.msra.mxu0 0.0
    %2011 = vmatprep.subr.mxu0 0.0
    %2012 = vmatpush1.xpose.msra.mxu0 0.0
    %2013 = vmatprep.subr.mxu0 0.0
    %2014 = vmatpush1.xpose.msra.mxu0 0.0
    %2015 = vmatprep.subr.mxu0 0.0
    %2016 = vmatpush1.xpose.msra.mxu0 0.0
    %2017 = vmatprep.subr.mxu0 0.0
    %2018 = vmatpush1.xpose.msra.mxu0 0.0
    %2019 = vmatprep.subr.mxu0 0.0
    %2020 = vmatpush1.xpose.msra.mxu0 0.0
    %2021 = vmatprep.subr.mxu0 0.0
    %2022 = vmatpush1.xpose.msra.mxu0 %v1991
    %2023 = vmatprep.subr.mxu0 0.0
    %2024 = vmatpush1.xpose.msra.mxu0 %v1988
    %2025 = vmatprep.subr.mxu0 0.0
    %2026 = vmatpush2.xpose.msra.mxu0 0.0
    %2027 = vmatprep.subr.mxu0 0.0
    %2028 = vmatpush2.xpose.msra.mxu0 0.0
    %2029 = vmatprep.subr.mxu0 0.0
    %2030 = vmatpush2.xpose.msra.mxu0 0.0
    %2031 = vmatprep.subr.mxu0 0.0
    %2032 = vmatpush2.xpose.msra.mxu0 0.0
    %2033 = vmatprep.subr.mxu0 0.0
    %2034 = vmatpush2.xpose.msra.mxu0 0.0
    %2035 = vmatprep.subr.mxu0 0.0
    %2036 = vmatpush2.xpose.msra.mxu0 0.0
    %2037 = vmatprep.subr.mxu0 0.0
    %2038 = vmatpush2.xpose.msra.mxu0 0.0
    %2039 = vmatprep.subr.mxu0 0.0
    %2040 = vmatpush2.xpose.msra.mxu0 0.0
    %2041 = vmatprep.subr.mxu0 0.0
    %2042 = vmatpush2.xpose.msra.mxu0 0.0
    %2043 = vmatprep.subr.mxu0 0.0
    %2044 = vmatpush2.xpose.msra.mxu0 0.0
    %2045 = vmatprep.subr.mxu0 0.0
    %2046 = vmatpush2.xpose.msra.mxu0 0.0
    %2047 = vmatprep.subr.mxu0 0.0
    %2048 = vmatpush2.xpose.msra.mxu0 0.0
    %2049 = vmatprep.subr.mxu0 0.0
    %2050 = vmatpush2.xpose.msra.mxu0 0.0
    %2051 = vmatprep.subr.mxu0 0.0
    %2052 = vmatpush2.xpose.msra.mxu0 0.0
    %2053 = vmatprep.subr.mxu0 0.0
    %2054 = vmatpush2.xpose.msra.mxu0 0.0
    %2055 = vmatprep.subr.mxu0 0.0
    %2056 = vmatpush2.xpose.msra.mxu0 0.0
    %2057 = vmatprep.mubr.f32.mxu0 0.0
    %2058 = vmatmul.mubr.f32.gmra.mxu0 %v1985
    %v2059 = vpop.f32.mrf.mxu0
    %v2060 = vadd.f32 0.0, %v2059
    %v2061 = vpop.f32.mrf.mxu0
    %2062 = vdwg.mxu0
    %v2064 = vsel %vm585, %v1843, 0
    %2066 = vmatprep.subr.mxu0 0.0
    %2067 = vmatpush1.xpose.msra.mxu0 0.0
    %2068 = vmatprep.subr.mxu0 0.0
    %2069 = vmatpush1.xpose.msra.mxu0 0.0
    %2070 = vmatprep.subr.mxu0 0.0
    %2071 = vmatpush1.xpose.msra.mxu0 0.0
    %2072 = vmatprep.subr.mxu0 0.0
    %2073 = vmatpush1.xpose.msra.mxu0 0.0
    %2074 = vmatprep.subr.mxu0 0.0
    %2075 = vmatpush1.xpose.msra.mxu0 0.0
    %2076 = vmatprep.subr.mxu0 0.0
    %2077 = vmatpush1.xpose.msra.mxu0 0.0
    %2078 = vmatprep.subr.mxu0 0.0
    %2079 = vmatpush1.xpose.msra.mxu0 0.0
    %2080 = vmatprep.subr.mxu0 0.0
    %2081 = vmatpush1.xpose.msra.mxu0 0.0
    %2082 = vmatprep.subr.mxu0 0.0
    %2083 = vmatpush1.xpose.msra.mxu0 0.0
    %2084 = vmatprep.subr.mxu0 0.0
    %2085 = vmatpush1.xpose.msra.mxu0 0.0
    %2086 = vmatprep.subr.mxu0 0.0
    %2087 = vmatpush1.xpose.msra.mxu0 0.0
    %2088 = vmatprep.subr.mxu0 0.0
    %2089 = vmatpush1.xpose.msra.mxu0 0.0
    %2090 = vmatprep.subr.mxu0 0.0
    %2091 = vmatpush1.xpose.msra.mxu0 0.0
    %2092 = vmatprep.subr.mxu0 0.0
    %2093 = vmatpush1.xpose.msra.mxu0 0.0
    %2094 = vmatprep.subr.mxu0 0.0
    %2095 = vmatpush1.xpose.msra.mxu0 0.0
    %2096 = vmatprep.subr.mxu0 0.0
    %2097 = vmatpush1.xpose.msra.mxu0 %v2064
    %2098 = vmatprep.subr.mxu0 0.0
    %2099 = vmatpush2.xpose.msra.mxu0 0.0
    %2100 = vmatprep.subr.mxu0 0.0
    %2101 = vmatpush2.xpose.msra.mxu0 0.0
    %2102 = vmatprep.subr.mxu0 0.0
    %2103 = vmatpush2.xpose.msra.mxu0 0.0
    %2104 = vmatprep.subr.mxu0 0.0
    %2105 = vmatpush2.xpose.msra.mxu0 0.0
    %2106 = vmatprep.subr.mxu0 0.0
    %2107 = vmatpush2.xpose.msra.mxu0 0.0
    %2108 = vmatprep.subr.mxu0 0.0
    %2109 = vmatpush2.xpose.msra.mxu0 0.0
    %2110 = vmatprep.subr.mxu0 0.0
    %2111 = vmatpush2.xpose.msra.mxu0 0.0
    %2112 = vmatprep.subr.mxu0 0.0
    %2113 = vmatpush2.xpose.msra.mxu0 0.0
    %2114 = vmatprep.subr.mxu0 0.0
    %2115 = vmatpush2.xpose.msra.mxu0 0.0
    %2116 = vmatprep.subr.mxu0 0.0
    %2117 = vmatpush2.xpose.msra.mxu0 0.0
    %2118 = vmatprep.subr.mxu0 0.0
    %2119 = vmatpush2.xpose.msra.mxu0 0.0
    %2120 = vmatprep.subr.mxu0 0.0
    %2121 = vmatpush2.xpose.msra.mxu0 0.0
    %2122 = vmatprep.subr.mxu0 0.0
    %2123 = vmatpush2.xpose.msra.mxu0 0.0
    %2124 = vmatprep.subr.mxu0 0.0
    %2125 = vmatpush2.xpose.msra.mxu0 0.0
    %2126 = vmatprep.subr.mxu0 0.0
    %2127 = vmatpush2.xpose.msra.mxu0 0.0
    %2128 = vmatprep.subr.mxu0 0.0
    %2129 = vmatpush2.xpose.msra.mxu0 0.0
    %2130 = vmatprep.mubr.f32.mxu0 0.0
    %2131 = vmatmul.mubr.f32.gmra.mxu0 %v1906
    %v2132 = vpop.f32.mrf.mxu0
    %v2133 = vadd.f32 0.0, %v2132
    %v2134 = vpop.f32.mrf.mxu0
    %2135 = vdwg.mxu0
    %v2137 = vsel %vm585, %v1844, 0
    %2139 = vmatprep.subr.mxu0 0.0
    %2140 = vmatpush1.xpose.msra.mxu0 0.0
    %2141 = vmatprep.subr.mxu0 0.0
    %2142 = vmatpush1.xpose.msra.mxu0 0.0
    %2143 = vmatprep.subr.mxu0 0.0
    %2144 = vmatpush1.xpose.msra.mxu0 0.0
    %2145 = vmatprep.subr.mxu0 0.0
    %2146 = vmatpush1.xpose.msra.mxu0 0.0
    %2147 = vmatprep.subr.mxu0 0.0
    %2148 = vmatpush1.xpose.msra.mxu0 0.0
    %2149 = vmatprep.subr.mxu0 0.0
    %2150 = vmatpush1.xpose.msra.mxu0 0.0
    %2151 = vmatprep.subr.mxu0 0.0
    %2152 = vmatpush1.xpose.msra.mxu0 0.0
    %2153 = vmatprep.subr.mxu0 0.0
    %2154 = vmatpush1.xpose.msra.mxu0 0.0
    %2155 = vmatprep.subr.mxu0 0.0
    %2156 = vmatpush1.xpose.msra.mxu0 0.0
    %2157 = vmatprep.subr.mxu0 0.0
    %2158 = vmatpush1.xpose.msra.mxu0 0.0
    %2159 = vmatprep.subr.mxu0 0.0
    %2160 = vmatpush1.xpose.msra.mxu0 0.0
    %2161 = vmatprep.subr.mxu0 0.0
    %2162 = vmatpush1.xpose.msra.mxu0 0.0
    %2163 = vmatprep.subr.mxu0 0.0
    %2164 = vmatpush1.xpose.msra.mxu0 0.0
    %2165 = vmatprep.subr.mxu0 0.0
    %2166 = vmatpush1.xpose.msra.mxu0 0.0
    %2167 = vmatprep.subr.mxu0 0.0
    %2168 = vmatpush1.xpose.msra.mxu0 0.0
    %2169 = vmatprep.subr.mxu0 0.0
    %2170 = vmatpush1.xpose.msra.mxu0 %v2137
    %2171 = vmatprep.subr.mxu0 0.0
    %2172 = vmatpush2.xpose.msra.mxu0 0.0
    %2173 = vmatprep.subr.mxu0 0.0
    %2174 = vmatpush2.xpose.msra.mxu0 0.0
    %2175 = vmatprep.subr.mxu0 0.0
    %2176 = vmatpush2.xpose.msra.mxu0 0.0
    %2177 = vmatprep.subr.mxu0 0.0
    %2178 = vmatpush2.xpose.msra.mxu0 0.0
    %2179 = vmatprep.subr.mxu0 0.0
    %2180 = vmatpush2.xpose.msra.mxu0 0.0
    %2181 = vmatprep.subr.mxu0 0.0
    %2182 = vmatpush2.xpose.msra.mxu0 0.0
    %2183 = vmatprep.subr.mxu0 0.0
    %2184 = vmatpush2.xpose.msra.mxu0 0.0
    %2185 = vmatprep.subr.mxu0 0.0
    %2186 = vmatpush2.xpose.msra.mxu0 0.0
    %2187 = vmatprep.subr.mxu0 0.0
    %2188 = vmatpush2.xpose.msra.mxu0 0.0
    %2189 = vmatprep.subr.mxu0 0.0
    %2190 = vmatpush2.xpose.msra.mxu0 0.0
    %2191 = vmatprep.subr.mxu0 0.0
    %2192 = vmatpush2.xpose.msra.mxu0 0.0
    %2193 = vmatprep.subr.mxu0 0.0
    %2194 = vmatpush2.xpose.msra.mxu0 0.0
    %2195 = vmatprep.subr.mxu0 0.0
    %2196 = vmatpush2.xpose.msra.mxu0 0.0
    %2197 = vmatprep.subr.mxu0 0.0
    %2198 = vmatpush2.xpose.msra.mxu0 0.0
    %2199 = vmatprep.subr.mxu0 0.0
    %2200 = vmatpush2.xpose.msra.mxu0 0.0
    %2201 = vmatprep.subr.mxu0 0.0
    %2202 = vmatpush2.xpose.msra.mxu0 0.0
    %2203 = vmatprep.mubr.f32.mxu0 0.0
    %2204 = vmatmul.mubr.f32.gmra.mxu0 %v1985
    %v2205 = vpop.f32.mrf.mxu0
    %v2206 = vadd.f32 0.0, %v2205
    %v2207 = vpop.f32.mrf.mxu0
    %2208 = vdwg.mxu0
    %v2209 = vsel %vm585, %v1981, -inf
    %2210 = vmax.xlane.f32.xlu0 %v2209
    %v2211 = vpop.xlane.xlu0 %2210
    %v2212 = vsel %vm585, %v2060, -inf
    %2213 = vmax.xlane.f32.xlu0 %v2212
    %v2214 = vpop.xlane.xlu0 %2213
    %v2215 = vsel %vm1033, %v2133, -inf
    %2216 = vmax.xlane.f32.xlu0 %v2215
    %v2217 = vpop.xlane.xlu0 %2216
    %v2218 = vsel %vm1033, %v2206, -inf
    %2219 = vmax.xlane.f32.xlu0 %v2218
    %v2220 = vpop.xlane.xlu0 %2219
    %v2221 = vmax.f32 %v2211, %v2217
    %v2222 = vmax.f32 %v2214, %v2220
    %v2223 = vsub.f32 %v1981, %v2221
    %v2224 = vsub.f32 %v2060, %v2222
    %v2225 = vmul.f32 %v2223, 1.442695
    %v2226 = vpow.pop %v2225
    %v2227 = vmul.f32 %v2224, 1.442695
    %v2228 = vpow.pop %v2227
    %v2229 = vsub.f32 %v2133, %v2221
    %v2230 = vsub.f32 %v2206, %v2222
    %v2231 = vmul.f32 %v2229, 1.442695
    %v2232 = vpow.pop %v2231
    %v2233 = vmul.f32 %v2230, 1.442695
    %v2234 = vpow.pop %v2233
    %v2235 = vsel %vm585, %v2226, 0.0
    %2236 = vadd.xlane.f32.xlu0 %v2235
    %v2237 = vpop.xlane.xlu0 %2236
    %v2238 = vsel %vm585, %v2228, 0.0
    %2239 = vadd.xlane.f32.xlu0 %v2238
    %v2240 = vpop.xlane.xlu0 %2239
    %v2241 = vsel %vm1033, %v2232, 0.0
    %2242 = vadd.xlane.f32.xlu0 %v2241
    %v2243 = vpop.xlane.xlu0 %2242
    %v2244 = vsel %vm1033, %v2234, 0.0
    %2245 = vadd.xlane.f32.xlu0 %v2244
    %v2246 = vpop.xlane.xlu0 %2245
    %v2247 = vadd.f32 %v2237, %v2243
    %v2248 = vadd.f32 %v2240, %v2246
    %v2250 = vsel %vm1033, %v2232, 0
    %2252 = vmatprep.subr.mxu0 0.0
    %2253 = vmatpush1.msra.mxu0 0.0
    %2254 = vmatprep.subr.mxu0 0.0
    %2255 = vmatpush1.msra.mxu0 0.0
    %2256 = vmatprep.subr.mxu0 0.0
    %2257 = vmatpush1.msra.mxu0 0.0
    %2258 = vmatprep.subr.mxu0 0.0
    %2259 = vmatpush1.msra.mxu0 0.0
    %2260 = vmatprep.subr.mxu0 0.0
    %2261 = vmatpush1.msra.mxu0 0.0
    %2262 = vmatprep.subr.mxu0 0.0
    %2263 = vmatpush1.msra.mxu0 0.0
    %2264 = vmatprep.subr.mxu0 0.0
    %2265 = vmatpush1.msra.mxu0 0.0
    %2266 = vmatprep.subr.mxu0 0.0
    %2267 = vmatpush1.msra.mxu0 0.0
    %2268 = vmatprep.subr.mxu0 0.0
    %2269 = vmatpush1.msra.mxu0 0.0
    %2270 = vmatprep.subr.mxu0 0.0
    %2271 = vmatpush1.msra.mxu0 0.0
    %2272 = vmatprep.subr.mxu0 0.0
    %2273 = vmatpush1.msra.mxu0 0.0
    %2274 = vmatprep.subr.mxu0 0.0
    %2275 = vmatpush1.msra.mxu0 0.0
    %2276 = vmatprep.subr.mxu0 0.0
    %2277 = vmatpush1.msra.mxu0 0.0
    %2278 = vmatprep.subr.mxu0 0.0
    %2279 = vmatpush1.msra.mxu0 0.0
    %2280 = vmatprep.subr.mxu0 0.0
    %2281 = vmatpush1.msra.mxu0 0.0
    %2282 = vmatprep.subr.mxu0 0.0
    %2283 = vmatpush1.msra.mxu0 %v1607
    %2284 = vmatprep.subr.mxu0 0.0
    %2285 = vmatpush2.msra.mxu0 0.0
    %2286 = vmatprep.subr.mxu0 0.0
    %2287 = vmatpush2.msra.mxu0 0.0
    %2288 = vmatprep.subr.mxu0 0.0
    %2289 = vmatpush2.msra.mxu0 0.0
    %2290 = vmatprep.subr.mxu0 0.0
    %2291 = vmatpush2.msra.mxu0 0.0
    %2292 = vmatprep.subr.mxu0 0.0
    %2293 = vmatpush2.msra.mxu0 0.0
    %2294 = vmatprep.subr.mxu0 0.0
    %2295 = vmatpush2.msra.mxu0 0.0
    %2296 = vmatprep.subr.mxu0 0.0
    %2297 = vmatpush2.msra.mxu0 0.0
    %2298 = vmatprep.subr.mxu0 0.0
    %2299 = vmatpush2.msra.mxu0 0.0
    %2300 = vmatprep.subr.mxu0 0.0
    %2301 = vmatpush2.msra.mxu0 0.0
    %2302 = vmatprep.subr.mxu0 0.0
    %2303 = vmatpush2.msra.mxu0 0.0
    %2304 = vmatprep.subr.mxu0 0.0
    %2305 = vmatpush2.msra.mxu0 0.0
    %2306 = vmatprep.subr.mxu0 0.0
    %2307 = vmatpush2.msra.mxu0 0.0
    %2308 = vmatprep.subr.mxu0 0.0
    %2309 = vmatpush2.msra.mxu0 0.0
    %2310 = vmatprep.subr.mxu0 0.0
    %2311 = vmatpush2.msra.mxu0 0.0
    %2312 = vmatprep.subr.mxu0 0.0
    %2313 = vmatpush2.msra.mxu0 0.0
    %2314 = vmatprep.subr.mxu0 0.0
    %2315 = vmatpush2.msra.mxu0 0.0
    %2316 = vmatprep.mubr.f32.mxu0 0.0
    %2317 = vmatmul.mubr.f32.gmra.mxu0 %v2250
    %v2318 = vpop.f32.mrf.mxu0
    %v2319 = vadd.f32 0.0, %v2318
    %v2320 = vpop.f32.mrf.mxu0
    %2321 = vdwg.mxu0
    %v2323 = vsel %vm1033, %v2234, 0
    %2325 = vmatprep.subr.mxu0 0.0
    %2326 = vmatpush1.msra.mxu0 0.0
    %2327 = vmatprep.subr.mxu0 0.0
    %2328 = vmatpush1.msra.mxu0 0.0
    %2329 = vmatprep.subr.mxu0 0.0
    %2330 = vmatpush1.msra.mxu0 0.0
    %2331 = vmatprep.subr.mxu0 0.0
    %2332 = vmatpush1.msra.mxu0 0.0
    %2333 = vmatprep.subr.mxu0 0.0
    %2334 = vmatpush1.msra.mxu0 0.0
    %2335 = vmatprep.subr.mxu0 0.0
    %2336 = vmatpush1.msra.mxu0 0.0
    %2337 = vmatprep.subr.mxu0 0.0
    %2338 = vmatpush1.msra.mxu0 0.0
    %2339 = vmatprep.subr.mxu0 0.0
    %2340 = vmatpush1.msra.mxu0 0.0
    %2341 = vmatprep.subr.mxu0 0.0
    %2342 = vmatpush1.msra.mxu0 0.0
    %2343 = vmatprep.subr.mxu0 0.0
    %2344 = vmatpush1.msra.mxu0 0.0
    %2345 = vmatprep.subr.mxu0 0.0
    %2346 = vmatpush1.msra.mxu0 0.0
    %2347 = vmatprep.subr.mxu0 0.0
    %2348 = vmatpush1.msra.mxu0 0.0
    %2349 = vmatprep.subr.mxu0 0.0
    %2350 = vmatpush1.msra.mxu0 0.0
    %2351 = vmatprep.subr.mxu0 0.0
    %2352 = vmatpush1.msra.mxu0 0.0
    %2353 = vmatprep.subr.mxu0 0.0
    %2354 = vmatpush1.msra.mxu0 0.0
    %2355 = vmatprep.subr.mxu0 0.0
    %2356 = vmatpush1.msra.mxu0 %v1612
    %2357 = vmatprep.subr.mxu0 0.0
    %2358 = vmatpush2.msra.mxu0 0.0
    %2359 = vmatprep.subr.mxu0 0.0
    %2360 = vmatpush2.msra.mxu0 0.0
    %2361 = vmatprep.subr.mxu0 0.0
    %2362 = vmatpush2.msra.mxu0 0.0
    %2363 = vmatprep.subr.mxu0 0.0
    %2364 = vmatpush2.msra.mxu0 0.0
    %2365 = vmatprep.subr.mxu0 0.0
    %2366 = vmatpush2.msra.mxu0 0.0
    %2367 = vmatprep.subr.mxu0 0.0
    %2368 = vmatpush2.msra.mxu0 0.0
    %2369 = vmatprep.subr.mxu0 0.0
    %2370 = vmatpush2.msra.mxu0 0.0
    %2371 = vmatprep.subr.mxu0 0.0
    %2372 = vmatpush2.msra.mxu0 0.0
    %2373 = vmatprep.subr.mxu0 0.0
    %2374 = vmatpush2.msra.mxu0 0.0
    %2375 = vmatprep.subr.mxu0 0.0
    %2376 = vmatpush2.msra.mxu0 0.0
    %2377 = vmatprep.subr.mxu0 0.0
    %2378 = vmatpush2.msra.mxu0 0.0
    %2379 = vmatprep.subr.mxu0 0.0
    %2380 = vmatpush2.msra.mxu0 0.0
    %2381 = vmatprep.subr.mxu0 0.0
    %2382 = vmatpush2.msra.mxu0 0.0
    %2383 = vmatprep.subr.mxu0 0.0
    %2384 = vmatpush2.msra.mxu0 0.0
    %2385 = vmatprep.subr.mxu0 0.0
    %2386 = vmatpush2.msra.mxu0 0.0
    %2387 = vmatprep.subr.mxu0 0.0
    %2388 = vmatpush2.msra.mxu0 0.0
    %2389 = vmatprep.mubr.f32.mxu0 0.0
    %2390 = vmatmul.mubr.f32.gmra.mxu0 %v2323
    %v2391 = vpop.f32.mrf.mxu0
    %v2392 = vadd.f32 0.0, %v2391
    %v2393 = vpop.f32.mrf.mxu0
    %2394 = vdwg.mxu0
    %v2396 = vsel %vm585, %v2226, 0
    %2398 = vmatprep.subr.mxu0 0.0
    %2399 = vmatpush1.msra.mxu0 0.0
    %2400 = vmatprep.subr.mxu0 0.0
    %2401 = vmatpush1.msra.mxu0 0.0
    %2402 = vmatprep.subr.mxu0 0.0
    %2403 = vmatpush1.msra.mxu0 0.0
    %2404 = vmatprep.subr.mxu0 0.0
    %2405 = vmatpush1.msra.mxu0 0.0
    %2406 = vmatprep.subr.mxu0 0.0
    %2407 = vmatpush1.msra.mxu0 0.0
    %2408 = vmatprep.subr.mxu0 0.0
    %2409 = vmatpush1.msra.mxu0 0.0
    %2410 = vmatprep.subr.mxu0 0.0
    %2411 = vmatpush1.msra.mxu0 0.0
    %2412 = vmatprep.subr.mxu0 0.0
    %2413 = vmatpush1.msra.mxu0 0.0
    %2414 = vmatprep.subr.mxu0 0.0
    %2415 = vmatpush1.msra.mxu0 0.0
    %2416 = vmatprep.subr.mxu0 0.0
    %2417 = vmatpush1.msra.mxu0 0.0
    %2418 = vmatprep.subr.mxu0 0.0
    %2419 = vmatpush1.msra.mxu0 0.0
    %2420 = vmatprep.subr.mxu0 0.0
    %2421 = vmatpush1.msra.mxu0 0.0
    %2422 = vmatprep.subr.mxu0 0.0
    %2423 = vmatpush1.msra.mxu0 0.0
    %2424 = vmatprep.subr.mxu0 0.0
    %2425 = vmatpush1.msra.mxu0 0.0
    %2426 = vmatprep.subr.mxu0 0.0
    %2427 = vmatpush1.msra.mxu0 %v1772
    %2428 = vmatprep.subr.mxu0 0.0
    %2429 = vmatpush1.msra.mxu0 %v1767
    %2430 = vmatprep.subr.mxu0 0.0
    %2431 = vmatpush2.msra.mxu0 0.0
    %2432 = vmatprep.subr.mxu0 0.0
    %2433 = vmatpush2.msra.mxu0 0.0
    %2434 = vmatprep.subr.mxu0 0.0
    %2435 = vmatpush2.msra.mxu0 0.0
    %2436 = vmatprep.subr.mxu0 0.0
    %2437 = vmatpush2.msra.mxu0 0.0
    %2438 = vmatprep.subr.mxu0 0.0
    %2439 = vmatpush2.msra.mxu0 0.0
    %2440 = vmatprep.subr.mxu0 0.0
    %2441 = vmatpush2.msra.mxu0 0.0
    %2442 = vmatprep.subr.mxu0 0.0
    %2443 = vmatpush2.msra.mxu0 0.0
    %2444 = vmatprep.subr.mxu0 0.0
    %2445 = vmatpush2.msra.mxu0 0.0
    %2446 = vmatprep.subr.mxu0 0.0
    %2447 = vmatpush2.msra.mxu0 0.0
    %2448 = vmatprep.subr.mxu0 0.0
    %2449 = vmatpush2.msra.mxu0 0.0
    %2450 = vmatprep.subr.mxu0 0.0
    %2451 = vmatpush2.msra.mxu0 0.0
    %2452 = vmatprep.subr.mxu0 0.0
    %2453 = vmatpush2.msra.mxu0 0.0
    %2454 = vmatprep.subr.mxu0 0.0
    %2455 = vmatpush2.msra.mxu0 0.0
    %2456 = vmatprep.subr.mxu0 0.0
    %2457 = vmatpush2.msra.mxu0 0.0
    %2458 = vmatprep.subr.mxu0 0.0
    %2459 = vmatpush2.msra.mxu0 0.0
    %2460 = vmatprep.subr.mxu0 0.0
    %2461 = vmatpush2.msra.mxu0 0.0
    %2462 = vmatprep.mubr.f32.mxu0 0.0
    %2463 = vmatmul.mubr.f32.gmra.mxu0 %v2396
    %v2464 = vpop.f32.mrf.mxu0
    %v2465 = vadd.f32 %v2319, %v2464
    %v2466 = vpop.f32.mrf.mxu0
    %2467 = vdwg.mxu0
    %v2469 = vsel %vm585, %v2228, 0
    %2471 = vmatprep.subr.mxu0 0.0
    %2472 = vmatpush1.msra.mxu0 0.0
    %2473 = vmatprep.subr.mxu0 0.0
    %2474 = vmatpush1.msra.mxu0 0.0
    %2475 = vmatprep.subr.mxu0 0.0
    %2476 = vmatpush1.msra.mxu0 0.0
    %2477 = vmatprep.subr.mxu0 0.0
    %2478 = vmatpush1.msra.mxu0 0.0
    %2479 = vmatprep.subr.mxu0 0.0
    %2480 = vmatpush1.msra.mxu0 0.0
    %2481 = vmatprep.subr.mxu0 0.0
    %2482 = vmatpush1.msra.mxu0 0.0
    %2483 = vmatprep.subr.mxu0 0.0
    %2484 = vmatpush1.msra.mxu0 0.0
    %2485 = vmatprep.subr.mxu0 0.0
    %2486 = vmatpush1.msra.mxu0 0.0
    %2487 = vmatprep.subr.mxu0 0.0
    %2488 = vmatpush1.msra.mxu0 0.0
    %2489 = vmatprep.subr.mxu0 0.0
    %2490 = vmatpush1.msra.mxu0 0.0
    %2491 = vmatprep.subr.mxu0 0.0
    %2492 = vmatpush1.msra.mxu0 0.0
    %2493 = vmatprep.subr.mxu0 0.0
    %2494 = vmatpush1.msra.mxu0 0.0
    %2495 = vmatprep.subr.mxu0 0.0
    %2496 = vmatpush1.msra.mxu0 0.0
    %2497 = vmatprep.subr.mxu0 0.0
    %2498 = vmatpush1.msra.mxu0 0.0
    %2499 = vmatprep.subr.mxu0 0.0
    %2500 = vmatpush1.msra.mxu0 %v1782
    %2501 = vmatprep.subr.mxu0 0.0
    %2502 = vmatpush1.msra.mxu0 %v1777
    %2503 = vmatprep.subr.mxu0 0.0
    %2504 = vmatpush2.msra.mxu0 0.0
    %2505 = vmatprep.subr.mxu0 0.0
    %2506 = vmatpush2.msra.mxu0 0.0
    %2507 = vmatprep.subr.mxu0 0.0
    %2508 = vmatpush2.msra.mxu0 0.0
    %2509 = vmatprep.subr.mxu0 0.0
    %2510 = vmatpush2.msra.mxu0 0.0
    %2511 = vmatprep.subr.mxu0 0.0
    %2512 = vmatpush2.msra.mxu0 0.0
    %2513 = vmatprep.subr.mxu0 0.0
    %2514 = vmatpush2.msra.mxu0 0.0
    %2515 = vmatprep.subr.mxu0 0.0
    %2516 = vmatpush2.msra.mxu0 0.0
    %2517 = vmatprep.subr.mxu0 0.0
    %2518 = vmatpush2.msra.mxu0 0.0
    %2519 = vmatprep.subr.mxu0 0.0
    %2520 = vmatpush2.msra.mxu0 0.0
    %2521 = vmatprep.subr.mxu0 0.0
    %2522 = vmatpush2.msra.mxu0 0.0
    %2523 = vmatprep.subr.mxu0 0.0
    %2524 = vmatpush2.msra.mxu0 0.0
    %2525 = vmatprep.subr.mxu0 0.0
    %2526 = vmatpush2.msra.mxu0 0.0
    %2527 = vmatprep.subr.mxu0 0.0
    %2528 = vmatpush2.msra.mxu0 0.0
    %2529 = vmatprep.subr.mxu0 0.0
    %2530 = vmatpush2.msra.mxu0 0.0
    %2531 = vmatprep.subr.mxu0 0.0
    %2532 = vmatpush2.msra.mxu0 0.0
    %2533 = vmatprep.subr.mxu0 0.0
    %2534 = vmatpush2.msra.mxu0 0.0
    %2535 = vmatprep.mubr.f32.mxu0 0.0
    %2536 = vmatmul.mubr.f32.gmra.mxu0 %v2469
    %v2537 = vpop.f32.mrf.mxu0
    %v2538 = vadd.f32 %v2392, %v2537
    %v2539 = vpop.f32.mrf.mxu0
    %2540 = vdwg.mxu0
    %v2541 = vrcp.pop %v2247
    %v2542 = vrcp.pop %v2248
    %v2543 = vmul.f32 %v2465, %v2541
    %v2544 = vmul.f32 %v2538, %v2542
    %v2546 = vsel %vm585, %v2543, 0
    %v2549 = vsel %vm585, %v2544, 0
    %2551 = vmatprep.subr.mxu0 0.0
    %2552 = vmatpush1.msra.mxu0 0.0
    %2553 = vmatprep.subr.mxu0 0.0
    %2554 = vmatpush1.msra.mxu0 0.0
    %2555 = vmatprep.subr.mxu0 0.0
    %2556 = vmatpush1.msra.mxu0 0.0
    %2557 = vmatprep.subr.mxu0 0.0
    %2558 = vmatpush1.msra.mxu0 0.0
    %2559 = vmatprep.subr.mxu0 0.0
    %2560 = vmatpush1.msra.mxu0 0.0
    %2561 = vmatprep.subr.mxu0 0.0
    %2562 = vmatpush1.msra.mxu0 0.0
    %2563 = vmatprep.subr.mxu0 0.0
    %2564 = vmatpush1.msra.mxu0 0.0
    %2565 = vmatprep.subr.mxu0 0.0
    %2566 = vmatpush1.msra.mxu0 0.0
    %2567 = vmatprep.subr.mxu0 0.0
    %2568 = vmatpush1.msra.mxu0 0.0
    %2569 = vmatprep.subr.mxu0 0.0
    %2570 = vmatpush1.msra.mxu0 0.0
    %2571 = vmatprep.subr.mxu0 0.0
    %2572 = vmatpush1.msra.mxu0 0.0
    %2573 = vmatprep.subr.mxu0 0.0
    %2574 = vmatpush1.msra.mxu0 0.0
    %2575 = vmatprep.subr.mxu0 0.0
    %2576 = vmatpush1.msra.mxu0 0.0
    %2577 = vmatprep.subr.mxu0 0.0
    %2578 = vmatpush1.msra.mxu0 0.0
    %2579 = vmatprep.subr.mxu0 0.0
    %2580 = vmatpush1.msra.mxu0 %v1371
    %2581 = vmatprep.subr.mxu0 0.0
    %2582 = vmatpush1.msra.mxu0 %v1370
    %2583 = vmatprep.subr.mxu0 0.0
    %2584 = vmatpush2.msra.mxu0 0.0
    %2585 = vmatprep.subr.mxu0 0.0
    %2586 = vmatpush2.msra.mxu0 0.0
    %2587 = vmatprep.subr.mxu0 0.0
    %2588 = vmatpush2.msra.mxu0 0.0
    %2589 = vmatprep.subr.mxu0 0.0
    %2590 = vmatpush2.msra.mxu0 0.0
    %2591 = vmatprep.subr.mxu0 0.0
    %2592 = vmatpush2.msra.mxu0 0.0
    %2593 = vmatprep.subr.mxu0 0.0
    %2594 = vmatpush2.msra.mxu0 0.0
    %2595 = vmatprep.subr.mxu0 0.0
    %2596 = vmatpush2.msra.mxu0 0.0
    %2597 = vmatprep.subr.mxu0 0.0
    %2598 = vmatpush2.msra.mxu0 0.0
    %2599 = vmatprep.subr.mxu0 0.0
    %2600 = vmatpush2.msra.mxu0 0.0
    %2601 = vmatprep.subr.mxu0 0.0
    %2602 = vmatpush2.msra.mxu0 0.0
    %2603 = vmatprep.subr.mxu0 0.0
    %2604 = vmatpush2.msra.mxu0 0.0
    %2605 = vmatprep.subr.mxu0 0.0
    %2606 = vmatpush2.msra.mxu0 0.0
    %2607 = vmatprep.subr.mxu0 0.0
    %2608 = vmatpush2.msra.mxu0 0.0
    %2609 = vmatprep.subr.mxu0 0.0
    %2610 = vmatpush2.msra.mxu0 0.0
    %2611 = vmatprep.subr.mxu0 0.0
    %2612 = vmatpush2.msra.mxu0 0.0
    %2613 = vmatprep.subr.mxu0 0.0
    %2614 = vmatpush2.msra.mxu0 0.0
    %2615 = vmatprep.mubr.f32.mxu0 0.0
    %2616 = vmatmul.mubr.f32.gmra.mxu0 %v2546
    %v2617 = vpop.f32.mrf.mxu0
    %v2618 = vadd.f32 0.0, %v2617
    %v2619 = vpop.f32.mrf.mxu0
    %2620 = vmatprep.mubr.f32.mxu0 0.0
    %2621 = vmatmul.mubr.f32.gmra.mxu0 %v2549
    %v2622 = vpop.f32.mrf.mxu0
    %v2623 = vadd.f32 0.0, %v2622
    %v2624 = vpop.f32.mrf.mxu0
    %2625 = vdwg.mxu0
    %v2627 = vsel %vm585, %v1362, 0
    %v2630 = vsel %vm585, %v1363, 0
    %2632 = vmatprep.subr.mxu0 0.0
    %2633 = vmatpush1.msra.mxu0 0.0
    %2634 = vmatprep.subr.mxu0 0.0
    %2635 = vmatpush1.msra.mxu0 0.0
    %2636 = vmatprep.subr.mxu0 0.0
    %2637 = vmatpush1.msra.mxu0 0.0
    %2638 = vmatprep.subr.mxu0 0.0
    %2639 = vmatpush1.msra.mxu0 0.0
    %2640 = vmatprep.subr.mxu0 0.0
    %2641 = vmatpush1.msra.mxu0 0.0
    %2642 = vmatprep.subr.mxu0 0.0
    %2643 = vmatpush1.msra.mxu0 0.0
    %2644 = vmatprep.subr.mxu0 0.0
    %2645 = vmatpush1.msra.mxu0 0.0
    %2646 = vmatprep.subr.mxu0 0.0
    %2647 = vmatpush1.msra.mxu0 0.0
    %2648 = vmatprep.subr.mxu0 0.0
    %2649 = vmatpush1.msra.mxu0 0.0
    %2650 = vmatprep.subr.mxu0 0.0
    %2651 = vmatpush1.msra.mxu0 0.0
    %2652 = vmatprep.subr.mxu0 0.0
    %2653 = vmatpush1.msra.mxu0 0.0
    %2654 = vmatprep.subr.mxu0 0.0
    %2655 = vmatpush1.msra.mxu0 0.0
    %2656 = vmatprep.subr.mxu0 0.0
    %2657 = vmatpush1.msra.mxu0 0.0
    %2658 = vmatprep.subr.mxu0 0.0
    %2659 = vmatpush1.msra.mxu0 0.0
    %2660 = vmatprep.subr.mxu0 0.0
    %2661 = vmatpush1.msra.mxu0 %v153
    %2662 = vmatprep.subr.mxu0 0.0
    %2663 = vmatpush1.msra.mxu0 %v152
    %2664 = vmatprep.subr.mxu0 0.0
    %2665 = vmatpush2.msra.mxu0 0.0
    %2666 = vmatprep.subr.mxu0 0.0
    %2667 = vmatpush2.msra.mxu0 0.0
    %2668 = vmatprep.subr.mxu0 0.0
    %2669 = vmatpush2.msra.mxu0 0.0
    %2670 = vmatprep.subr.mxu0 0.0
    %2671 = vmatpush2.msra.mxu0 0.0
    %2672 = vmatprep.subr.mxu0 0.0
    %2673 = vmatpush2.msra.mxu0 0.0
    %2674 = vmatprep.subr.mxu0 0.0
    %2675 = vmatpush2.msra.mxu0 0.0
    %2676 = vmatprep.subr.mxu0 0.0
    %2677 = vmatpush2.msra.mxu0 0.0
    %2678 = vmatprep.subr.mxu0 0.0
    %2679 = vmatpush2.msra.mxu0 0.0
    %2680 = vmatprep.subr.mxu0 0.0
    %2681 = vmatpush2.msra.mxu0 0.0
    %2682 = vmatprep.subr.mxu0 0.0
    %2683 = vmatpush2.msra.mxu0 0.0
    %2684 = vmatprep.subr.mxu0 0.0
    %2685 = vmatpush2.msra.mxu0 0.0
    %2686 = vmatprep.subr.mxu0 0.0
    %2687 = vmatpush2.msra.mxu0 0.0
    %2688 = vmatprep.subr.mxu0 0.0
    %2689 = vmatpush2.msra.mxu0 0.0
    %2690 = vmatprep.subr.mxu0 0.0
    %2691 = vmatpush2.msra.mxu0 0.0
    %2692 = vmatprep.subr.mxu0 0.0
    %2693 = vmatpush2.msra.mxu0 0.0
    %2694 = vmatprep.subr.mxu0 0.0
    %2695 = vmatpush2.msra.mxu0 0.0
    %2696 = vmatprep.mubr.f32.mxu0 0.0
    %2697 = vmatmul.mubr.f32.gmra.mxu0 %v2627
    %v2698 = vpop.f32.mrf.mxu0
    %v2699 = vadd.f32 %v2618, %v2698
    %v2700 = vpop.f32.mrf.mxu0
    %2701 = vmatprep.mubr.f32.mxu0 0.0
    %2702 = vmatmul.mubr.f32.gmra.mxu0 %v2630
    %v2703 = vpop.f32.mrf.mxu0
    %v2704 = vadd.f32 %v2623, %v2703
    %v2705 = vpop.f32.mrf.mxu0
    %2706 = vdwg.mxu0
    %v2707 = vld [vmem:[%s4 + $0x20] sm:$0xff]
    %v2708 = vld [vmem:[%s4 + $0x28] sm:$0xff]
    %v2709 = vld [vmem:[%s4 + $0x60] sm:$0xff]
    %v2710 = vld [vmem:[%s4 + $0x68] sm:$0xff]
    %v2711 = vld [vmem:[%s4 + $0xa0] sm:$0xff]
    %v2712 = vld [vmem:[%s4 + $0xa8] sm:$0xff]
    %v2713 = vld [vmem:[%s5 + $0x20] sm:$0xff]
    %v2714 = vld [vmem:[%s5 + $0x28] sm:$0xff]
    %v2716 = vsel %vm30, %v2707, 0
    %v2719 = vsel %vm30, %v2708, 0
    %2721 = vmatprep.subr.mxu0 0.0
    %2722 = vmatpush1.xpose.msra.mxu0 0.0
    %2723 = vmatprep.subr.mxu0 0.0
    %2724 = vmatpush1.xpose.msra.mxu0 0.0
    %2725 = vmatprep.subr.mxu0 0.0
    %2726 = vmatpush1.xpose.msra.mxu0 0.0
    %2727 = vmatprep.subr.mxu0 0.0
    %2728 = vmatpush1.xpose.msra.mxu0 0.0
    %2729 = vmatprep.subr.mxu0 0.0
    %2730 = vmatpush1.xpose.msra.mxu0 0.0
    %2731 = vmatprep.subr.mxu0 0.0
    %2732 = vmatpush1.xpose.msra.mxu0 0.0
    %2733 = vmatprep.subr.mxu0 0.0
    %2734 = vmatpush1.xpose.msra.mxu0 0.0
    %2735 = vmatprep.subr.mxu0 0.0
    %2736 = vmatpush1.xpose.msra.mxu0 0.0
    %2737 = vmatprep.subr.mxu0 0.0
    %2738 = vmatpush1.xpose.msra.mxu0 0.0
    %2739 = vmatprep.subr.mxu0 0.0
    %2740 = vmatpush1.xpose.msra.mxu0 0.0
    %2741 = vmatprep.subr.mxu0 0.0
    %2742 = vmatpush1.xpose.msra.mxu0 0.0
    %2743 = vmatprep.subr.mxu0 0.0
    %2744 = vmatpush1.xpose.msra.mxu0 0.0
    %2745 = vmatprep.subr.mxu0 0.0
    %2746 = vmatpush1.xpose.msra.mxu0 0.0
    %2747 = vmatprep.subr.mxu0 0.0
    %2748 = vmatpush1.xpose.msra.mxu0 0.0
    %2749 = vmatprep.subr.mxu0 0.0
    %2750 = vmatpush1.xpose.msra.mxu0 %v2719
    %2751 = vmatprep.subr.mxu0 0.0
    %2752 = vmatpush1.xpose.msra.mxu0 %v2716
    %2753 = vmatprep.subr.mxu0 0.0
    %2754 = vmatpush2.xpose.msra.mxu0 0.0
    %2755 = vmatprep.subr.mxu0 0.0
    %2756 = vmatpush2.xpose.msra.mxu0 0.0
    %2757 = vmatprep.subr.mxu0 0.0
    %2758 = vmatpush2.xpose.msra.mxu0 0.0
    %2759 = vmatprep.subr.mxu0 0.0
    %2760 = vmatpush2.xpose.msra.mxu0 0.0
    %2761 = vmatprep.subr.mxu0 0.0
    %2762 = vmatpush2.xpose.msra.mxu0 0.0
    %2763 = vmatprep.subr.mxu0 0.0
    %2764 = vmatpush2.xpose.msra.mxu0 0.0
    %2765 = vmatprep.subr.mxu0 0.0
    %2766 = vmatpush2.xpose.msra.mxu0 0.0
    %2767 = vmatprep.subr.mxu0 0.0
    %2768 = vmatpush2.xpose.msra.mxu0 0.0
    %2769 = vmatprep.subr.mxu0 0.0
    %2770 = vmatpush2.xpose.msra.mxu0 0.0
    %2771 = vmatprep.subr.mxu0 0.0
    %2772 = vmatpush2.xpose.msra.mxu0 0.0
    %2773 = vmatprep.subr.mxu0 0.0
    %2774 = vmatpush2.xpose.msra.mxu0 0.0
    %2775 = vmatprep.subr.mxu0 0.0
    %2776 = vmatpush2.xpose.msra.mxu0 0.0
    %2777 = vmatprep.subr.mxu0 0.0
    %2778 = vmatpush2.xpose.msra.mxu0 0.0
    %2779 = vmatprep.subr.mxu0 0.0
    %2780 = vmatpush2.xpose.msra.mxu0 0.0
    %2781 = vmatprep.subr.mxu0 0.0
    %2782 = vmatpush2.xpose.msra.mxu0 0.0
    %2783 = vmatprep.subr.mxu0 0.0
    %2784 = vmatpush2.xpose.msra.mxu0 0.0
    %2785 = vmatprep.mubr.f32.mxu0 0.0
    %2786 = vmatmul.mubr.f32.gmra.mxu0 %v155
    %v2787 = vpop.f32.mrf.mxu0
    %v2788 = vadd.f32 0.0, %v2787
    %v2789 = vpop.f32.mrf.mxu0
    %2790 = vmatprep.mubr.f32.mxu0 0.0
    %2791 = vmatmul.mubr.f32.gmra.mxu0 %v158
    %v2792 = vpop.f32.mrf.mxu0
    %v2793 = vadd.f32 0.0, %v2792
    %v2794 = vpop.f32.mrf.mxu0
    %2795 = vdwg.mxu0
    %v2797 = vsel %vm30, %v2709, 0
    %v2800 = vsel %vm30, %v2710, 0
    %2802 = vmatprep.subr.mxu0 0.0
    %2803 = vmatpush1.xpose.msra.mxu0 0.0
    %2804 = vmatprep.subr.mxu0 0.0
    %2805 = vmatpush1.xpose.msra.mxu0 0.0
    %2806 = vmatprep.subr.mxu0 0.0
    %2807 = vmatpush1.xpose.msra.mxu0 0.0
    %2808 = vmatprep.subr.mxu0 0.0
    %2809 = vmatpush1.xpose.msra.mxu0 0.0
    %2810 = vmatprep.subr.mxu0 0.0
    %2811 = vmatpush1.xpose.msra.mxu0 0.0
    %2812 = vmatprep.subr.mxu0 0.0
    %2813 = vmatpush1.xpose.msra.mxu0 0.0
    %2814 = vmatprep.subr.mxu0 0.0
    %2815 = vmatpush1.xpose.msra.mxu0 0.0
    %2816 = vmatprep.subr.mxu0 0.0
    %2817 = vmatpush1.xpose.msra.mxu0 0.0
    %2818 = vmatprep.subr.mxu0 0.0
    %2819 = vmatpush1.xpose.msra.mxu0 0.0
    %2820 = vmatprep.subr.mxu0 0.0
    %2821 = vmatpush1.xpose.msra.mxu0 0.0
    %2822 = vmatprep.subr.mxu0 0.0
    %2823 = vmatpush1.xpose.msra.mxu0 0.0
    %2824 = vmatprep.subr.mxu0 0.0
    %2825 = vmatpush1.xpose.msra.mxu0 0.0
    %2826 = vmatprep.subr.mxu0 0.0
    %2827 = vmatpush1.xpose.msra.mxu0 0.0
    %2828 = vmatprep.subr.mxu0 0.0
    %2829 = vmatpush1.xpose.msra.mxu0 0.0
    %2830 = vmatprep.subr.mxu0 0.0
    %2831 = vmatpush1.xpose.msra.mxu0 %v2800
    %2832 = vmatprep.subr.mxu0 0.0
    %2833 = vmatpush1.xpose.msra.mxu0 %v2797
    %2834 = vmatprep.subr.mxu0 0.0
    %2835 = vmatpush2.xpose.msra.mxu0 0.0
    %2836 = vmatprep.subr.mxu0 0.0
    %2837 = vmatpush2.xpose.msra.mxu0 0.0
    %2838 = vmatprep.subr.mxu0 0.0
    %2839 = vmatpush2.xpose.msra.mxu0 0.0
    %2840 = vmatprep.subr.mxu0 0.0
    %2841 = vmatpush2.xpose.msra.mxu0 0.0
    %2842 = vmatprep.subr.mxu0 0.0
    %2843 = vmatpush2.xpose.msra.mxu0 0.0
    %2844 = vmatprep.subr.mxu0 0.0
    %2845 = vmatpush2.xpose.msra.mxu0 0.0
    %2846 = vmatprep.subr.mxu0 0.0
    %2847 = vmatpush2.xpose.msra.mxu0 0.0
    %2848 = vmatprep.subr.mxu0 0.0
    %2849 = vmatpush2.xpose.msra.mxu0 0.0
    %2850 = vmatprep.subr.mxu0 0.0
    %2851 = vmatpush2.xpose.msra.mxu0 0.0
    %2852 = vmatprep.subr.mxu0 0.0
    %2853 = vmatpush2.xpose.msra.mxu0 0.0
    %2854 = vmatprep.subr.mxu0 0.0
    %2855 = vmatpush2.xpose.msra.mxu0 0.0
    %2856 = vmatprep.subr.mxu0 0.0
    %2857 = vmatpush2.xpose.msra.mxu0 0.0
    %2858 = vmatprep.subr.mxu0 0.0
    %2859 = vmatpush2.xpose.msra.mxu0 0.0
    %2860 = vmatprep.subr.mxu0 0.0
    %2861 = vmatpush2.xpose.msra.mxu0 0.0
    %2862 = vmatprep.subr.mxu0 0.0
    %2863 = vmatpush2.xpose.msra.mxu0 0.0
    %2864 = vmatprep.subr.mxu0 0.0
    %2865 = vmatpush2.xpose.msra.mxu0 0.0
    %2866 = vmatprep.mubr.f32.mxu0 0.0
    %2867 = vmatmul.mubr.f32.gmra.mxu0 %v155
    %v2868 = vpop.f32.mrf.mxu0
    %v2869 = vadd.f32 0.0, %v2868
    %v2870 = vpop.f32.mrf.mxu0
    %2871 = vmatprep.mubr.f32.mxu0 0.0
    %2872 = vmatmul.mubr.f32.gmra.mxu0 %v158
    %v2873 = vpop.f32.mrf.mxu0
    %v2874 = vadd.f32 0.0, %v2873
    %v2875 = vpop.f32.mrf.mxu0
    %2876 = vdwg.mxu0
    %v2878 = vsel %vm30, %v2711, 0
    %v2881 = vsel %vm30, %v2712, 0
    %2883 = vmatprep.subr.mxu0 0.0
    %2884 = vmatpush1.xpose.msra.mxu0 0.0
    %2885 = vmatprep.subr.mxu0 0.0
    %2886 = vmatpush1.xpose.msra.mxu0 0.0
    %2887 = vmatprep.subr.mxu0 0.0
    %2888 = vmatpush1.xpose.msra.mxu0 0.0
    %2889 = vmatprep.subr.mxu0 0.0
    %2890 = vmatpush1.xpose.msra.mxu0 0.0
    %2891 = vmatprep.subr.mxu0 0.0
    %2892 = vmatpush1.xpose.msra.mxu0 0.0
    %2893 = vmatprep.subr.mxu0 0.0
    %2894 = vmatpush1.xpose.msra.mxu0 0.0
    %2895 = vmatprep.subr.mxu0 0.0
    %2896 = vmatpush1.xpose.msra.mxu0 0.0
    %2897 = vmatprep.subr.mxu0 0.0
    %2898 = vmatpush1.xpose.msra.mxu0 0.0
    %2899 = vmatprep.subr.mxu0 0.0
    %2900 = vmatpush1.xpose.msra.mxu0 0.0
    %2901 = vmatprep.subr.mxu0 0.0
    %2902 = vmatpush1.xpose.msra.mxu0 0.0
    %2903 = vmatprep.subr.mxu0 0.0
    %2904 = vmatpush1.xpose.msra.mxu0 0.0
    %2905 = vmatprep.subr.mxu0 0.0
    %2906 = vmatpush1.xpose.msra.mxu0 0.0
    %2907 = vmatprep.subr.mxu0 0.0
    %2908 = vmatpush1.xpose.msra.mxu0 0.0
    %2909 = vmatprep.subr.mxu0 0.0
    %2910 = vmatpush1.xpose.msra.mxu0 0.0
    %2911 = vmatprep.subr.mxu0 0.0
    %2912 = vmatpush1.xpose.msra.mxu0 %v2881
    %2913 = vmatprep.subr.mxu0 0.0
    %2914 = vmatpush1.xpose.msra.mxu0 %v2878
    %2915 = vmatprep.subr.mxu0 0.0
    %2916 = vmatpush2.xpose.msra.mxu0 0.0
    %2917 = vmatprep.subr.mxu0 0.0
    %2918 = vmatpush2.xpose.msra.mxu0 0.0
    %2919 = vmatprep.subr.mxu0 0.0
    %2920 = vmatpush2.xpose.msra.mxu0 0.0
    %2921 = vmatprep.subr.mxu0 0.0
    %2922 = vmatpush2.xpose.msra.mxu0 0.0
    %2923 = vmatprep.subr.mxu0 0.0
    %2924 = vmatpush2.xpose.msra.mxu0 0.0
    %2925 = vmatprep.subr.mxu0 0.0
    %2926 = vmatpush2.xpose.msra.mxu0 0.0
    %2927 = vmatprep.subr.mxu0 0.0
    %2928 = vmatpush2.xpose.msra.mxu0 0.0
    %2929 = vmatprep.subr.mxu0 0.0
    %2930 = vmatpush2.xpose.msra.mxu0 0.0
    %2931 = vmatprep.subr.mxu0 0.0
    %2932 = vmatpush2.xpose.msra.mxu0 0.0
    %2933 = vmatprep.subr.mxu0 0.0
    %2934 = vmatpush2.xpose.msra.mxu0 0.0
    %2935 = vmatprep.subr.mxu0 0.0
    %2936 = vmatpush2.xpose.msra.mxu0 0.0
    %2937 = vmatprep.subr.mxu0 0.0
    %2938 = vmatpush2.xpose.msra.mxu0 0.0
    %2939 = vmatprep.subr.mxu0 0.0
    %2940 = vmatpush2.xpose.msra.mxu0 0.0
    %2941 = vmatprep.subr.mxu0 0.0
    %2942 = vmatpush2.xpose.msra.mxu0 0.0
    %2943 = vmatprep.subr.mxu0 0.0
    %2944 = vmatpush2.xpose.msra.mxu0 0.0
    %2945 = vmatprep.subr.mxu0 0.0
    %2946 = vmatpush2.xpose.msra.mxu0 0.0
    %2947 = vmatprep.mubr.f32.mxu0 0.0
    %2948 = vmatmul.mubr.f32.gmra.mxu0 %v155
    %v2949 = vpop.f32.mrf.mxu0
    %v2950 = vadd.f32 0.0, %v2949
    %v2951 = vpop.f32.mrf.mxu0
    %2952 = vmatprep.mubr.f32.mxu0 0.0
    %2953 = vmatmul.mubr.f32.gmra.mxu0 %v158
    %v2954 = vpop.f32.mrf.mxu0
    %v2955 = vadd.f32 0.0, %v2954
    %v2956 = vpop.f32.mrf.mxu0
    %2957 = vdwg.mxu0
    %2958 = vmatprep.subr.mxu0 0.0
    %2959 = vmatpush1.xpose.msra.mxu0 0.0
    %2960 = vmatprep.subr.mxu0 0.0
    %2961 = vmatpush1.xpose.msra.mxu0 0.0
    %2962 = vmatprep.subr.mxu0 0.0
    %2963 = vmatpush1.xpose.msra.mxu0 0.0
    %2964 = vmatprep.subr.mxu0 0.0
    %2965 = vmatpush1.xpose.msra.mxu0 0.0
    %2966 = vmatprep.subr.mxu0 0.0
    %2967 = vmatpush1.xpose.msra.mxu0 0.0
    %2968 = vmatprep.subr.mxu0 0.0
    %2969 = vmatpush1.xpose.msra.mxu0 0.0
    %2970 = vmatprep.subr.mxu0 0.0
    %2971 = vmatpush1.xpose.msra.mxu0 0.0
    %2972 = vmatprep.subr.mxu0 0.0
    %2973 = vmatpush1.xpose.msra.mxu0 0.0
    %2974 = vmatprep.subr.mxu0 0.0
    %2975 = vmatpush1.xpose.msra.mxu0 0.0
    %2976 = vmatprep.subr.mxu0 0.0
    %2977 = vmatpush1.xpose.msra.mxu0 0.0
    %2978 = vmatprep.subr.mxu0 0.0
    %2979 = vmatpush1.xpose.msra.mxu0 0.0
    %2980 = vmatprep.subr.mxu0 0.0
    %2981 = vmatpush1.xpose.msra.mxu0 0.0
    %2982 = vmatprep.subr.mxu0 0.0
    %2983 = vmatpush1.xpose.msra.mxu0 0.0
    %2984 = vmatprep.subr.mxu0 0.0
    %2985 = vmatpush1.xpose.msra.mxu0 0.0
    %2986 = vmatprep.subr.mxu0 0.0
    %2987 = vmatpush1.xpose.msra.mxu0 %v2800
    %2988 = vmatprep.subr.mxu0 0.0
    %2989 = vmatpush1.xpose.msra.mxu0 %v2797
    %2990 = vmatprep.subr.mxu0 0.0
    %2991 = vmatpush2.xpose.msra.mxu0 0.0
    %2992 = vmatprep.subr.mxu0 0.0
    %2993 = vmatpush2.xpose.msra.mxu0 0.0
    %2994 = vmatprep.subr.mxu0 0.0
    %2995 = vmatpush2.xpose.msra.mxu0 0.0
    %2996 = vmatprep.subr.mxu0 0.0
    %2997 = vmatpush2.xpose.msra.mxu0 0.0
    %2998 = vmatprep.subr.mxu0 0.0
    %2999 = vmatpush2.xpose.msra.mxu0 0.0
    %3000 = vmatprep.subr.mxu0 0.0
    %3001 = vmatpush2.xpose.msra.mxu0 0.0
    %3002 = vmatprep.subr.mxu0 0.0
    %3003 = vmatpush2.xpose.msra.mxu0 0.0
    %3004 = vmatprep.subr.mxu0 0.0
    %3005 = vmatpush2.xpose.msra.mxu0 0.0
    %3006 = vmatprep.subr.mxu0 0.0
    %3007 = vmatpush2.xpose.msra.mxu0 0.0
    %3008 = vmatprep.subr.mxu0 0.0
    %3009 = vmatpush2.xpose.msra.mxu0 0.0
    %3010 = vmatprep.subr.mxu0 0.0
    %3011 = vmatpush2.xpose.msra.mxu0 0.0
    %3012 = vmatprep.subr.mxu0 0.0
    %3013 = vmatpush2.xpose.msra.mxu0 0.0
    %3014 = vmatprep.subr.mxu0 0.0
    %3015 = vmatpush2.xpose.msra.mxu0 0.0
    %3016 = vmatprep.subr.mxu0 0.0
    %3017 = vmatpush2.xpose.msra.mxu0 0.0
    %3018 = vmatprep.subr.mxu0 0.0
    %3019 = vmatpush2.xpose.msra.mxu0 0.0
    %3020 = vmatprep.subr.mxu0 0.0
    %3021 = vmatpush2.xpose.msra.mxu0 0.0
    %3022 = vmatprep.mubr.f32.mxu0 0.0
    %3023 = vmatmul.mubr.f32.gmra.mxu0 %v404
    %v3024 = vpop.f32.mrf.mxu0
    %v3025 = vadd.f32 0.0, %v3024
    %v3026 = vpop.f32.mrf.mxu0
    %3027 = vmatprep.mubr.f32.mxu0 0.0
    %3028 = vmatmul.mubr.f32.gmra.mxu0 %v407
    %v3029 = vpop.f32.mrf.mxu0
    %v3030 = vadd.f32 0.0, %v3029
    %v3031 = vpop.f32.mrf.mxu0
    %3032 = vmatprep.mubr.f32.mxu0 0.0
    %3033 = vmatmul.mubr.f32.gmra.mxu0 %v410
    %v3034 = vpop.f32.mrf.mxu0
    %v3035 = vadd.f32 0.0, %v3034
    %v3036 = vpop.f32.mrf.mxu0
    %3037 = vmatprep.mubr.f32.mxu0 0.0
    %3038 = vmatmul.mubr.f32.gmra.mxu0 %v413
    %v3039 = vpop.f32.mrf.mxu0
    %v3040 = vadd.f32 0.0, %v3039
    %v3041 = vpop.f32.mrf.mxu0
    %3042 = vdwg.mxu0
    %3043 = vmatprep.subr.mxu0 0.0
    %3044 = vmatpush1.xpose.msra.mxu0 0.0
    %3045 = vmatprep.subr.mxu0 0.0
    %3046 = vmatpush1.xpose.msra.mxu0 0.0
    %3047 = vmatprep.subr.mxu0 0.0
    %3048 = vmatpush1.xpose.msra.mxu0 0.0
    %3049 = vmatprep.subr.mxu0 0.0
    %3050 = vmatpush1.xpose.msra.mxu0 0.0
    %3051 = vmatprep.subr.mxu0 0.0
    %3052 = vmatpush1.xpose.msra.mxu0 0.0
    %3053 = vmatprep.subr.mxu0 0.0
    %3054 = vmatpush1.xpose.msra.mxu0 0.0
    %3055 = vmatprep.subr.mxu0 0.0
    %3056 = vmatpush1.xpose.msra.mxu0 0.0
    %3057 = vmatprep.subr.mxu0 0.0
    %3058 = vmatpush1.xpose.msra.mxu0 0.0
    %3059 = vmatprep.subr.mxu0 0.0
    %3060 = vmatpush1.xpose.msra.mxu0 0.0
    %3061 = vmatprep.subr.mxu0 0.0
    %3062 = vmatpush1.xpose.msra.mxu0 0.0
    %3063 = vmatprep.subr.mxu0 0.0
    %3064 = vmatpush1.xpose.msra.mxu0 0.0
    %3065 = vmatprep.subr.mxu0 0.0
    %3066 = vmatpush1.xpose.msra.mxu0 0.0
    %3067 = vmatprep.subr.mxu0 0.0
    %3068 = vmatpush1.xpose.msra.mxu0 0.0
    %3069 = vmatprep.subr.mxu0 0.0
    %3070 = vmatpush1.xpose.msra.mxu0 0.0
    %3071 = vmatprep.subr.mxu0 0.0
    %3072 = vmatpush1.xpose.msra.mxu0 %v2881
    %3073 = vmatprep.subr.mxu0 0.0
    %3074 = vmatpush1.xpose.msra.mxu0 %v2878
    %3075 = vmatprep.subr.mxu0 0.0
    %3076 = vmatpush2.xpose.msra.mxu0 0.0
    %3077 = vmatprep.subr.mxu0 0.0
    %3078 = vmatpush2.xpose.msra.mxu0 0.0
    %3079 = vmatprep.subr.mxu0 0.0
    %3080 = vmatpush2.xpose.msra.mxu0 0.0
    %3081 = vmatprep.subr.mxu0 0.0
    %3082 = vmatpush2.xpose.msra.mxu0 0.0
    %3083 = vmatprep.subr.mxu0 0.0
    %3084 = vmatpush2.xpose.msra.mxu0 0.0
    %3085 = vmatprep.subr.mxu0 0.0
    %3086 = vmatpush2.xpose.msra.mxu0 0.0
    %3087 = vmatprep.subr.mxu0 0.0
    %3088 = vmatpush2.xpose.msra.mxu0 0.0
    %3089 = vmatprep.subr.mxu0 0.0
    %3090 = vmatpush2.xpose.msra.mxu0 0.0
    %3091 = vmatprep.subr.mxu0 0.0
    %3092 = vmatpush2.xpose.msra.mxu0 0.0
    %3093 = vmatprep.subr.mxu0 0.0
    %3094 = vmatpush2.xpose.msra.mxu0 0.0
    %3095 = vmatprep.subr.mxu0 0.0
    %3096 = vmatpush2.xpose.msra.mxu0 0.0
    %3097 = vmatprep.subr.mxu0 0.0
    %3098 = vmatpush2.xpose.msra.mxu0 0.0
    %3099 = vmatprep.subr.mxu0 0.0
    %3100 = vmatpush2.xpose.msra.mxu0 0.0
    %3101 = vmatprep.subr.mxu0 0.0
    %3102 = vmatpush2.xpose.msra.mxu0 0.0
    %3103 = vmatprep.subr.mxu0 0.0
    %3104 = vmatpush2.xpose.msra.mxu0 0.0
    %3105 = vmatprep.subr.mxu0 0.0
    %3106 = vmatpush2.xpose.msra.mxu0 0.0
    %3107 = vmatprep.mubr.f32.mxu0 0.0
    %3108 = vmatmul.mubr.f32.gmra.mxu0 %v404
    %v3109 = vpop.f32.mrf.mxu0
    %v3110 = vadd.f32 0.0, %v3109
    %v3111 = vpop.f32.mrf.mxu0
    %3112 = vmatprep.mubr.f32.mxu0 0.0
    %3113 = vmatmul.mubr.f32.gmra.mxu0 %v407
    %v3114 = vpop.f32.mrf.mxu0
    %v3115 = vadd.f32 0.0, %v3114
    %v3116 = vpop.f32.mrf.mxu0
    %3117 = vmatprep.mubr.f32.mxu0 0.0
    %3118 = vmatmul.mubr.f32.gmra.mxu0 %v410
    %v3119 = vpop.f32.mrf.mxu0
    %v3120 = vadd.f32 0.0, %v3119
    %v3121 = vpop.f32.mrf.mxu0
    %3122 = vmatprep.mubr.f32.mxu0 0.0
    %3123 = vmatmul.mubr.f32.gmra.mxu0 %v413
    %v3124 = vpop.f32.mrf.mxu0
    %v3125 = vadd.f32 0.0, %v3124
    %v3126 = vpop.f32.mrf.mxu0
    %3127 = vdwg.mxu0
    %v3128 = vsel %vm585, %v2788, 0.0
    %3129 = vadd.xlane.f32.xlu0 %v3128
    %v3130 = vpop.xlane.xlu0 %3129
    %v3131 = vsel %vm585, %v2793, 0.0
    %3132 = vadd.xlane.f32.xlu0 %v3131
    %v3133 = vpop.xlane.xlu0 %3132
    %v3134 = vmul.f32 %v3130, %v592
    %v3135 = vmul.f32 %v3133, %v592
    %v3136 = vsub.f32 %v2788, %v3134
    %v3137 = vsub.f32 %v2793, %v3135
    %v3138 = vmul.f32 %v3136, %v3136
    %v3139 = vmul.f32 %v3137, %v3137
    %v3140 = vsel %vm585, %v3138, 0.0
    %3141 = vadd.xlane.f32.xlu0 %v3140
    %v3142 = vpop.xlane.xlu0 %3141
    %v3143 = vsel %vm585, %v3139, 0.0
    %3144 = vadd.xlane.f32.xlu0 %v3143
    %v3145 = vpop.xlane.xlu0 %3144
    %v3146 = vmul.f32 %v3142, %v592
    %v3147 = vmul.f32 %v3145, %v592
    %v3148 = vadd.f32 %v3146, 1e-05
    %v3149 = vadd.f32 %v3147, 1e-05
    %v3150 = vrsqrt.pop %v3148
    %v3151 = vrsqrt.pop %v3149
    %v3152 = vmul.f32 %v3136, %v3150
    %v3153 = vmul.f32 %v3137, %v3151
    %v3154 = vmul.f32 %v3152, %v616
    %v3155 = vmul.f32 %v3153, %v616
    %v3156 = vadd.f32 %v3154, %v622
    %v3157 = vadd.f32 %v3155, %v622
    %v3158 = vsel %vm585, %v2869, 0.0
    %3159 = vadd.xlane.f32.xlu0 %v3158
    %v3160 = vpop.xlane.xlu0 %3159
    %v3161 = vsel %vm585, %v2874, 0.0
    %3162 = vadd.xlane.f32.xlu0 %v3161
    %v3163 = vpop.xlane.xlu0 %3162
    %v3164 = vmul.f32 %v3160, %v592
    %v3165 = vmul.f32 %v3163, %v592
    %v3166 = vsub.f32 %v2869, %v3164
    %v3167 = vsub.f32 %v2874, %v3165
    %v3168 = vmul.f32 %v3166, %v3166
    %v3169 = vmul.f32 %v3167, %v3167
    %v3170 = vsel %vm585, %v3168, 0.0
    %3171 = vadd.xlane.f32.xlu0 %v3170
    %v3172 = vpop.xlane.xlu0 %3171
    %v3173 = vsel %vm585, %v3169, 0.0
    %3174 = vadd.xlane.f32.xlu0 %v3173
    %v3175 = vpop.xlane.xlu0 %3174
    %v3176 = vmul.f32 %v3172, %v592
    %v3177 = vmul.f32 %v3175, %v592
    %v3178 = vadd.f32 %v3176, 1e-05
    %v3179 = vadd.f32 %v3177, 1e-05
    %v3180 = vrsqrt.pop %v3178
    %v3181 = vrsqrt.pop %v3179
    %v3182 = vmul.f32 %v3166, %v3180
    %v3183 = vmul.f32 %v3167, %v3181
    %v3184 = vmul.f32 %v3182, %v654
    %v3185 = vmul.f32 %v3183, %v654
    %v3186 = vadd.f32 %v3184, %v660
    %v3187 = vadd.f32 %v3185, %v660
    %v3188 = vsel %vm585, %v3025, 0.0
    %3189 = vadd.xlane.f32.xlu0 %v3188
    %v3190 = vpop.xlane.xlu0 %3189
    %v3191 = vsel %vm585, %v3030, 0.0
    %3192 = vadd.xlane.f32.xlu0 %v3191
    %v3193 = vpop.xlane.xlu0 %3192
    %v3194 = vsel %vm585, %v3035, 0.0
    %3195 = vadd.xlane.f32.xlu0 %v3194
    %v3196 = vpop.xlane.xlu0 %3195
    %v3197 = vsel %vm585, %v3040, 0.0
    %3198 = vadd.xlane.f32.xlu0 %v3197
    %v3199 = vpop.xlane.xlu0 %3198
    %v3200 = vmul.f32 %v3190, %v592
    %v3201 = vmul.f32 %v3193, %v592
    %v3202 = vmul.f32 %v3196, %v592
    %v3203 = vmul.f32 %v3199, %v592
    %v3204 = vsub.f32 %v3025, %v3200
    %v3205 = vsub.f32 %v3030, %v3201
    %v3206 = vsub.f32 %v3035, %v3202
    %v3207 = vsub.f32 %v3040, %v3203
    %v3208 = vmul.f32 %v3204, %v3204
    %v3209 = vmul.f32 %v3205, %v3205
    %v3210 = vmul.f32 %v3206, %v3206
    %v3211 = vmul.f32 %v3207, %v3207
    %v3212 = vsel %vm585, %v3208, 0.0
    %3213 = vadd.xlane.f32.xlu0 %v3212
    %v3214 = vpop.xlane.xlu0 %3213
    %v3215 = vsel %vm585, %v3209, 0.0
    %3216 = vadd.xlane.f32.xlu0 %v3215
    %v3217 = vpop.xlane.xlu0 %3216
    %v3218 = vsel %vm585, %v3210, 0.0
    %3219 = vadd.xlane.f32.xlu0 %v3218
    %v3220 = vpop.xlane.xlu0 %3219
    %v3221 = vsel %vm585, %v3211, 0.0
    %3222 = vadd.xlane.f32.xlu0 %v3221
    %v3223 = vpop.xlane.xlu0 %3222
    %v3224 = vmul.f32 %v3214, %v592
    %v3225 = vmul.f32 %v3217, %v592
    %v3226 = vmul.f32 %v3220, %v592
    %v3227 = vmul.f32 %v3223, %v592
    %v3228 = vadd.f32 %v3224, 1e-05
    %v3229 = vadd.f32 %v3225, 1e-05
    %v3230 = vadd.f32 %v3226, 1e-05
    %v3231 = vadd.f32 %v3227, 1e-05
    %v3232 = vrsqrt.pop %v3228
    %v3233 = vrsqrt.pop %v3229
    %v3234 = vrsqrt.pop %v3230
    %v3235 = vrsqrt.pop %v3231
    %v3236 = vmul.f32 %v3204, %v3232
    %v3237 = vmul.f32 %v3205, %v3233
    %v3238 = vmul.f32 %v3206, %v3234
    %v3239 = vmul.f32 %v3207, %v3235
    %v3240 = vmul.f32 %v3236, %v654
    %v3241 = vmul.f32 %v3237, %v654
    %v3242 = vmul.f32 %v3238, %v654
    %v3243 = vmul.f32 %v3239, %v654
    %v3244 = vadd.f32 %v3240, %v660
    %v3245 = vadd.f32 %v3241, %v660
    %v3246 = vadd.f32 %v3242, %v660
    %v3247 = vadd.f32 %v3243, %v660
    %v3249 = vsel %vm585, %v3156, 0
    %v3252 = vsel %vm585, %v3244, 0
    %v3255 = vsel %vm585, %v3245, 0
    %3257 = vmatprep.subr.mxu0 0.0
    %3258 = vmatpush1.xpose.msra.mxu0 0.0
    %3259 = vmatprep.subr.mxu0 0.0
    %3260 = vmatpush1.xpose.msra.mxu0 0.0
    %3261 = vmatprep.subr.mxu0 0.0
    %3262 = vmatpush1.xpose.msra.mxu0 0.0
    %3263 = vmatprep.subr.mxu0 0.0
    %3264 = vmatpush1.xpose.msra.mxu0 0.0
    %3265 = vmatprep.subr.mxu0 0.0
    %3266 = vmatpush1.xpose.msra.mxu0 0.0
    %3267 = vmatprep.subr.mxu0 0.0
    %3268 = vmatpush1.xpose.msra.mxu0 0.0
    %3269 = vmatprep.subr.mxu0 0.0
    %3270 = vmatpush1.xpose.msra.mxu0 0.0
    %3271 = vmatprep.subr.mxu0 0.0
    %3272 = vmatpush1.xpose.msra.mxu0 0.0
    %3273 = vmatprep.subr.mxu0 0.0
    %3274 = vmatpush1.xpose.msra.mxu0 0.0
    %3275 = vmatprep.subr.mxu0 0.0
    %3276 = vmatpush1.xpose.msra.mxu0 0.0
    %3277 = vmatprep.subr.mxu0 0.0
    %3278 = vmatpush1.xpose.msra.mxu0 0.0
    %3279 = vmatprep.subr.mxu0 0.0
    %3280 = vmatpush1.xpose.msra.mxu0 0.0
    %3281 = vmatprep.subr.mxu0 0.0
    %3282 = vmatpush1.xpose.msra.mxu0 0.0
    %3283 = vmatprep.subr.mxu0 0.0
    %3284 = vmatpush1.xpose.msra.mxu0 0.0
    %3285 = vmatprep.subr.mxu0 0.0
    %3286 = vmatpush1.xpose.msra.mxu0 %v3255
    %3287 = vmatprep.subr.mxu0 0.0
    %3288 = vmatpush1.xpose.msra.mxu0 %v3252
    %3289 = vmatprep.subr.mxu0 0.0
    %3290 = vmatpush2.xpose.msra.mxu0 0.0
    %3291 = vmatprep.subr.mxu0 0.0
    %3292 = vmatpush2.xpose.msra.mxu0 0.0
    %3293 = vmatprep.subr.mxu0 0.0
    %3294 = vmatpush2.xpose.msra.mxu0 0.0
    %3295 = vmatprep.subr.mxu0 0.0
    %3296 = vmatpush2.xpose.msra.mxu0 0.0
    %3297 = vmatprep.subr.mxu0 0.0
    %3298 = vmatpush2.xpose.msra.mxu0 0.0
    %3299 = vmatprep.subr.mxu0 0.0
    %3300 = vmatpush2.xpose.msra.mxu0 0.0
    %3301 = vmatprep.subr.mxu0 0.0
    %3302 = vmatpush2.xpose.msra.mxu0 0.0
    %3303 = vmatprep.subr.mxu0 0.0
    %3304 = vmatpush2.xpose.msra.mxu0 0.0
    %3305 = vmatprep.subr.mxu0 0.0
    %3306 = vmatpush2.xpose.msra.mxu0 0.0
    %3307 = vmatprep.subr.mxu0 0.0
    %3308 = vmatpush2.xpose.msra.mxu0 0.0
    %3309 = vmatprep.subr.mxu0 0.0
    %3310 = vmatpush2.xpose.msra.mxu0 0.0
    %3311 = vmatprep.subr.mxu0 0.0
    %3312 = vmatpush2.xpose.msra.mxu0 0.0
    %3313 = vmatprep.subr.mxu0 0.0
    %3314 = vmatpush2.xpose.msra.mxu0 0.0
    %3315 = vmatprep.subr.mxu0 0.0
    %3316 = vmatpush2.xpose.msra.mxu0 0.0
    %3317 = vmatprep.subr.mxu0 0.0
    %3318 = vmatpush2.xpose.msra.mxu0 0.0
    %3319 = vmatprep.subr.mxu0 0.0
    %3320 = vmatpush2.xpose.msra.mxu0 0.0
    %3321 = vmatprep.mubr.f32.mxu0 0.0
    %3322 = vmatmul.mubr.f32.gmra.mxu0 %v3249
    %v3323 = vpop.f32.mrf.mxu0
    %v3324 = vadd.f32 0.0, %v3323
    %v3325 = vpop.f32.mrf.mxu0
    %3326 = vdwg.mxu0
    %v3328 = vsel %vm585, %v3157, 0
    %v3331 = vsel %vm585, %v3246, 0
    %v3334 = vsel %vm585, %v3247, 0
    %3336 = vmatprep.subr.mxu0 0.0
    %3337 = vmatpush1.xpose.msra.mxu0 0.0
    %3338 = vmatprep.subr.mxu0 0.0
    %3339 = vmatpush1.xpose.msra.mxu0 0.0
    %3340 = vmatprep.subr.mxu0 0.0
    %3341 = vmatpush1.xpose.msra.mxu0 0.0
    %3342 = vmatprep.subr.mxu0 0.0
    %3343 = vmatpush1.xpose.msra.mxu0 0.0
    %3344 = vmatprep.subr.mxu0 0.0
    %3345 = vmatpush1.xpose.msra.mxu0 0.0
    %3346 = vmatprep.subr.mxu0 0.0
    %3347 = vmatpush1.xpose.msra.mxu0 0.0
    %3348 = vmatprep.subr.mxu0 0.0
    %3349 = vmatpush1.xpose.msra.mxu0 0.0
    %3350 = vmatprep.subr.mxu0 0.0
    %3351 = vmatpush1.xpose.msra.mxu0 0.0
    %3352 = vmatprep.subr.mxu0 0.0
    %3353 = vmatpush1.xpose.msra.mxu0 0.0
    %3354 = vmatprep.subr.mxu0 0.0
    %3355 = vmatpush1.xpose.msra.mxu0 0.0
    %3356 = vmatprep.subr.mxu0 0.0
    %3357 = vmatpush1.xpose.msra.mxu0 0.0
    %3358 = vmatprep.subr.mxu0 0.0
    %3359 = vmatpush1.xpose.msra.mxu0 0.0
    %3360 = vmatprep.subr.mxu0 0.0
    %3361 = vmatpush1.xpose.msra.mxu0 0.0
    %3362 = vmatprep.subr.mxu0 0.0
    %3363 = vmatpush1.xpose.msra.mxu0 0.0
    %3364 = vmatprep.subr.mxu0 0.0
    %3365 = vmatpush1.xpose.msra.mxu0 %v3334
    %3366 = vmatprep.subr.mxu0 0.0
    %3367 = vmatpush1.xpose.msra.mxu0 %v3331
    %3368 = vmatprep.subr.mxu0 0.0
    %3369 = vmatpush2.xpose.msra.mxu0 0.0
    %3370 = vmatprep.subr.mxu0 0.0
    %3371 = vmatpush2.xpose.msra.mxu0 0.0
    %3372 = vmatprep.subr.mxu0 0.0
    %3373 = vmatpush2.xpose.msra.mxu0 0.0
    %3374 = vmatprep.subr.mxu0 0.0
    %3375 = vmatpush2.xpose.msra.mxu0 0.0
    %3376 = vmatprep.subr.mxu0 0.0
    %3377 = vmatpush2.xpose.msra.mxu0 0.0
    %3378 = vmatprep.subr.mxu0 0.0
    %3379 = vmatpush2.xpose.msra.mxu0 0.0
    %3380 = vmatprep.subr.mxu0 0.0
    %3381 = vmatpush2.xpose.msra.mxu0 0.0
    %3382 = vmatprep.subr.mxu0 0.0
    %3383 = vmatpush2.xpose.msra.mxu0 0.0
    %3384 = vmatprep.subr.mxu0 0.0
    %3385 = vmatpush2.xpose.msra.mxu0 0.0
    %3386 = vmatprep.subr.mxu0 0.0
    %3387 = vmatpush2.xpose.msra.mxu0 0.0
    %3388 = vmatprep.subr.mxu0 0.0
    %3389 = vmatpush2.xpose.msra.mxu0 0.0
    %3390 = vmatprep.subr.mxu0 0.0
    %3391 = vmatpush2.xpose.msra.mxu0 0.0
    %3392 = vmatprep.subr.mxu0 0.0
    %3393 = vmatpush2.xpose.msra.mxu0 0.0
    %3394 = vmatprep.subr.mxu0 0.0
    %3395 = vmatpush2.xpose.msra.mxu0 0.0
    %3396 = vmatprep.subr.mxu0 0.0
    %3397 = vmatpush2.xpose.msra.mxu0 0.0
    %3398 = vmatprep.subr.mxu0 0.0
    %3399 = vmatpush2.xpose.msra.mxu0 0.0
    %3400 = vmatprep.mubr.f32.mxu0 0.0
    %3401 = vmatmul.mubr.f32.gmra.mxu0 %v3328
    %v3402 = vpop.f32.mrf.mxu0
    %v3403 = vadd.f32 0.0, %v3402
    %v3404 = vpop.f32.mrf.mxu0
    %3405 = vdwg.mxu0
    %v3407 = vsel %vm585, %v3186, 0
    %3409 = vmatprep.subr.mxu0 0.0
    %3410 = vmatpush1.xpose.msra.mxu0 0.0
    %3411 = vmatprep.subr.mxu0 0.0
    %3412 = vmatpush1.xpose.msra.mxu0 0.0
    %3413 = vmatprep.subr.mxu0 0.0
    %3414 = vmatpush1.xpose.msra.mxu0 0.0
    %3415 = vmatprep.subr.mxu0 0.0
    %3416 = vmatpush1.xpose.msra.mxu0 0.0
    %3417 = vmatprep.subr.mxu0 0.0
    %3418 = vmatpush1.xpose.msra.mxu0 0.0
    %3419 = vmatprep.subr.mxu0 0.0
    %3420 = vmatpush1.xpose.msra.mxu0 0.0
    %3421 = vmatprep.subr.mxu0 0.0
    %3422 = vmatpush1.xpose.msra.mxu0 0.0
    %3423 = vmatprep.subr.mxu0 0.0
    %3424 = vmatpush1.xpose.msra.mxu0 0.0
    %3425 = vmatprep.subr.mxu0 0.0
    %3426 = vmatpush1.xpose.msra.mxu0 0.0
    %3427 = vmatprep.subr.mxu0 0.0
    %3428 = vmatpush1.xpose.msra.mxu0 0.0
    %3429 = vmatprep.subr.mxu0 0.0
    %3430 = vmatpush1.xpose.msra.mxu0 0.0
    %3431 = vmatprep.subr.mxu0 0.0
    %3432 = vmatpush1.xpose.msra.mxu0 0.0
    %3433 = vmatprep.subr.mxu0 0.0
    %3434 = vmatpush1.xpose.msra.mxu0 0.0
    %3435 = vmatprep.subr.mxu0 0.0
    %3436 = vmatpush1.xpose.msra.mxu0 0.0
    %3437 = vmatprep.subr.mxu0 0.0
    %3438 = vmatpush1.xpose.msra.mxu0 0.0
    %3439 = vmatprep.subr.mxu0 0.0
    %3440 = vmatpush1.xpose.msra.mxu0 %v3407
    %3441 = vmatprep.subr.mxu0 0.0
    %3442 = vmatpush2.xpose.msra.mxu0 0.0
    %3443 = vmatprep.subr.mxu0 0.0
    %3444 = vmatpush2.xpose.msra.mxu0 0.0
    %3445 = vmatprep.subr.mxu0 0.0
    %3446 = vmatpush2.xpose.msra.mxu0 0.0
    %3447 = vmatprep.subr.mxu0 0.0
    %3448 = vmatpush2.xpose.msra.mxu0 0.0
    %3449 = vmatprep.subr.mxu0 0.0
    %3450 = vmatpush2.xpose.msra.mxu0 0.0
    %3451 = vmatprep.subr.mxu0 0.0
    %3452 = vmatpush2.xpose.msra.mxu0 0.0
    %3453 = vmatprep.subr.mxu0 0.0
    %3454 = vmatpush2.xpose.msra.mxu0 0.0
    %3455 = vmatprep.subr.mxu0 0.0
    %3456 = vmatpush2.xpose.msra.mxu0 0.0
    %3457 = vmatprep.subr.mxu0 0.0
    %3458 = vmatpush2.xpose.msra.mxu0 0.0
    %3459 = vmatprep.subr.mxu0 0.0
    %3460 = vmatpush2.xpose.msra.mxu0 0.0
    %3461 = vmatprep.subr.mxu0 0.0
    %3462 = vmatpush2.xpose.msra.mxu0 0.0
    %3463 = vmatprep.subr.mxu0 0.0
    %3464 = vmatpush2.xpose.msra.mxu0 0.0
    %3465 = vmatprep.subr.mxu0 0.0
    %3466 = vmatpush2.xpose.msra.mxu0 0.0
    %3467 = vmatprep.subr.mxu0 0.0
    %3468 = vmatpush2.xpose.msra.mxu0 0.0
    %3469 = vmatprep.subr.mxu0 0.0
    %3470 = vmatpush2.xpose.msra.mxu0 0.0
    %3471 = vmatprep.subr.mxu0 0.0
    %3472 = vmatpush2.xpose.msra.mxu0 0.0
    %3473 = vmatprep.mubr.f32.mxu0 0.0
    %3474 = vmatmul.mubr.f32.gmra.mxu0 %v3249
    %v3475 = vpop.f32.mrf.mxu0
    %v3476 = vadd.f32 0.0, %v3475
    %v3477 = vpop.f32.mrf.mxu0
    %3478 = vdwg.mxu0
    %v3480 = vsel %vm585, %v3187, 0
    %3482 = vmatprep.subr.mxu0 0.0
    %3483 = vmatpush1.xpose.msra.mxu0 0.0
    %3484 = vmatprep.subr.mxu0 0.0
    %3485 = vmatpush1.xpose.msra.mxu0 0.0
    %3486 = vmatprep.subr.mxu0 0.0
    %3487 = vmatpush1.xpose.msra.mxu0 0.0
    %3488 = vmatprep.subr.mxu0 0.0
    %3489 = vmatpush1.xpose.msra.mxu0 0.0
    %3490 = vmatprep.subr.mxu0 0.0
    %3491 = vmatpush1.xpose.msra.mxu0 0.0
    %3492 = vmatprep.subr.mxu0 0.0
    %3493 = vmatpush1.xpose.msra.mxu0 0.0
    %3494 = vmatprep.subr.mxu0 0.0
    %3495 = vmatpush1.xpose.msra.mxu0 0.0
    %3496 = vmatprep.subr.mxu0 0.0
    %3497 = vmatpush1.xpose.msra.mxu0 0.0
    %3498 = vmatprep.subr.mxu0 0.0
    %3499 = vmatpush1.xpose.msra.mxu0 0.0
    %3500 = vmatprep.subr.mxu0 0.0
    %3501 = vmatpush1.xpose.msra.mxu0 0.0
    %3502 = vmatprep.subr.mxu0 0.0
    %3503 = vmatpush1.xpose.msra.mxu0 0.0
    %3504 = vmatprep.subr.mxu0 0.0
    %3505 = vmatpush1.xpose.msra.mxu0 0.0
    %3506 = vmatprep.subr.mxu0 0.0
    %3507 = vmatpush1.xpose.msra.mxu0 0.0
    %3508 = vmatprep.subr.mxu0 0.0
    %3509 = vmatpush1.xpose.msra.mxu0 0.0
    %3510 = vmatprep.subr.mxu0 0.0
    %3511 = vmatpush1.xpose.msra.mxu0 0.0
    %3512 = vmatprep.subr.mxu0 0.0
    %3513 = vmatpush1.xpose.msra.mxu0 %v3480
    %3514 = vmatprep.subr.mxu0 0.0
    %3515 = vmatpush2.xpose.msra.mxu0 0.0
    %3516 = vmatprep.subr.mxu0 0.0
    %3517 = vmatpush2.xpose.msra.mxu0 0.0
    %3518 = vmatprep.subr.mxu0 0.0
    %3519 = vmatpush2.xpose.msra.mxu0 0.0
    %3520 = vmatprep.subr.mxu0 0.0
    %3521 = vmatpush2.xpose.msra.mxu0 0.0
    %3522 = vmatprep.subr.mxu0 0.0
    %3523 = vmatpush2.xpose.msra.mxu0 0.0
    %3524 = vmatprep.subr.mxu0 0.0
    %3525 = vmatpush2.xpose.msra.mxu0 0.0
    %3526 = vmatprep.subr.mxu0 0.0
    %3527 = vmatpush2.xpose.msra.mxu0 0.0
    %3528 = vmatprep.subr.mxu0 0.0
    %3529 = vmatpush2.xpose.msra.mxu0 0.0
    %3530 = vmatprep.subr.mxu0 0.0
    %3531 = vmatpush2.xpose.msra.mxu0 0.0
    %3532 = vmatprep.subr.mxu0 0.0
    %3533 = vmatpush2.xpose.msra.mxu0 0.0
    %3534 = vmatprep.subr.mxu0 0.0
    %3535 = vmatpush2.xpose.msra.mxu0 0.0
    %3536 = vmatprep.subr.mxu0 0.0
    %3537 = vmatpush2.xpose.msra.mxu0 0.0
    %3538 = vmatprep.subr.mxu0 0.0
    %3539 = vmatpush2.xpose.msra.mxu0 0.0
    %3540 = vmatprep.subr.mxu0 0.0
    %3541 = vmatpush2.xpose.msra.mxu0 0.0
    %3542 = vmatprep.subr.mxu0 0.0
    %3543 = vmatpush2.xpose.msra.mxu0 0.0
    %3544 = vmatprep.subr.mxu0 0.0
    %3545 = vmatpush2.xpose.msra.mxu0 0.0
    %3546 = vmatprep.mubr.f32.mxu0 0.0
    %3547 = vmatmul.mubr.f32.gmra.mxu0 %v3328
    %v3548 = vpop.f32.mrf.mxu0
    %v3549 = vadd.f32 0.0, %v3548
    %v3550 = vpop.f32.mrf.mxu0
    %3551 = vdwg.mxu0
    %v3552 = vsel %vm585, %v3324, -inf
    %3553 = vmax.xlane.f32.xlu0 %v3552
    %v3554 = vpop.xlane.xlu0 %3553
    %v3555 = vsel %vm585, %v3403, -inf
    %3556 = vmax.xlane.f32.xlu0 %v3555
    %v3557 = vpop.xlane.xlu0 %3556
    %v3558 = vsel %vm1033, %v3476, -inf
    %3559 = vmax.xlane.f32.xlu0 %v3558
    %v3560 = vpop.xlane.xlu0 %3559
    %v3561 = vsel %vm1033, %v3549, -inf
    %3562 = vmax.xlane.f32.xlu0 %v3561
    %v3563 = vpop.xlane.xlu0 %3562
    %v3564 = vmax.f32 %v3554, %v3560
    %v3565 = vmax.f32 %v3557, %v3563
    %v3566 = vsub.f32 %v3324, %v3564
    %v3567 = vsub.f32 %v3403, %v3565
    %v3568 = vmul.f32 %v3566, 1.442695
    %v3569 = vpow.pop %v3568
    %v3570 = vmul.f32 %v3567, 1.442695
    %v3571 = vpow.pop %v3570
    %v3572 = vsub.f32 %v3476, %v3564
    %v3573 = vsub.f32 %v3549, %v3565
    %v3574 = vmul.f32 %v3572, 1.442695
    %v3575 = vpow.pop %v3574
    %v3576 = vmul.f32 %v3573, 1.442695
    %v3577 = vpow.pop %v3576
    %v3578 = vsel %vm585, %v3569, 0.0
    %3579 = vadd.xlane.f32.xlu0 %v3578
    %v3580 = vpop.xlane.xlu0 %3579
    %v3581 = vsel %vm585, %v3571, 0.0
    %3582 = vadd.xlane.f32.xlu0 %v3581
    %v3583 = vpop.xlane.xlu0 %3582
    %v3584 = vsel %vm1033, %v3575, 0.0
    %3585 = vadd.xlane.f32.xlu0 %v3584
    %v3586 = vpop.xlane.xlu0 %3585
    %v3587 = vsel %vm1033, %v3577, 0.0
    %3588 = vadd.xlane.f32.xlu0 %v3587
    %v3589 = vpop.xlane.xlu0 %3588
    %v3590 = vadd.f32 %v3580, %v3586
    %v3591 = vadd.f32 %v3583, %v3589
    %v3593 = vsel %vm1033, %v3575, 0
    %3595 = vmatprep.subr.mxu0 0.0
    %3596 = vmatpush1.msra.mxu0 0.0
    %3597 = vmatprep.subr.mxu0 0.0
    %3598 = vmatpush1.msra.mxu0 0.0
    %3599 = vmatprep.subr.mxu0 0.0
    %3600 = vmatpush1.msra.mxu0 0.0
    %3601 = vmatprep.subr.mxu0 0.0
    %3602 = vmatpush1.msra.mxu0 0.0
    %3603 = vmatprep.subr.mxu0 0.0
    %3604 = vmatpush1.msra.mxu0 0.0
    %3605 = vmatprep.subr.mxu0 0.0
    %3606 = vmatpush1.msra.mxu0 0.0
    %3607 = vmatprep.subr.mxu0 0.0
    %3608 = vmatpush1.msra.mxu0 0.0
    %3609 = vmatprep.subr.mxu0 0.0
    %3610 = vmatpush1.msra.mxu0 0.0
    %3611 = vmatprep.subr.mxu0 0.0
    %3612 = vmatpush1.msra.mxu0 0.0
    %3613 = vmatprep.subr.mxu0 0.0
    %3614 = vmatpush1.msra.mxu0 0.0
    %3615 = vmatprep.subr.mxu0 0.0
    %3616 = vmatpush1.msra.mxu0 0.0
    %3617 = vmatprep.subr.mxu0 0.0
    %3618 = vmatpush1.msra.mxu0 0.0
    %3619 = vmatprep.subr.mxu0 0.0
    %3620 = vmatpush1.msra.mxu0 0.0
    %3621 = vmatprep.subr.mxu0 0.0
    %3622 = vmatpush1.msra.mxu0 0.0
    %3623 = vmatprep.subr.mxu0 0.0
    %3624 = vmatpush1.msra.mxu0 0.0
    %3625 = vmatprep.subr.mxu0 0.0
    %3626 = vmatpush1.msra.mxu0 %v2950
    %3627 = vmatprep.subr.mxu0 0.0
    %3628 = vmatpush2.msra.mxu0 0.0
    %3629 = vmatprep.subr.mxu0 0.0
    %3630 = vmatpush2.msra.mxu0 0.0
    %3631 = vmatprep.subr.mxu0 0.0
    %3632 = vmatpush2.msra.mxu0 0.0
    %3633 = vmatprep.subr.mxu0 0.0
    %3634 = vmatpush2.msra.mxu0 0.0
    %3635 = vmatprep.subr.mxu0 0.0
    %3636 = vmatpush2.msra.mxu0 0.0
    %3637 = vmatprep.subr.mxu0 0.0
    %3638 = vmatpush2.msra.mxu0 0.0
    %3639 = vmatprep.subr.mxu0 0.0
    %3640 = vmatpush2.msra.mxu0 0.0
    %3641 = vmatprep.subr.mxu0 0.0
    %3642 = vmatpush2.msra.mxu0 0.0
    %3643 = vmatprep.subr.mxu0 0.0
    %3644 = vmatpush2.msra.mxu0 0.0
    %3645 = vmatprep.subr.mxu0 0.0
    %3646 = vmatpush2.msra.mxu0 0.0
    %3647 = vmatprep.subr.mxu0 0.0
    %3648 = vmatpush2.msra.mxu0 0.0
    %3649 = vmatprep.subr.mxu0 0.0
    %3650 = vmatpush2.msra.mxu0 0.0
    %3651 = vmatprep.subr.mxu0 0.0
    %3652 = vmatpush2.msra.mxu0 0.0
    %3653 = vmatprep.subr.mxu0 0.0
    %3654 = vmatpush2.msra.mxu0 0.0
    %3655 = vmatprep.subr.mxu0 0.0
    %3656 = vmatpush2.msra.mxu0 0.0
    %3657 = vmatprep.subr.mxu0 0.0
    %3658 = vmatpush2.msra.mxu0 0.0
    %3659 = vmatprep.mubr.f32.mxu0 0.0
    %3660 = vmatmul.mubr.f32.gmra.mxu0 %v3593
    %v3661 = vpop.f32.mrf.mxu0
    %v3662 = vadd.f32 0.0, %v3661
    %v3663 = vpop.f32.mrf.mxu0
    %3664 = vdwg.mxu0
    %v3666 = vsel %vm1033, %v3577, 0
    %3668 = vmatprep.subr.mxu0 0.0
    %3669 = vmatpush1.msra.mxu0 0.0
    %3670 = vmatprep.subr.mxu0 0.0
    %3671 = vmatpush1.msra.mxu0 0.0
    %3672 = vmatprep.subr.mxu0 0.0
    %3673 = vmatpush1.msra.mxu0 0.0
    %3674 = vmatprep.subr.mxu0 0.0
    %3675 = vmatpush1.msra.mxu0 0.0
    %3676 = vmatprep.subr.mxu0 0.0
    %3677 = vmatpush1.msra.mxu0 0.0
    %3678 = vmatprep.subr.mxu0 0.0
    %3679 = vmatpush1.msra.mxu0 0.0
    %3680 = vmatprep.subr.mxu0 0.0
    %3681 = vmatpush1.msra.mxu0 0.0
    %3682 = vmatprep.subr.mxu0 0.0
    %3683 = vmatpush1.msra.mxu0 0.0
    %3684 = vmatprep.subr.mxu0 0.0
    %3685 = vmatpush1.msra.mxu0 0.0
    %3686 = vmatprep.subr.mxu0 0.0
    %3687 = vmatpush1.msra.mxu0 0.0
    %3688 = vmatprep.subr.mxu0 0.0
    %3689 = vmatpush1.msra.mxu0 0.0
    %3690 = vmatprep.subr.mxu0 0.0
    %3691 = vmatpush1.msra.mxu0 0.0
    %3692 = vmatprep.subr.mxu0 0.0
    %3693 = vmatpush1.msra.mxu0 0.0
    %3694 = vmatprep.subr.mxu0 0.0
    %3695 = vmatpush1.msra.mxu0 0.0
    %3696 = vmatprep.subr.mxu0 0.0
    %3697 = vmatpush1.msra.mxu0 0.0
    %3698 = vmatprep.subr.mxu0 0.0
    %3699 = vmatpush1.msra.mxu0 %v2955
    %3700 = vmatprep.subr.mxu0 0.0
    %3701 = vmatpush2.msra.mxu0 0.0
    %3702 = vmatprep.subr.mxu0 0.0
    %3703 = vmatpush2.msra.mxu0 0.0
    %3704 = vmatprep.subr.mxu0 0.0
    %3705 = vmatpush2.msra.mxu0 0.0
    %3706 = vmatprep.subr.mxu0 0.0
    %3707 = vmatpush2.msra.mxu0 0.0
    %3708 = vmatprep.subr.mxu0 0.0
    %3709 = vmatpush2.msra.mxu0 0.0
    %3710 = vmatprep.subr.mxu0 0.0
    %3711 = vmatpush2.msra.mxu0 0.0
    %3712 = vmatprep.subr.mxu0 0.0
    %3713 = vmatpush2.msra.mxu0 0.0
    %3714 = vmatprep.subr.mxu0 0.0
    %3715 = vmatpush2.msra.mxu0 0.0
    %3716 = vmatprep.subr.mxu0 0.0
    %3717 = vmatpush2.msra.mxu0 0.0
    %3718 = vmatprep.subr.mxu0 0.0
    %3719 = vmatpush2.msra.mxu0 0.0
    %3720 = vmatprep.subr.mxu0 0.0
    %3721 = vmatpush2.msra.mxu0 0.0
    %3722 = vmatprep.subr.mxu0 0.0
    %3723 = vmatpush2.msra.mxu0 0.0
    %3724 = vmatprep.subr.mxu0 0.0
    %3725 = vmatpush2.msra.mxu0 0.0
    %3726 = vmatprep.subr.mxu0 0.0
    %3727 = vmatpush2.msra.mxu0 0.0
    %3728 = vmatprep.subr.mxu0 0.0
    %3729 = vmatpush2.msra.mxu0 0.0
    %3730 = vmatprep.subr.mxu0 0.0
    %3731 = vmatpush2.msra.mxu0 0.0
    %3732 = vmatprep.mubr.f32.mxu0 0.0
    %3733 = vmatmul.mubr.f32.gmra.mxu0 %v3666
    %v3734 = vpop.f32.mrf.mxu0
    %v3735 = vadd.f32 0.0, %v3734
    %v3736 = vpop.f32.mrf.mxu0
    %3737 = vdwg.mxu0
    %v3739 = vsel %vm585, %v3569, 0
    %3741 = vmatprep.subr.mxu0 0.0
    %3742 = vmatpush1.msra.mxu0 0.0
    %3743 = vmatprep.subr.mxu0 0.0
    %3744 = vmatpush1.msra.mxu0 0.0
    %3745 = vmatprep.subr.mxu0 0.0
    %3746 = vmatpush1.msra.mxu0 0.0
    %3747 = vmatprep.subr.mxu0 0.0
    %3748 = vmatpush1.msra.mxu0 0.0
    %3749 = vmatprep.subr.mxu0 0.0
    %3750 = vmatpush1.msra.mxu0 0.0
    %3751 = vmatprep.subr.mxu0 0.0
    %3752 = vmatpush1.msra.mxu0 0.0
    %3753 = vmatprep.subr.mxu0 0.0
    %3754 = vmatpush1.msra.mxu0 0.0
    %3755 = vmatprep.subr.mxu0 0.0
    %3756 = vmatpush1.msra.mxu0 0.0
    %3757 = vmatprep.subr.mxu0 0.0
    %3758 = vmatpush1.msra.mxu0 0.0
    %3759 = vmatprep.subr.mxu0 0.0
    %3760 = vmatpush1.msra.mxu0 0.0
    %3761 = vmatprep.subr.mxu0 0.0
    %3762 = vmatpush1.msra.mxu0 0.0
    %3763 = vmatprep.subr.mxu0 0.0
    %3764 = vmatpush1.msra.mxu0 0.0
    %3765 = vmatprep.subr.mxu0 0.0
    %3766 = vmatpush1.msra.mxu0 0.0
    %3767 = vmatprep.subr.mxu0 0.0
    %3768 = vmatpush1.msra.mxu0 0.0
    %3769 = vmatprep.subr.mxu0 0.0
    %3770 = vmatpush1.msra.mxu0 %v3115
    %3771 = vmatprep.subr.mxu0 0.0
    %3772 = vmatpush1.msra.mxu0 %v3110
    %3773 = vmatprep.subr.mxu0 0.0
    %3774 = vmatpush2.msra.mxu0 0.0
    %3775 = vmatprep.subr.mxu0 0.0
    %3776 = vmatpush2.msra.mxu0 0.0
    %3777 = vmatprep.subr.mxu0 0.0
    %3778 = vmatpush2.msra.mxu0 0.0
    %3779 = vmatprep.subr.mxu0 0.0
    %3780 = vmatpush2.msra.mxu0 0.0
    %3781 = vmatprep.subr.mxu0 0.0
    %3782 = vmatpush2.msra.mxu0 0.0
    %3783 = vmatprep.subr.mxu0 0.0
    %3784 = vmatpush2.msra.mxu0 0.0
    %3785 = vmatprep.subr.mxu0 0.0
    %3786 = vmatpush2.msra.mxu0 0.0
    %3787 = vmatprep.subr.mxu0 0.0
    %3788 = vmatpush2.msra.mxu0 0.0
    %3789 = vmatprep.subr.mxu0 0.0
    %3790 = vmatpush2.msra.mxu0 0.0
    %3791 = vmatprep.subr.mxu0 0.0
    %3792 = vmatpush2.msra.mxu0 0.0
    %3793 = vmatprep.subr.mxu0 0.0
    %3794 = vmatpush2.msra.mxu0 0.0
    %3795 = vmatprep.subr.mxu0 0.0
    %3796 = vmatpush2.msra.mxu0 0.0
    %3797 = vmatprep.subr.mxu0 0.0
    %3798 = vmatpush2.msra.mxu0 0.0
    %3799 = vmatprep.subr.mxu0 0.0
    %3800 = vmatpush2.msra.mxu0 0.0
    %3801 = vmatprep.subr.mxu0 0.0
    %3802 = vmatpush2.msra.mxu0 0.0
    %3803 = vmatprep.subr.mxu0 0.0
    %3804 = vmatpush2.msra.mxu0 0.0
    %3805 = vmatprep.mubr.f32.mxu0 0.0
    %3806 = vmatmul.mubr.f32.gmra.mxu0 %v3739
    %v3807 = vpop.f32.mrf.mxu0
    %v3808 = vadd.f32 %v3662, %v3807
    %v3809 = vpop.f32.mrf.mxu0
    %3810 = vdwg.mxu0
    %v3812 = vsel %vm585, %v3571, 0
    %3814 = vmatprep.subr.mxu0 0.0
    %3815 = vmatpush1.msra.mxu0 0.0
    %3816 = vmatprep.subr.mxu0 0.0
    %3817 = vmatpush1.msra.mxu0 0.0
    %3818 = vmatprep.subr.mxu0 0.0
    %3819 = vmatpush1.msra.mxu0 0.0
    %3820 = vmatprep.subr.mxu0 0.0
    %3821 = vmatpush1.msra.mxu0 0.0
    %3822 = vmatprep.subr.mxu0 0.0
    %3823 = vmatpush1.msra.mxu0 0.0
    %3824 = vmatprep.subr.mxu0 0.0
    %3825 = vmatpush1.msra.mxu0 0.0
    %3826 = vmatprep.subr.mxu0 0.0
    %3827 = vmatpush1.msra.mxu0 0.0
    %3828 = vmatprep.subr.mxu0 0.0
    %3829 = vmatpush1.msra.mxu0 0.0
    %3830 = vmatprep.subr.mxu0 0.0
    %3831 = vmatpush1.msra.mxu0 0.0
    %3832 = vmatprep.subr.mxu0 0.0
    %3833 = vmatpush1.msra.mxu0 0.0
    %3834 = vmatprep.subr.mxu0 0.0
    %3835 = vmatpush1.msra.mxu0 0.0
    %3836 = vmatprep.subr.mxu0 0.0
    %3837 = vmatpush1.msra.mxu0 0.0
    %3838 = vmatprep.subr.mxu0 0.0
    %3839 = vmatpush1.msra.mxu0 0.0
    %3840 = vmatprep.subr.mxu0 0.0
    %3841 = vmatpush1.msra.mxu0 0.0
    %3842 = vmatprep.subr.mxu0 0.0
    %3843 = vmatpush1.msra.mxu0 %v3125
    %3844 = vmatprep.subr.mxu0 0.0
    %3845 = vmatpush1.msra.mxu0 %v3120
    %3846 = vmatprep.subr.mxu0 0.0
    %3847 = vmatpush2.msra.mxu0 0.0
    %3848 = vmatprep.subr.mxu0 0.0
    %3849 = vmatpush2.msra.mxu0 0.0
    %3850 = vmatprep.subr.mxu0 0.0
    %3851 = vmatpush2.msra.mxu0 0.0
    %3852 = vmatprep.subr.mxu0 0.0
    %3853 = vmatpush2.msra.mxu0 0.0
    %3854 = vmatprep.subr.mxu0 0.0
    %3855 = vmatpush2.msra.mxu0 0.0
    %3856 = vmatprep.subr.mxu0 0.0
    %3857 = vmatpush2.msra.mxu0 0.0
    %3858 = vmatprep.subr.mxu0 0.0
    %3859 = vmatpush2.msra.mxu0 0.0
    %3860 = vmatprep.subr.mxu0 0.0
    %3861 = vmatpush2.msra.mxu0 0.0
    %3862 = vmatprep.subr.mxu0 0.0
    %3863 = vmatpush2.msra.mxu0 0.0
    %3864 = vmatprep.subr.mxu0 0.0
    %3865 = vmatpush2.msra.mxu0 0.0
    %3866 = vmatprep.subr.mxu0 0.0
    %3867 = vmatpush2.msra.mxu0 0.0
    %3868 = vmatprep.subr.mxu0 0.0
    %3869 = vmatpush2.msra.mxu0 0.0
    %3870 = vmatprep.subr.mxu0 0.0
    %3871 = vmatpush2.msra.mxu0 0.0
    %3872 = vmatprep.subr.mxu0 0.0
    %3873 = vmatpush2.msra.mxu0 0.0
    %3874 = vmatprep.subr.mxu0 0.0
    %3875 = vmatpush2.msra.mxu0 0.0
    %3876 = vmatprep.subr.mxu0 0.0
    %3877 = vmatpush2.msra.mxu0 0.0
    %3878 = vmatprep.mubr.f32.mxu0 0.0
    %3879 = vmatmul.mubr.f32.gmra.mxu0 %v3812
    %v3880 = vpop.f32.mrf.mxu0
    %v3881 = vadd.f32 %v3735, %v3880
    %v3882 = vpop.f32.mrf.mxu0
    %3883 = vdwg.mxu0
    %v3884 = vrcp.pop %v3590
    %v3885 = vrcp.pop %v3591
    %v3886 = vmul.f32 %v3808, %v3884
    %v3887 = vmul.f32 %v3881, %v3885
    %v3889 = vsel %vm585, %v3886, 0
    %v3892 = vsel %vm585, %v3887, 0
    %3894 = vmatprep.subr.mxu0 0.0
    %3895 = vmatpush1.msra.mxu0 0.0
    %3896 = vmatprep.subr.mxu0 0.0
    %3897 = vmatpush1.msra.mxu0 0.0
    %3898 = vmatprep.subr.mxu0 0.0
    %3899 = vmatpush1.msra.mxu0 0.0
    %3900 = vmatprep.subr.mxu0 0.0
    %3901 = vmatpush1.msra.mxu0 0.0
    %3902 = vmatprep.subr.mxu0 0.0
    %3903 = vmatpush1.msra.mxu0 0.0
    %3904 = vmatprep.subr.mxu0 0.0
    %3905 = vmatpush1.msra.mxu0 0.0
    %3906 = vmatprep.subr.mxu0 0.0
    %3907 = vmatpush1.msra.mxu0 0.0
    %3908 = vmatprep.subr.mxu0 0.0
    %3909 = vmatpush1.msra.mxu0 0.0
    %3910 = vmatprep.subr.mxu0 0.0
    %3911 = vmatpush1.msra.mxu0 0.0
    %3912 = vmatprep.subr.mxu0 0.0
    %3913 = vmatpush1.msra.mxu0 0.0
    %3914 = vmatprep.subr.mxu0 0.0
    %3915 = vmatpush1.msra.mxu0 0.0
    %3916 = vmatprep.subr.mxu0 0.0
    %3917 = vmatpush1.msra.mxu0 0.0
    %3918 = vmatprep.subr.mxu0 0.0
    %3919 = vmatpush1.msra.mxu0 0.0
    %3920 = vmatprep.subr.mxu0 0.0
    %3921 = vmatpush1.msra.mxu0 0.0
    %3922 = vmatprep.subr.mxu0 0.0
    %3923 = vmatpush1.msra.mxu0 %v2714
    %3924 = vmatprep.subr.mxu0 0.0
    %3925 = vmatpush1.msra.mxu0 %v2713
    %3926 = vmatprep.subr.mxu0 0.0
    %3927 = vmatpush2.msra.mxu0 0.0
    %3928 = vmatprep.subr.mxu0 0.0
    %3929 = vmatpush2.msra.mxu0 0.0
    %3930 = vmatprep.subr.mxu0 0.0
    %3931 = vmatpush2.msra.mxu0 0.0
    %3932 = vmatprep.subr.mxu0 0.0
    %3933 = vmatpush2.msra.mxu0 0.0
    %3934 = vmatprep.subr.mxu0 0.0
    %3935 = vmatpush2.msra.mxu0 0.0
    %3936 = vmatprep.subr.mxu0 0.0
    %3937 = vmatpush2.msra.mxu0 0.0
    %3938 = vmatprep.subr.mxu0 0.0
    %3939 = vmatpush2.msra.mxu0 0.0
    %3940 = vmatprep.subr.mxu0 0.0
    %3941 = vmatpush2.msra.mxu0 0.0
    %3942 = vmatprep.subr.mxu0 0.0
    %3943 = vmatpush2.msra.mxu0 0.0
    %3944 = vmatprep.subr.mxu0 0.0
    %3945 = vmatpush2.msra.mxu0 0.0
    %3946 = vmatprep.subr.mxu0 0.0
    %3947 = vmatpush2.msra.mxu0 0.0
    %3948 = vmatprep.subr.mxu0 0.0
    %3949 = vmatpush2.msra.mxu0 0.0
    %3950 = vmatprep.subr.mxu0 0.0
    %3951 = vmatpush2.msra.mxu0 0.0
    %3952 = vmatprep.subr.mxu0 0.0
    %3953 = vmatpush2.msra.mxu0 0.0
    %3954 = vmatprep.subr.mxu0 0.0
    %3955 = vmatpush2.msra.mxu0 0.0
    %3956 = vmatprep.subr.mxu0 0.0
    %3957 = vmatpush2.msra.mxu0 0.0
    %3958 = vmatprep.mubr.f32.mxu0 0.0
    %3959 = vmatmul.mubr.f32.gmra.mxu0 %v3889
    %v3960 = vpop.f32.mrf.mxu0
    %v3961 = vadd.f32 0.0, %v3960
    %v3962 = vpop.f32.mrf.mxu0
    %3963 = vmatprep.mubr.f32.mxu0 0.0
    %3964 = vmatmul.mubr.f32.gmra.mxu0 %v3892
    %v3965 = vpop.f32.mrf.mxu0
    %v3966 = vadd.f32 0.0, %v3965
    %v3967 = vpop.f32.mrf.mxu0
    %3968 = vdwg.mxu0
    %v3969 = vadd.f32 %v2699, %v3961
    %v3970 = vadd.f32 %v2704, %v3966
    %v3971 = vld [vmem:[%s4 + $0x30] sm:$0xff]
    %v3972 = vld [vmem:[%s4 + $0x38] sm:$0xff]
    %v3973 = vld [vmem:[%s4 + $0x70] sm:$0xff]
    %v3974 = vld [vmem:[%s4 + $0x78] sm:$0xff]
    %v3975 = vld [vmem:[%s4 + $0xb0] sm:$0xff]
    %v3976 = vld [vmem:[%s4 + $0xb8] sm:$0xff]
    %v3977 = vld [vmem:[%s5 + $0x30] sm:$0xff]
    %v3978 = vld [vmem:[%s5 + $0x38] sm:$0xff]
    %v3980 = vsel %vm30, %v3971, 0
    %v3983 = vsel %vm30, %v3972, 0
    %3985 = vmatprep.subr.mxu0 0.0
    %3986 = vmatpush1.xpose.msra.mxu0 0.0
    %3987 = vmatprep.subr.mxu0 0.0
    %3988 = vmatpush1.xpose.msra.mxu0 0.0
    %3989 = vmatprep.subr.mxu0 0.0
    %3990 = vmatpush1.xpose.msra.mxu0 0.0
    %3991 = vmatprep.subr.mxu0 0.0
    %3992 = vmatpush1.xpose.msra.mxu0 0.0
    %3993 = vmatprep.subr.mxu0 0.0
    %3994 = vmatpush1.xpose.msra.mxu0 0.0
    %3995 = vmatprep.subr.mxu0 0.0
    %3996 = vmatpush1.xpose.msra.mxu0 0.0
    %3997 = vmatprep.subr.mxu0 0.0
    %3998 = vmatpush1.xpose.msra.mxu0 0.0
    %3999 = vmatprep.subr.mxu0 0.0
    %4000 = vmatpush1.xpose.msra.mxu0 0.0
    %4001 = vmatprep.subr.mxu0 0.0
    %4002 = vmatpush1.xpose.msra.mxu0 0.0
    %4003 = vmatprep.subr.mxu0 0.0
    %4004 = vmatpush1.xpose.msra.mxu0 0.0
    %4005 = vmatprep.subr.mxu0 0.0
    %4006 = vmatpush1.xpose.msra.mxu0 0.0
    %4007 = vmatprep.subr.mxu0 0.0
    %4008 = vmatpush1.xpose.msra.mxu0 0.0
    %4009 = vmatprep.subr.mxu0 0.0
    %4010 = vmatpush1.xpose.msra.mxu0 0.0
    %4011 = vmatprep.subr.mxu0 0.0
    %4012 = vmatpush1.xpose.msra.mxu0 0.0
    %4013 = vmatprep.subr.mxu0 0.0
    %4014 = vmatpush1.xpose.msra.mxu0 %v3983
    %4015 = vmatprep.subr.mxu0 0.0
    %4016 = vmatpush1.xpose.msra.mxu0 %v3980
    %4017 = vmatprep.subr.mxu0 0.0
    %4018 = vmatpush2.xpose.msra.mxu0 0.0
    %4019 = vmatprep.subr.mxu0 0.0
    %4020 = vmatpush2.xpose.msra.mxu0 0.0
    %4021 = vmatprep.subr.mxu0 0.0
    %4022 = vmatpush2.xpose.msra.mxu0 0.0
    %4023 = vmatprep.subr.mxu0 0.0
    %4024 = vmatpush2.xpose.msra.mxu0 0.0
    %4025 = vmatprep.subr.mxu0 0.0
    %4026 = vmatpush2.xpose.msra.mxu0 0.0
    %4027 = vmatprep.subr.mxu0 0.0
    %4028 = vmatpush2.xpose.msra.mxu0 0.0
    %4029 = vmatprep.subr.mxu0 0.0
    %4030 = vmatpush2.xpose.msra.mxu0 0.0
    %4031 = vmatprep.subr.mxu0 0.0
    %4032 = vmatpush2.xpose.msra.mxu0 0.0
    %4033 = vmatprep.subr.mxu0 0.0
    %4034 = vmatpush2.xpose.msra.mxu0 0.0
    %4035 = vmatprep.subr.mxu0 0.0
    %4036 = vmatpush2.xpose.msra.mxu0 0.0
    %4037 = vmatprep.subr.mxu0 0.0
    %4038 = vmatpush2.xpose.msra.mxu0 0.0
    %4039 = vmatprep.subr.mxu0 0.0
    %4040 = vmatpush2.xpose.msra.mxu0 0.0
    %4041 = vmatprep.subr.mxu0 0.0
    %4042 = vmatpush2.xpose.msra.mxu0 0.0
    %4043 = vmatprep.subr.mxu0 0.0
    %4044 = vmatpush2.xpose.msra.mxu0 0.0
    %4045 = vmatprep.subr.mxu0 0.0
    %4046 = vmatpush2.xpose.msra.mxu0 0.0
    %4047 = vmatprep.subr.mxu0 0.0
    %4048 = vmatpush2.xpose.msra.mxu0 0.0
    %4049 = vmatprep.mubr.f32.mxu0 0.0
    %4050 = vmatmul.mubr.f32.gmra.mxu0 %v155
    %v4051 = vpop.f32.mrf.mxu0
    %v4052 = vadd.f32 0.0, %v4051
    %v4053 = vpop.f32.mrf.mxu0
    %4054 = vmatprep.mubr.f32.mxu0 0.0
    %4055 = vmatmul.mubr.f32.gmra.mxu0 %v158
    %v4056 = vpop.f32.mrf.mxu0
    %v4057 = vadd.f32 0.0, %v4056
    %v4058 = vpop.f32.mrf.mxu0
    %4059 = vdwg.mxu0
    %v4061 = vsel %vm30, %v3973, 0
    %v4064 = vsel %vm30, %v3974, 0
    %4066 = vmatprep.subr.mxu0 0.0
    %4067 = vmatpush1.xpose.msra.mxu0 0.0
    %4068 = vmatprep.subr.mxu0 0.0
    %4069 = vmatpush1.xpose.msra.mxu0 0.0
    %4070 = vmatprep.subr.mxu0 0.0
    %4071 = vmatpush1.xpose.msra.mxu0 0.0
    %4072 = vmatprep.subr.mxu0 0.0
    %4073 = vmatpush1.xpose.msra.mxu0 0.0
    %4074 = vmatprep.subr.mxu0 0.0
    %4075 = vmatpush1.xpose.msra.mxu0 0.0
    %4076 = vmatprep.subr.mxu0 0.0
    %4077 = vmatpush1.xpose.msra.mxu0 0.0
    %4078 = vmatprep.subr.mxu0 0.0
    %4079 = vmatpush1.xpose.msra.mxu0 0.0
    %4080 = vmatprep.subr.mxu0 0.0
    %4081 = vmatpush1.xpose.msra.mxu0 0.0
    %4082 = vmatprep.subr.mxu0 0.0
    %4083 = vmatpush1.xpose.msra.mxu0 0.0
    %4084 = vmatprep.subr.mxu0 0.0
    %4085 = vmatpush1.xpose.msra.mxu0 0.0
    %4086 = vmatprep.subr.mxu0 0.0
    %4087 = vmatpush1.xpose.msra.mxu0 0.0
    %4088 = vmatprep.subr.mxu0 0.0
    %4089 = vmatpush1.xpose.msra.mxu0 0.0
    %4090 = vmatprep.subr.mxu0 0.0
    %4091 = vmatpush1.xpose.msra.mxu0 0.0
    %4092 = vmatprep.subr.mxu0 0.0
    %4093 = vmatpush1.xpose.msra.mxu0 0.0
    %4094 = vmatprep.subr.mxu0 0.0
    %4095 = vmatpush1.xpose.msra.mxu0 %v4064
    %4096 = vmatprep.subr.mxu0 0.0
    %4097 = vmatpush1.xpose.msra.mxu0 %v4061
    %4098 = vmatprep.subr.mxu0 0.0
    %4099 = vmatpush2.xpose.msra.mxu0 0.0
    %4100 = vmatprep.subr.mxu0 0.0
    %4101 = vmatpush2.xpose.msra.mxu0 0.0
    %4102 = vmatprep.subr.mxu0 0.0
    %4103 = vmatpush2.xpose.msra.mxu0 0.0
    %4104 = vmatprep.subr.mxu0 0.0
    %4105 = vmatpush2.xpose.msra.mxu0 0.0
    %4106 = vmatprep.subr.mxu0 0.0
    %4107 = vmatpush2.xpose.msra.mxu0 0.0
    %4108 = vmatprep.subr.mxu0 0.0
    %4109 = vmatpush2.xpose.msra.mxu0 0.0
    %4110 = vmatprep.subr.mxu0 0.0
    %4111 = vmatpush2.xpose.msra.mxu0 0.0
    %4112 = vmatprep.subr.mxu0 0.0
    %4113 = vmatpush2.xpose.msra.mxu0 0.0
    %4114 = vmatprep.subr.mxu0 0.0
    %4115 = vmatpush2.xpose.msra.mxu0 0.0
    %4116 = vmatprep.subr.mxu0 0.0
    %4117 = vmatpush2.xpose.msra.mxu0 0.0
    %4118 = vmatprep.subr.mxu0 0.0
    %4119 = vmatpush2.xpose.msra.mxu0 0.0
    %4120 = vmatprep.subr.mxu0 0.0
    %4121 = vmatpush2.xpose.msra.mxu0 0.0
    %4122 = vmatprep.subr.mxu0 0.0
    %4123 = vmatpush2.xpose.msra.mxu0 0.0
    %4124 = vmatprep.subr.mxu0 0.0
    %4125 = vmatpush2.xpose.msra.mxu0 0.0
    %4126 = vmatprep.subr.mxu0 0.0
    %4127 = vmatpush2.xpose.msra.mxu0 0.0
    %4128 = vmatprep.subr.mxu0 0.0
    %4129 = vmatpush2.xpose.msra.mxu0 0.0
    %4130 = vmatprep.mubr.f32.mxu0 0.0
    %4131 = vmatmul.mubr.f32.gmra.mxu0 %v155
    %v4132 = vpop.f32.mrf.mxu0
    %v4133 = vadd.f32 0.0, %v4132
    %v4134 = vpop.f32.mrf.mxu0
    %4135 = vmatprep.mubr.f32.mxu0 0.0
    %4136 = vmatmul.mubr.f32.gmra.mxu0 %v158
    %v4137 = vpop.f32.mrf.mxu0
    %v4138 = vadd.f32 0.0, %v4137
    %v4139 = vpop.f32.mrf.mxu0
    %4140 = vdwg.mxu0
    %v4142 = vsel %vm30, %v3975, 0
    %v4145 = vsel %vm30, %v3976, 0
    %4147 = vmatprep.subr.mxu0 0.0
    %4148 = vmatpush1.xpose.msra.mxu0 0.0
    %4149 = vmatprep.subr.mxu0 0.0
    %4150 = vmatpush1.xpose.msra.mxu0 0.0
    %4151 = vmatprep.subr.mxu0 0.0
    %4152 = vmatpush1.xpose.msra.mxu0 0.0
    %4153 = vmatprep.subr.mxu0 0.0
    %4154 = vmatpush1.xpose.msra.mxu0 0.0
    %4155 = vmatprep.subr.mxu0 0.0
    %4156 = vmatpush1.xpose.msra.mxu0 0.0
    %4157 = vmatprep.subr.mxu0 0.0
    %4158 = vmatpush1.xpose.msra.mxu0 0.0
    %4159 = vmatprep.subr.mxu0 0.0
    %4160 = vmatpush1.xpose.msra.mxu0 0.0
    %4161 = vmatprep.subr.mxu0 0.0
    %4162 = vmatpush1.xpose.msra.mxu0 0.0
    %4163 = vmatprep.subr.mxu0 0.0
    %4164 = vmatpush1.xpose.msra.mxu0 0.0
    %4165 = vmatprep.subr.mxu0 0.0
    %4166 = vmatpush1.xpose.msra.mxu0 0.0
    %4167 = vmatprep.subr.mxu0 0.0
    %4168 = vmatpush1.xpose.msra.mxu0 0.0
    %4169 = vmatprep.subr.mxu0 0.0
    %4170 = vmatpush1.xpose.msra.mxu0 0.0
    %4171 = vmatprep.subr.mxu0 0.0
    %4172 = vmatpush1.xpose.msra.mxu0 0.0
    %4173 = vmatprep.subr.mxu0 0.0
    %4174 = vmatpush1.xpose.msra.mxu0 0.0
    %4175 = vmatprep.subr.mxu0 0.0
    %4176 = vmatpush1.xpose.msra.mxu0 %v4145
    %4177 = vmatprep.subr.mxu0 0.0
    %4178 = vmatpush1.xpose.msra.mxu0 %v4142
    %4179 = vmatprep.subr.mxu0 0.0
    %4180 = vmatpush2.xpose.msra.mxu0 0.0
    %4181 = vmatprep.subr.mxu0 0.0
    %4182 = vmatpush2.xpose.msra.mxu0 0.0
    %4183 = vmatprep.subr.mxu0 0.0
    %4184 = vmatpush2.xpose.msra.mxu0 0.0
    %4185 = vmatprep.subr.mxu0 0.0
    %4186 = vmatpush2.xpose.msra.mxu0 0.0
    %4187 = vmatprep.subr.mxu0 0.0
    %4188 = vmatpush2.xpose.msra.mxu0 0.0
    %4189 = vmatprep.subr.mxu0 0.0
    %4190 = vmatpush2.xpose.msra.mxu0 0.0
    %4191 = vmatprep.subr.mxu0 0.0
    %4192 = vmatpush2.xpose.msra.mxu0 0.0
    %4193 = vmatprep.subr.mxu0 0.0
    %4194 = vmatpush2.xpose.msra.mxu0 0.0
    %4195 = vmatprep.subr.mxu0 0.0
    %4196 = vmatpush2.xpose.msra.mxu0 0.0
    %4197 = vmatprep.subr.mxu0 0.0
    %4198 = vmatpush2.xpose.msra.mxu0 0.0
    %4199 = vmatprep.subr.mxu0 0.0
    %4200 = vmatpush2.xpose.msra.mxu0 0.0
    %4201 = vmatprep.subr.mxu0 0.0
    %4202 = vmatpush2.xpose.msra.mxu0 0.0
    %4203 = vmatprep.subr.mxu0 0.0
    %4204 = vmatpush2.xpose.msra.mxu0 0.0
    %4205 = vmatprep.subr.mxu0 0.0
    %4206 = vmatpush2.xpose.msra.mxu0 0.0
    %4207 = vmatprep.subr.mxu0 0.0
    %4208 = vmatpush2.xpose.msra.mxu0 0.0
    %4209 = vmatprep.subr.mxu0 0.0
    %4210 = vmatpush2.xpose.msra.mxu0 0.0
    %4211 = vmatprep.mubr.f32.mxu0 0.0
    %4212 = vmatmul.mubr.f32.gmra.mxu0 %v155
    %v4213 = vpop.f32.mrf.mxu0
    %v4214 = vadd.f32 0.0, %v4213
    %v4215 = vpop.f32.mrf.mxu0
    %4216 = vmatprep.mubr.f32.mxu0 0.0
    %4217 = vmatmul.mubr.f32.gmra.mxu0 %v158
    %v4218 = vpop.f32.mrf.mxu0
    %v4219 = vadd.f32 0.0, %v4218
    %v4220 = vpop.f32.mrf.mxu0
    %4221 = vdwg.mxu0
    %4222 = vmatprep.subr.mxu0 0.0
    %4223 = vmatpush1.xpose.msra.mxu0 0.0
    %4224 = vmatprep.subr.mxu0 0.0
    %4225 = vmatpush1.xpose.msra.mxu0 0.0
    %4226 = vmatprep.subr.mxu0 0.0
    %4227 = vmatpush1.xpose.msra.mxu0 0.0
    %4228 = vmatprep.subr.mxu0 0.0
    %4229 = vmatpush1.xpose.msra.mxu0 0.0
    %4230 = vmatprep.subr.mxu0 0.0
    %4231 = vmatpush1.xpose.msra.mxu0 0.0
    %4232 = vmatprep.subr.mxu0 0.0
    %4233 = vmatpush1.xpose.msra.mxu0 0.0
    %4234 = vmatprep.subr.mxu0 0.0
    %4235 = vmatpush1.xpose.msra.mxu0 0.0
    %4236 = vmatprep.subr.mxu0 0.0
    %4237 = vmatpush1.xpose.msra.mxu0 0.0
    %4238 = vmatprep.subr.mxu0 0.0
    %4239 = vmatpush1.xpose.msra.mxu0 0.0
    %4240 = vmatprep.subr.mxu0 0.0
    %4241 = vmatpush1.xpose.msra.mxu0 0.0
    %4242 = vmatprep.subr.mxu0 0.0
    %4243 = vmatpush1.xpose.msra.mxu0 0.0
    %4244 = vmatprep.subr.mxu0 0.0
    %4245 = vmatpush1.xpose.msra.mxu0 0.0
    %4246 = vmatprep.subr.mxu0 0.0
    %4247 = vmatpush1.xpose.msra.mxu0 0.0
    %4248 = vmatprep.subr.mxu0 0.0
    %4249 = vmatpush1.xpose.msra.mxu0 0.0
    %4250 = vmatprep.subr.mxu0 0.0
    %4251 = vmatpush1.xpose.msra.mxu0 %v4064
    %4252 = vmatprep.subr.mxu0 0.0
    %4253 = vmatpush1.xpose.msra.mxu0 %v4061
    %4254 = vmatprep.subr.mxu0 0.0
    %4255 = vmatpush2.xpose.msra.mxu0 0.0
    %4256 = vmatprep.subr.mxu0 0.0
    %4257 = vmatpush2.xpose.msra.mxu0 0.0
    %4258 = vmatprep.subr.mxu0 0.0
    %4259 = vmatpush2.xpose.msra.mxu0 0.0
    %4260 = vmatprep.subr.mxu0 0.0
    %4261 = vmatpush2.xpose.msra.mxu0 0.0
    %4262 = vmatprep.subr.mxu0 0.0
    %4263 = vmatpush2.xpose.msra.mxu0 0.0
    %4264 = vmatprep.subr.mxu0 0.0
    %4265 = vmatpush2.xpose.msra.mxu0 0.0
    %4266 = vmatprep.subr.mxu0 0.0
    %4267 = vmatpush2.xpose.msra.mxu0 0.0
    %4268 = vmatprep.subr.mxu0 0.0
    %4269 = vmatpush2.xpose.msra.mxu0 0.0
    %4270 = vmatprep.subr.mxu0 0.0
    %4271 = vmatpush2.xpose.msra.mxu0 0.0
    %4272 = vmatprep.subr.mxu0 0.0
    %4273 = vmatpush2.xpose.msra.mxu0 0.0
    %4274 = vmatprep.subr.mxu0 0.0
    %4275 = vmatpush2.xpose.msra.mxu0 0.0
    %4276 = vmatprep.subr.mxu0 0.0
    %4277 = vmatpush2.xpose.msra.mxu0 0.0
    %4278 = vmatprep.subr.mxu0 0.0
    %4279 = vmatpush2.xpose.msra.mxu0 0.0
    %4280 = vmatprep.subr.mxu0 0.0
    %4281 = vmatpush2.xpose.msra.mxu0 0.0
    %4282 = vmatprep.subr.mxu0 0.0
    %4283 = vmatpush2.xpose.msra.mxu0 0.0
    %4284 = vmatprep.subr.mxu0 0.0
    %4285 = vmatpush2.xpose.msra.mxu0 0.0
    %4286 = vmatprep.mubr.f32.mxu0 0.0
    %4287 = vmatmul.mubr.f32.gmra.mxu0 %v404
    %v4288 = vpop.f32.mrf.mxu0
    %v4289 = vadd.f32 0.0, %v4288
    %v4290 = vpop.f32.mrf.mxu0
    %4291 = vmatprep.mubr.f32.mxu0 0.0
    %4292 = vmatmul.mubr.f32.gmra.mxu0 %v407
    %v4293 = vpop.f32.mrf.mxu0
    %v4294 = vadd.f32 0.0, %v4293
    %v4295 = vpop.f32.mrf.mxu0
    %4296 = vmatprep.mubr.f32.mxu0 0.0
    %4297 = vmatmul.mubr.f32.gmra.mxu0 %v410
    %v4298 = vpop.f32.mrf.mxu0
    %v4299 = vadd.f32 0.0, %v4298
    %v4300 = vpop.f32.mrf.mxu0
    %4301 = vmatprep.mubr.f32.mxu0 0.0
    %4302 = vmatmul.mubr.f32.gmra.mxu0 %v413
    %v4303 = vpop.f32.mrf.mxu0
    %v4304 = vadd.f32 0.0, %v4303
    %v4305 = vpop.f32.mrf.mxu0
    %4306 = vdwg.mxu0
    %4307 = vmatprep.subr.mxu0 0.0
    %4308 = vmatpush1.xpose.msra.mxu0 0.0
    %4309 = vmatprep.subr.mxu0 0.0
    %4310 = vmatpush1.xpose.msra.mxu0 0.0
    %4311 = vmatprep.subr.mxu0 0.0
    %4312 = vmatpush1.xpose.msra.mxu0 0.0
    %4313 = vmatprep.subr.mxu0 0.0
    %4314 = vmatpush1.xpose.msra.mxu0 0.0
    %4315 = vmatprep.subr.mxu0 0.0
    %4316 = vmatpush1.xpose.msra.mxu0 0.0
    %4317 = vmatprep.subr.mxu0 0.0
    %4318 = vmatpush1.xpose.msra.mxu0 0.0
    %4319 = vmatprep.subr.mxu0 0.0
    %4320 = vmatpush1.xpose.msra.mxu0 0.0
    %4321 = vmatprep.subr.mxu0 0.0
    %4322 = vmatpush1.xpose.msra.mxu0 0.0
    %4323 = vmatprep.subr.mxu0 0.0
    %4324 = vmatpush1.xpose.msra.mxu0 0.0
    %4325 = vmatprep.subr.mxu0 0.0
    %4326 = vmatpush1.xpose.msra.mxu0 0.0
    %4327 = vmatprep.subr.mxu0 0.0
    %4328 = vmatpush1.xpose.msra.mxu0 0.0
    %4329 = vmatprep.subr.mxu0 0.0
    %4330 = vmatpush1.xpose.msra.mxu0 0.0
    %4331 = vmatprep.subr.mxu0 0.0
    %4332 = vmatpush1.xpose.msra.mxu0 0.0
    %4333 = vmatprep.subr.mxu0 0.0
    %4334 = vmatpush1.xpose.msra.mxu0 0.0
    %4335 = vmatprep.subr.mxu0 0.0
    %4336 = vmatpush1.xpose.msra.mxu0 %v4145
    %4337 = vmatprep.subr.mxu0 0.0
    %4338 = vmatpush1.xpose.msra.mxu0 %v4142
    %4339 = vmatprep.subr.mxu0 0.0
    %4340 = vmatpush2.xpose.msra.mxu0 0.0
    %4341 = vmatprep.subr.mxu0 0.0
    %4342 = vmatpush2.xpose.msra.mxu0 0.0
    %4343 = vmatprep.subr.mxu0 0.0
    %4344 = vmatpush2.xpose.msra.mxu0 0.0
    %4345 = vmatprep.subr.mxu0 0.0
    %4346 = vmatpush2.xpose.msra.mxu0 0.0
    %4347 = vmatprep.subr.mxu0 0.0
    %4348 = vmatpush2.xpose.msra.mxu0 0.0
    %4349 = vmatprep.subr.mxu0 0.0
    %4350 = vmatpush2.xpose.msra.mxu0 0.0
    %4351 = vmatprep.subr.mxu0 0.0
    %4352 = vmatpush2.xpose.msra.mxu0 0.0
    %4353 = vmatprep.subr.mxu0 0.0
    %4354 = vmatpush2.xpose.msra.mxu0 0.0
    %4355 = vmatprep.subr.mxu0 0.0
    %4356 = vmatpush2.xpose.msra.mxu0 0.0
    %4357 = vmatprep.subr.mxu0 0.0
    %4358 = vmatpush2.xpose.msra.mxu0 0.0
    %4359 = vmatprep.subr.mxu0 0.0
    %4360 = vmatpush2.xpose.msra.mxu0 0.0
    %4361 = vmatprep.subr.mxu0 0.0
    %4362 = vmatpush2.xpose.msra.mxu0 0.0
    %4363 = vmatprep.subr.mxu0 0.0
    %4364 = vmatpush2.xpose.msra.mxu0 0.0
    %4365 = vmatprep.subr.mxu0 0.0
    %4366 = vmatpush2.xpose.msra.mxu0 0.0
    %4367 = vmatprep.subr.mxu0 0.0
    %4368 = vmatpush2.xpose.msra.mxu0 0.0
    %4369 = vmatprep.subr.mxu0 0.0
    %4370 = vmatpush2.xpose.msra.mxu0 0.0
    %4371 = vmatprep.mubr.f32.mxu0 0.0
    %4372 = vmatmul.mubr.f32.gmra.mxu0 %v404
    %v4373 = vpop.f32.mrf.mxu0
    %v4374 = vadd.f32 0.0, %v4373
    %v4375 = vpop.f32.mrf.mxu0
    %4376 = vmatprep.mubr.f32.mxu0 0.0
    %4377 = vmatmul.mubr.f32.gmra.mxu0 %v407
    %v4378 = vpop.f32.mrf.mxu0
    %v4379 = vadd.f32 0.0, %v4378
    %v4380 = vpop.f32.mrf.mxu0
    %4381 = vmatprep.mubr.f32.mxu0 0.0
    %4382 = vmatmul.mubr.f32.gmra.mxu0 %v410
    %v4383 = vpop.f32.mrf.mxu0
    %v4384 = vadd.f32 0.0, %v4383
    %v4385 = vpop.f32.mrf.mxu0
    %4386 = vmatprep.mubr.f32.mxu0 0.0
    %4387 = vmatmul.mubr.f32.gmra.mxu0 %v413
    %v4388 = vpop.f32.mrf.mxu0
    %v4389 = vadd.f32 0.0, %v4388
    %v4390 = vpop.f32.mrf.mxu0
    %4391 = vdwg.mxu0
    %v4392 = vsel %vm585, %v4052, 0.0
    %4393 = vadd.xlane.f32.xlu0 %v4392
    %v4394 = vpop.xlane.xlu0 %4393
    %v4395 = vsel %vm585, %v4057, 0.0
    %4396 = vadd.xlane.f32.xlu0 %v4395
    %v4397 = vpop.xlane.xlu0 %4396
    %v4398 = vmul.f32 %v4394, %v592
    %v4399 = vmul.f32 %v4397, %v592
    %v4400 = vsub.f32 %v4052, %v4398
    %v4401 = vsub.f32 %v4057, %v4399
    %v4402 = vmul.f32 %v4400, %v4400
    %v4403 = vmul.f32 %v4401, %v4401
    %v4404 = vsel %vm585, %v4402, 0.0
    %4405 = vadd.xlane.f32.xlu0 %v4404
    %v4406 = vpop.xlane.xlu0 %4405
    %v4407 = vsel %vm585, %v4403, 0.0
    %4408 = vadd.xlane.f32.xlu0 %v4407
    %v4409 = vpop.xlane.xlu0 %4408
    %v4410 = vmul.f32 %v4406, %v592
    %v4411 = vmul.f32 %v4409, %v592
    %v4412 = vadd.f32 %v4410, 1e-05
    %v4413 = vadd.f32 %v4411, 1e-05
    %v4414 = vrsqrt.pop %v4412
    %v4415 = vrsqrt.pop %v4413
    %v4416 = vmul.f32 %v4400, %v4414
    %v4417 = vmul.f32 %v4401, %v4415
    %v4418 = vmul.f32 %v4416, %v616
    %v4419 = vmul.f32 %v4417, %v616
    %v4420 = vadd.f32 %v4418, %v622
    %v4421 = vadd.f32 %v4419, %v622
    %v4422 = vsel %vm585, %v4133, 0.0
    %4423 = vadd.xlane.f32.xlu0 %v4422
    %v4424 = vpop.xlane.xlu0 %4423
    %v4425 = vsel %vm585, %v4138, 0.0
    %4426 = vadd.xlane.f32.xlu0 %v4425
    %v4427 = vpop.xlane.xlu0 %4426
    %v4428 = vmul.f32 %v4424, %v592
    %v4429 = vmul.f32 %v4427, %v592
    %v4430 = vsub.f32 %v4133, %v4428
    %v4431 = vsub.f32 %v4138, %v4429
    %v4432 = vmul.f32 %v4430, %v4430
    %v4433 = vmul.f32 %v4431, %v4431
    %v4434 = vsel %vm585, %v4432, 0.0
    %4435 = vadd.xlane.f32.xlu0 %v4434
    %v4436 = vpop.xlane.xlu0 %4435
    %v4437 = vsel %vm585, %v4433, 0.0
    %4438 = vadd.xlane.f32.xlu0 %v4437
    %v4439 = vpop.xlane.xlu0 %4438
    %v4440 = vmul.f32 %v4436, %v592
    %v4441 = vmul.f32 %v4439, %v592
    %v4442 = vadd.f32 %v4440, 1e-05
    %v4443 = vadd.f32 %v4441, 1e-05
    %v4444 = vrsqrt.pop %v4442
    %v4445 = vrsqrt.pop %v4443
    %v4446 = vmul.f32 %v4430, %v4444
    %v4447 = vmul.f32 %v4431, %v4445
    %v4448 = vmul.f32 %v4446, %v654
    %v4449 = vmul.f32 %v4447, %v654
    %v4450 = vadd.f32 %v4448, %v660
    %v4451 = vadd.f32 %v4449, %v660
    %v4452 = vsel %vm585, %v4289, 0.0
    %4453 = vadd.xlane.f32.xlu0 %v4452
    %v4454 = vpop.xlane.xlu0 %4453
    %v4455 = vsel %vm585, %v4294, 0.0
    %4456 = vadd.xlane.f32.xlu0 %v4455
    %v4457 = vpop.xlane.xlu0 %4456
    %v4458 = vsel %vm585, %v4299, 0.0
    %4459 = vadd.xlane.f32.xlu0 %v4458
    %v4460 = vpop.xlane.xlu0 %4459
    %v4461 = vsel %vm585, %v4304, 0.0
    %4462 = vadd.xlane.f32.xlu0 %v4461
    %v4463 = vpop.xlane.xlu0 %4462
    %v4464 = vmul.f32 %v4454, %v592
    %v4465 = vmul.f32 %v4457, %v592
    %v4466 = vmul.f32 %v4460, %v592
    %v4467 = vmul.f32 %v4463, %v592
    %v4468 = vsub.f32 %v4289, %v4464
    %v4469 = vsub.f32 %v4294, %v4465
    %v4470 = vsub.f32 %v4299, %v4466
    %v4471 = vsub.f32 %v4304, %v4467
    %v4472 = vmul.f32 %v4468, %v4468
    %v4473 = vmul.f32 %v4469, %v4469
    %v4474 = vmul.f32 %v4470, %v4470
    %v4475 = vmul.f32 %v4471, %v4471
    %v4476 = vsel %vm585, %v4472, 0.0
    %4477 = vadd.xlane.f32.xlu0 %v4476
    %v4478 = vpop.xlane.xlu0 %4477
    %v4479 = vsel %vm585, %v4473, 0.0
    %4480 = vadd.xlane.f32.xlu0 %v4479
    %v4481 = vpop.xlane.xlu0 %4480
    %v4482 = vsel %vm585, %v4474, 0.0
    %4483 = vadd.xlane.f32.xlu0 %v4482
    %v4484 = vpop.xlane.xlu0 %4483
    %v4485 = vsel %vm585, %v4475, 0.0
    %4486 = vadd.xlane.f32.xlu0 %v4485
    %v4487 = vpop.xlane.xlu0 %4486
    %v4488 = vmul.f32 %v4478, %v592
    %v4489 = vmul.f32 %v4481, %v592
    %v4490 = vmul.f32 %v4484, %v592
    %v4491 = vmul.f32 %v4487, %v592
    %v4492 = vadd.f32 %v4488, 1e-05
    %v4493 = vadd.f32 %v4489, 1e-05
    %v4494 = vadd.f32 %v4490, 1e-05
    %v4495 = vadd.f32 %v4491, 1e-05
    %v4496 = vrsqrt.pop %v4492
    %v4497 = vrsqrt.pop %v4493
    %v4498 = vrsqrt.pop %v4494
    %v4499 = vrsqrt.pop %v4495
    %v4500 = vmul.f32 %v4468, %v4496
    %v4501 = vmul.f32 %v4469, %v4497
    %v4502 = vmul.f32 %v4470, %v4498
    %v4503 = vmul.f32 %v4471, %v4499
    %v4504 = vmul.f32 %v4500, %v654
    %v4505 = vmul.f32 %v4501, %v654
    %v4506 = vmul.f32 %v4502, %v654
    %v4507 = vmul.f32 %v4503, %v654
    %v4508 = vadd.f32 %v4504, %v660
    %v4509 = vadd.f32 %v4505, %v660
    %v4510 = vadd.f32 %v4506, %v660
    %v4511 = vadd.f32 %v4507, %v660
    %v4513 = vsel %vm585, %v4420, 0
    %v4516 = vsel %vm585, %v4508, 0
    %v4519 = vsel %vm585, %v4509, 0
    %4521 = vmatprep.subr.mxu0 0.0
    %4522 = vmatpush1.xpose.msra.mxu0 0.0
    %4523 = vmatprep.subr.mxu0 0.0
    %4524 = vmatpush1.xpose.msra.mxu0 0.0
    %4525 = vmatprep.subr.mxu0 0.0
    %4526 = vmatpush1.xpose.msra.mxu0 0.0
    %4527 = vmatprep.subr.mxu0 0.0
    %4528 = vmatpush1.xpose.msra.mxu0 0.0
    %4529 = vmatprep.subr.mxu0 0.0
    %4530 = vmatpush1.xpose.msra.mxu0 0.0
    %4531 = vmatprep.subr.mxu0 0.0
    %4532 = vmatpush1.xpose.msra.mxu0 0.0
    %4533 = vmatprep.subr.mxu0 0.0
    %4534 = vmatpush1.xpose.msra.mxu0 0.0
    %4535 = vmatprep.subr.mxu0 0.0
    %4536 = vmatpush1.xpose.msra.mxu0 0.0
    %4537 = vmatprep.subr.mxu0 0.0
    %4538 = vmatpush1.xpose.msra.mxu0 0.0
    %4539 = vmatprep.subr.mxu0 0.0
    %4540 = vmatpush1.xpose.msra.mxu0 0.0
    %4541 = vmatprep.subr.mxu0 0.0
    %4542 = vmatpush1.xpose.msra.mxu0 0.0
    %4543 = vmatprep.subr.mxu0 0.0
    %4544 = vmatpush1.xpose.msra.mxu0 0.0
    %4545 = vmatprep.subr.mxu0 0.0
    %4546 = vmatpush1.xpose.msra.mxu0 0.0
    %4547 = vmatprep.subr.mxu0 0.0
    %4548 = vmatpush1.xpose.msra.mxu0 0.0
    %4549 = vmatprep.subr.mxu0 0.0
    %4550 = vmatpush1.xpose.msra.mxu0 %v4519
    %4551 = vmatprep.subr.mxu0 0.0
    %4552 = vmatpush1.xpose.msra.mxu0 %v4516
    %4553 = vmatprep.subr.mxu0 0.0
    %4554 = vmatpush2.xpose.msra.mxu0 0.0
    %4555 = vmatprep.subr.mxu0 0.0
    %4556 = vmatpush2.xpose.msra.mxu0 0.0
    %4557 = vmatprep.subr.mxu0 0.0
    %4558 = vmatpush2.xpose.msra.mxu0 0.0
    %4559 = vmatprep.subr.mxu0 0.0
    %4560 = vmatpush2.xpose.msra.mxu0 0.0
    %4561 = vmatprep.subr.mxu0 0.0
    %4562 = vmatpush2.xpose.msra.mxu0 0.0
    %4563 = vmatprep.subr.mxu0 0.0
    %4564 = vmatpush2.xpose.msra.mxu0 0.0
    %4565 = vmatprep.subr.mxu0 0.0
    %4566 = vmatpush2.xpose.msra.mxu0 0.0
    %4567 = vmatprep.subr.mxu0 0.0
    %4568 = vmatpush2.xpose.msra.mxu0 0.0
    %4569 = vmatprep.subr.mxu0 0.0
    %4570 = vmatpush2.xpose.msra.mxu0 0.0
    %4571 = vmatprep.subr.mxu0 0.0
    %4572 = vmatpush2.xpose.msra.mxu0 0.0
    %4573 = vmatprep.subr.mxu0 0.0
    %4574 = vmatpush2.xpose.msra.mxu0 0.0
    %4575 = vmatprep.subr.mxu0 0.0
    %4576 = vmatpush2.xpose.msra.mxu0 0.0
    %4577 = vmatprep.subr.mxu0 0.0
    %4578 = vmatpush2.xpose.msra.mxu0 0.0
    %4579 = vmatprep.subr.mxu0 0.0
    %4580 = vmatpush2.xpose.msra.mxu0 0.0
    %4581 = vmatprep.subr.mxu0 0.0
    %4582 = vmatpush2.xpose.msra.mxu0 0.0
    %4583 = vmatprep.subr.mxu0 0.0
    %4584 = vmatpush2.xpose.msra.mxu0 0.0
    %4585 = vmatprep.mubr.f32.mxu0 0.0
    %4586 = vmatmul.mubr.f32.gmra.mxu0 %v4513
    %v4587 = vpop.f32.mrf.mxu0
    %v4588 = vadd.f32 0.0, %v4587
    %v4589 = vpop.f32.mrf.mxu0
    %4590 = vdwg.mxu0
    %v4592 = vsel %vm585, %v4421, 0
    %v4595 = vsel %vm585, %v4510, 0
    %v4598 = vsel %vm585, %v4511, 0
    %4600 = vmatprep.subr.mxu0 0.0
    %4601 = vmatpush1.xpose.msra.mxu0 0.0
    %4602 = vmatprep.subr.mxu0 0.0
    %4603 = vmatpush1.xpose.msra.mxu0 0.0
    %4604 = vmatprep.subr.mxu0 0.0
    %4605 = vmatpush1.xpose.msra.mxu0 0.0
    %4606 = vmatprep.subr.mxu0 0.0
    %4607 = vmatpush1.xpose.msra.mxu0 0.0
    %4608 = vmatprep.subr.mxu0 0.0
    %4609 = vmatpush1.xpose.msra.mxu0 0.0
    %4610 = vmatprep.subr.mxu0 0.0
    %4611 = vmatpush1.xpose.msra.mxu0 0.0
    %4612 = vmatprep.subr.mxu0 0.0
    %4613 = vmatpush1.xpose.msra.mxu0 0.0
    %4614 = vmatprep.subr.mxu0 0.0
    %4615 = vmatpush1.xpose.msra.mxu0 0.0
    %4616 = vmatprep.subr.mxu0 0.0
    %4617 = vmatpush1.xpose.msra.mxu0 0.0
    %4618 = vmatprep.subr.mxu0 0.0
    %4619 = vmatpush1.xpose.msra.mxu0 0.0
    %4620 = vmatprep.subr.mxu0 0.0
    %4621 = vmatpush1.xpose.msra.mxu0 0.0
    %4622 = vmatprep.subr.mxu0 0.0
    %4623 = vmatpush1.xpose.msra.mxu0 0.0
    %4624 = vmatprep.subr.mxu0 0.0
    %4625 = vmatpush1.xpose.msra.mxu0 0.0
    %4626 = vmatprep.subr.mxu0 0.0
    %4627 = vmatpush1.xpose.msra.mxu0 0.0
    %4628 = vmatprep.subr.mxu0 0.0
    %4629 = vmatpush1.xpose.msra.mxu0 %v4598
    %4630 = vmatprep.subr.mxu0 0.0
    %4631 = vmatpush1.xpose.msra.mxu0 %v4595
    %4632 = vmatprep.subr.mxu0 0.0
    %4633 = vmatpush2.xpose.msra.mxu0 0.0
    %4634 = vmatprep.subr.mxu0 0.0
    %4635 = vmatpush2.xpose.msra.mxu0 0.0
    %4636 = vmatprep.subr.mxu0 0.0
    %4637 = vmatpush2.xpose.msra.mxu0 0.0
    %4638 = vmatprep.subr.mxu0 0.0
    %4639 = vmatpush2.xpose.msra.mxu0 0.0
    %4640 = vmatprep.subr.mxu0 0.0
    %4641 = vmatpush2.xpose.msra.mxu0 0.0
    %4642 = vmatprep.subr.mxu0 0.0
    %4643 = vmatpush2.xpose.msra.mxu0 0.0
    %4644 = vmatprep.subr.mxu0 0.0
    %4645 = vmatpush2.xpose.msra.mxu0 0.0
    %4646 = vmatprep.subr.mxu0 0.0
    %4647 = vmatpush2.xpose.msra.mxu0 0.0
    %4648 = vmatprep.subr.mxu0 0.0
    %4649 = vmatpush2.xpose.msra.mxu0 0.0
    %4650 = vmatprep.subr.mxu0 0.0
    %4651 = vmatpush2.xpose.msra.mxu0 0.0
    %4652 = vmatprep.subr.mxu0 0.0
    %4653 = vmatpush2.xpose.msra.mxu0 0.0
    %4654 = vmatprep.subr.mxu0 0.0
    %4655 = vmatpush2.xpose.msra.mxu0 0.0
    %4656 = vmatprep.subr.mxu0 0.0
    %4657 = vmatpush2.xpose.msra.mxu0 0.0
    %4658 = vmatprep.subr.mxu0 0.0
    %4659 = vmatpush2.xpose.msra.mxu0 0.0
    %4660 = vmatprep.subr.mxu0 0.0
    %4661 = vmatpush2.xpose.msra.mxu0 0.0
    %4662 = vmatprep.subr.mxu0 0.0
    %4663 = vmatpush2.xpose.msra.mxu0 0.0
    %4664 = vmatprep.mubr.f32.mxu0 0.0
    %4665 = vmatmul.mubr.f32.gmra.mxu0 %v4592
    %v4666 = vpop.f32.mrf.mxu0
    %v4667 = vadd.f32 0.0, %v4666
    %v4668 = vpop.f32.mrf.mxu0
    %4669 = vdwg.mxu0
    %v4671 = vsel %vm585, %v4450, 0
    %4673 = vmatprep.subr.mxu0 0.0
    %4674 = vmatpush1.xpose.msra.mxu0 0.0
    %4675 = vmatprep.subr.mxu0 0.0
    %4676 = vmatpush1.xpose.msra.mxu0 0.0
    %4677 = vmatprep.subr.mxu0 0.0
    %4678 = vmatpush1.xpose.msra.mxu0 0.0
    %4679 = vmatprep.subr.mxu0 0.0
    %4680 = vmatpush1.xpose.msra.mxu0 0.0
    %4681 = vmatprep.subr.mxu0 0.0
    %4682 = vmatpush1.xpose.msra.mxu0 0.0
    %4683 = vmatprep.subr.mxu0 0.0
    %4684 = vmatpush1.xpose.msra.mxu0 0.0
    %4685 = vmatprep.subr.mxu0 0.0
    %4686 = vmatpush1.xpose.msra.mxu0 0.0
    %4687 = vmatprep.subr.mxu0 0.0
    %4688 = vmatpush1.xpose.msra.mxu0 0.0
    %4689 = vmatprep.subr.mxu0 0.0
    %4690 = vmatpush1.xpose.msra.mxu0 0.0
    %4691 = vmatprep.subr.mxu0 0.0
    %4692 = vmatpush1.xpose.msra.mxu0 0.0
    %4693 = vmatprep.subr.mxu0 0.0
    %4694 = vmatpush1.xpose.msra.mxu0 0.0
    %4695 = vmatprep.subr.mxu0 0.0
    %4696 = vmatpush1.xpose.msra.mxu0 0.0
    %4697 = vmatprep.subr.mxu0 0.0
    %4698 = vmatpush1.xpose.msra.mxu0 0.0
    %4699 = vmatprep.subr.mxu0 0.0
    %4700 = vmatpush1.xpose.msra.mxu0 0.0
    %4701 = vmatprep.subr.mxu0 0.0
    %4702 = vmatpush1.xpose.msra.mxu0 0.0
    %4703 = vmatprep.subr.mxu0 0.0
    %4704 = vmatpush1.xpose.msra.mxu0 %v4671
    %4705 = vmatprep.subr.mxu0 0.0
    %4706 = vmatpush2.xpose.msra.mxu0 0.0
    %4707 = vmatprep.subr.mxu0 0.0
    %4708 = vmatpush2.xpose.msra.mxu0 0.0
    %4709 = vmatprep.subr.mxu0 0.0
    %4710 = vmatpush2.xpose.msra.mxu0 0.0
    %4711 = vmatprep.subr.mxu0 0.0
    %4712 = vmatpush2.xpose.msra.mxu0 0.0
    %4713 = vmatprep.subr.mxu0 0.0
    %4714 = vmatpush2.xpose.msra.mxu0 0.0
    %4715 = vmatprep.subr.mxu0 0.0
    %4716 = vmatpush2.xpose.msra.mxu0 0.0
    %4717 = vmatprep.subr.mxu0 0.0
    %4718 = vmatpush2.xpose.msra.mxu0 0.0
    %4719 = vmatprep.subr.mxu0 0.0
    %4720 = vmatpush2.xpose.msra.mxu0 0.0
    %4721 = vmatprep.subr.mxu0 0.0
    %4722 = vmatpush2.xpose.msra.mxu0 0.0
    %4723 = vmatprep.subr.mxu0 0.0
    %4724 = vmatpush2.xpose.msra.mxu0 0.0
    %4725 = vmatprep.subr.mxu0 0.0
    %4726 = vmatpush2.xpose.msra.mxu0 0.0
    %4727 = vmatprep.subr.mxu0 0.0
    %4728 = vmatpush2.xpose.msra.mxu0 0.0
    %4729 = vmatprep.subr.mxu0 0.0
    %4730 = vmatpush2.xpose.msra.mxu0 0.0
    %4731 = vmatprep.subr.mxu0 0.0
    %4732 = vmatpush2.xpose.msra.mxu0 0.0
    %4733 = vmatprep.subr.mxu0 0.0
    %4734 = vmatpush2.xpose.msra.mxu0 0.0
    %4735 = vmatprep.subr.mxu0 0.0
    %4736 = vmatpush2.xpose.msra.mxu0 0.0
    %4737 = vmatprep.mubr.f32.mxu0 0.0
    %4738 = vmatmul.mubr.f32.gmra.mxu0 %v4513
    %v4739 = vpop.f32.mrf.mxu0
    %v4740 = vadd.f32 0.0, %v4739
    %v4741 = vpop.f32.mrf.mxu0
    %4742 = vdwg.mxu0
    %v4744 = vsel %vm585, %v4451, 0
    %4746 = vmatprep.subr.mxu0 0.0
    %4747 = vmatpush1.xpose.msra.mxu0 0.0
    %4748 = vmatprep.subr.mxu0 0.0
    %4749 = vmatpush1.xpose.msra.mxu0 0.0
    %4750 = vmatprep.subr.mxu0 0.0
    %4751 = vmatpush1.xpose.msra.mxu0 0.0
    %4752 = vmatprep.subr.mxu0 0.0
    %4753 = vmatpush1.xpose.msra.mxu0 0.0
    %4754 = vmatprep.subr.mxu0 0.0
    %4755 = vmatpush1.xpose.msra.mxu0 0.0
    %4756 = vmatprep.subr.mxu0 0.0
    %4757 = vmatpush1.xpose.msra.mxu0 0.0
    %4758 = vmatprep.subr.mxu0 0.0
    %4759 = vmatpush1.xpose.msra.mxu0 0.0
    %4760 = vmatprep.subr.mxu0 0.0
    %4761 = vmatpush1.xpose.msra.mxu0 0.0
    %4762 = vmatprep.subr.mxu0 0.0
    %4763 = vmatpush1.xpose.msra.mxu0 0.0
    %4764 = vmatprep.subr.mxu0 0.0
    %4765 = vmatpush1.xpose.msra.mxu0 0.0
    %4766 = vmatprep.subr.mxu0 0.0
    %4767 = vmatpush1.xpose.msra.mxu0 0.0
    %4768 = vmatprep.subr.mxu0 0.0
    %4769 = vmatpush1.xpose.msra.mxu0 0.0
    %4770 = vmatprep.subr.mxu0 0.0
    %4771 = vmatpush1.xpose.msra.mxu0 0.0
    %4772 = vmatprep.subr.mxu0 0.0
    %4773 = vmatpush1.xpose.msra.mxu0 0.0
    %4774 = vmatprep.subr.mxu0 0.0
    %4775 = vmatpush1.xpose.msra.mxu0 0.0
    %4776 = vmatprep.subr.mxu0 0.0
    %4777 = vmatpush1.xpose.msra.mxu0 %v4744
    %4778 = vmatprep.subr.mxu0 0.0
    %4779 = vmatpush2.xpose.msra.mxu0 0.0
    %4780 = vmatprep.subr.mxu0 0.0
    %4781 = vmatpush2.xpose.msra.mxu0 0.0
    %4782 = vmatprep.subr.mxu0 0.0
    %4783 = vmatpush2.xpose.msra.mxu0 0.0
    %4784 = vmatprep.subr.mxu0 0.0
    %4785 = vmatpush2.xpose.msra.mxu0 0.0
    %4786 = vmatprep.subr.mxu0 0.0
    %4787 = vmatpush2.xpose.msra.mxu0 0.0
    %4788 = vmatprep.subr.mxu0 0.0
    %4789 = vmatpush2.xpose.msra.mxu0 0.0
    %4790 = vmatprep.subr.mxu0 0.0
    %4791 = vmatpush2.xpose.msra.mxu0 0.0
    %4792 = vmatprep.subr.mxu0 0.0
    %4793 = vmatpush2.xpose.msra.mxu0 0.0
    %4794 = vmatprep.subr.mxu0 0.0
    %4795 = vmatpush2.xpose.msra.mxu0 0.0
    %4796 = vmatprep.subr.mxu0 0.0
    %4797 = vmatpush2.xpose.msra.mxu0 0.0
    %4798 = vmatprep.subr.mxu0 0.0
    %4799 = vmatpush2.xpose.msra.mxu0 0.0
    %4800 = vmatprep.subr.mxu0 0.0
    %4801 = vmatpush2.xpose.msra.mxu0 0.0
    %4802 = vmatprep.subr.mxu0 0.0
    %4803 = vmatpush2.xpose.msra.mxu0 0.0
    %4804 = vmatprep.subr.mxu0 0.0
    %4805 = vmatpush2.xpose.msra.mxu0 0.0
    %4806 = vmatprep.subr.mxu0 0.0
    %4807 = vmatpush2.xpose.msra.mxu0 0.0
    %4808 = vmatprep.subr.mxu0 0.0
    %4809 = vmatpush2.xpose.msra.mxu0 0.0
    %4810 = vmatprep.mubr.f32.mxu0 0.0
    %4811 = vmatmul.mubr.f32.gmra.mxu0 %v4592
    %v4812 = vpop.f32.mrf.mxu0
    %v4813 = vadd.f32 0.0, %v4812
    %v4814 = vpop.f32.mrf.mxu0
    %4815 = vdwg.mxu0
    %v4816 = vsel %vm585, %v4588, -inf
    %4817 = vmax.xlane.f32.xlu0 %v4816
    %v4818 = vpop.xlane.xlu0 %4817
    %v4819 = vsel %vm585, %v4667, -inf
    %4820 = vmax.xlane.f32.xlu0 %v4819
    %v4821 = vpop.xlane.xlu0 %4820
    %v4822 = vsel %vm1033, %v4740, -inf
    %4823 = vmax.xlane.f32.xlu0 %v4822
    %v4824 = vpop.xlane.xlu0 %4823
    %v4825 = vsel %vm1033, %v4813, -inf
    %4826 = vmax.xlane.f32.xlu0 %v4825
    %v4827 = vpop.xlane.xlu0 %4826
    %v4828 = vmax.f32 %v4818, %v4824
    %v4829 = vmax.f32 %v4821, %v4827
    %v4830 = vsub.f32 %v4588, %v4828
    %v4831 = vsub.f32 %v4667, %v4829
    %v4832 = vmul.f32 %v4830, 1.442695
    %v4833 = vpow.pop %v4832
    %v4834 = vmul.f32 %v4831, 1.442695
    %v4835 = vpow.pop %v4834
    %v4836 = vsub.f32 %v4740, %v4828
    %v4837 = vsub.f32 %v4813, %v4829
    %v4838 = vmul.f32 %v4836, 1.442695
    %v4839 = vpow.pop %v4838
    %v4840 = vmul.f32 %v4837, 1.442695
    %v4841 = vpow.pop %v4840
    %v4842 = vsel %vm585, %v4833, 0.0
    %4843 = vadd.xlane.f32.xlu0 %v4842
    %v4844 = vpop.xlane.xlu0 %4843
    %v4845 = vsel %vm585, %v4835, 0.0
    %4846 = vadd.xlane.f32.xlu0 %v4845
    %v4847 = vpop.xlane.xlu0 %4846
    %v4848 = vsel %vm1033, %v4839, 0.0
    %4849 = vadd.xlane.f32.xlu0 %v4848
    %v4850 = vpop.xlane.xlu0 %4849
    %v4851 = vsel %vm1033, %v4841, 0.0
    %4852 = vadd.xlane.f32.xlu0 %v4851
    %v4853 = vpop.xlane.xlu0 %4852
    %v4854 = vadd.f32 %v4844, %v4850
    %v4855 = vadd.f32 %v4847, %v4853
    %v4857 = vsel %vm1033, %v4839, 0
    %4859 = vmatprep.subr.mxu0 0.0
    %4860 = vmatpush1.msra.mxu0 0.0
    %4861 = vmatprep.subr.mxu0 0.0
    %4862 = vmatpush1.msra.mxu0 0.0
    %4863 = vmatprep.subr.mxu0 0.0
    %4864 = vmatpush1.msra.mxu0 0.0
    %4865 = vmatprep.subr.mxu0 0.0
    %4866 = vmatpush1.msra.mxu0 0.0
    %4867 = vmatprep.subr.mxu0 0.0
    %4868 = vmatpush1.msra.mxu0 0.0
    %4869 = vmatprep.subr.mxu0 0.0
    %4870 = vmatpush1.msra.mxu0 0.0
    %4871 = vmatprep.subr.mxu0 0.0
    %4872 = vmatpush1.msra.mxu0 0.0
    %4873 = vmatprep.subr.mxu0 0.0
    %4874 = vmatpush1.msra.mxu0 0.0
    %4875 = vmatprep.subr.mxu0 0.0
    %4876 = vmatpush1.msra.mxu0 0.0
    %4877 = vmatprep.subr.mxu0 0.0
    %4878 = vmatpush1.msra.mxu0 0.0
    %4879 = vmatprep.subr.mxu0 0.0
    %4880 = vmatpush1.msra.mxu0 0.0
    %4881 = vmatprep.subr.mxu0 0.0
    %4882 = vmatpush1.msra.mxu0 0.0
    %4883 = vmatprep.subr.mxu0 0.0
    %4884 = vmatpush1.msra.mxu0 0.0
    %4885 = vmatprep.subr.mxu0 0.0
    %4886 = vmatpush1.msra.mxu0 0.0
    %4887 = vmatprep.subr.mxu0 0.0
    %4888 = vmatpush1.msra.mxu0 0.0
    %4889 = vmatprep.subr.mxu0 0.0
    %4890 = vmatpush1.msra.mxu0 %v4214
    %4891 = vmatprep.subr.mxu0 0.0
    %4892 = vmatpush2.msra.mxu0 0.0
    %4893 = vmatprep.subr.mxu0 0.0
    %4894 = vmatpush2.msra.mxu0 0.0
    %4895 = vmatprep.subr.mxu0 0.0
    %4896 = vmatpush2.msra.mxu0 0.0
    %4897 = vmatprep.subr.mxu0 0.0
    %4898 = vmatpush2.msra.mxu0 0.0
    %4899 = vmatprep.subr.mxu0 0.0
    %4900 = vmatpush2.msra.mxu0 0.0
    %4901 = vmatprep.subr.mxu0 0.0
    %4902 = vmatpush2.msra.mxu0 0.0
    %4903 = vmatprep.subr.mxu0 0.0
    %4904 = vmatpush2.msra.mxu0 0.0
    %4905 = vmatprep.subr.mxu0 0.0
    %4906 = vmatpush2.msra.mxu0 0.0
    %4907 = vmatprep.subr.mxu0 0.0
    %4908 = vmatpush2.msra.mxu0 0.0
    %4909 = vmatprep.subr.mxu0 0.0
    %4910 = vmatpush2.msra.mxu0 0.0
    %4911 = vmatprep.subr.mxu0 0.0
    %4912 = vmatpush2.msra.mxu0 0.0
    %4913 = vmatprep.subr.mxu0 0.0
    %4914 = vmatpush2.msra.mxu0 0.0
    %4915 = vmatprep.subr.mxu0 0.0
    %4916 = vmatpush2.msra.mxu0 0.0
    %4917 = vmatprep.subr.mxu0 0.0
    %4918 = vmatpush2.msra.mxu0 0.0
    %4919 = vmatprep.subr.mxu0 0.0
    %4920 = vmatpush2.msra.mxu0 0.0
    %4921 = vmatprep.subr.mxu0 0.0
    %4922 = vmatpush2.msra.mxu0 0.0
    %4923 = vmatprep.mubr.f32.mxu0 0.0
    %4924 = vmatmul.mubr.f32.gmra.mxu0 %v4857
    %v4925 = vpop.f32.mrf.mxu0
    %v4926 = vadd.f32 0.0, %v4925
    %v4927 = vpop.f32.mrf.mxu0
    %4928 = vdwg.mxu0
    %v4930 = vsel %vm1033, %v4841, 0
    %4932 = vmatprep.subr.mxu0 0.0
    %4933 = vmatpush1.msra.mxu0 0.0
    %4934 = vmatprep.subr.mxu0 0.0
    %4935 = vmatpush1.msra.mxu0 0.0
    %4936 = vmatprep.subr.mxu0 0.0
    %4937 = vmatpush1.msra.mxu0 0.0
    %4938 = vmatprep.subr.mxu0 0.0
    %4939 = vmatpush1.msra.mxu0 0.0
    %4940 = vmatprep.subr.mxu0 0.0
    %4941 = vmatpush1.msra.mxu0 0.0
    %4942 = vmatprep.subr.mxu0 0.0
    %4943 = vmatpush1.msra.mxu0 0.0
    %4944 = vmatprep.subr.mxu0 0.0
    %4945 = vmatpush1.msra.mxu0 0.0
    %4946 = vmatprep.subr.mxu0 0.0
    %4947 = vmatpush1.msra.mxu0 0.0
    %4948 = vmatprep.subr.mxu0 0.0
    %4949 = vmatpush1.msra.mxu0 0.0
    %4950 = vmatprep.subr.mxu0 0.0
    %4951 = vmatpush1.msra.mxu0 0.0
    %4952 = vmatprep.subr.mxu0 0.0
    %4953 = vmatpush1.msra.mxu0 0.0
    %4954 = vmatprep.subr.mxu0 0.0
    %4955 = vmatpush1.msra.mxu0 0.0
    %4956 = vmatprep.subr.mxu0 0.0
    %4957 = vmatpush1.msra.mxu0 0.0
    %4958 = vmatprep.subr.mxu0 0.0
    %4959 = vmatpush1.msra.mxu0 0.0
    %4960 = vmatprep.subr.mxu0 0.0
    %4961 = vmatpush1.msra.mxu0 0.0
    %4962 = vmatprep.subr.mxu0 0.0
    %4963 = vmatpush1.msra.mxu0 %v4219
    %4964 = vmatprep.subr.mxu0 0.0
    %4965 = vmatpush2.msra.mxu0 0.0
    %4966 = vmatprep.subr.mxu0 0.0
    %4967 = vmatpush2.msra.mxu0 0.0
    %4968 = vmatprep.subr.mxu0 0.0
    %4969 = vmatpush2.msra.mxu0 0.0
    %4970 = vmatprep.subr.mxu0 0.0
    %4971 = vmatpush2.msra.mxu0 0.0
    %4972 = vmatprep.subr.mxu0 0.0
    %4973 = vmatpush2.msra.mxu0 0.0
    %4974 = vmatprep.subr.mxu0 0.0
    %4975 = vmatpush2.msra.mxu0 0.0
    %4976 = vmatprep.subr.mxu0 0.0
    %4977 = vmatpush2.msra.mxu0 0.0
    %4978 = vmatprep.subr.mxu0 0.0
    %4979 = vmatpush2.msra.mxu0 0.0
    %4980 = vmatprep.subr.mxu0 0.0
    %4981 = vmatpush2.msra.mxu0 0.0
    %4982 = vmatprep.subr.mxu0 0.0
    %4983 = vmatpush2.msra.mxu0 0.0
    %4984 = vmatprep.subr.mxu0 0.0
    %4985 = vmatpush2.msra.mxu0 0.0
    %4986 = vmatprep.subr.mxu0 0.0
    %4987 = vmatpush2.msra.mxu0 0.0
    %4988 = vmatprep.subr.mxu0 0.0
    %4989 = vmatpush2.msra.mxu0 0.0
    %4990 = vmatprep.subr.mxu0 0.0
    %4991 = vmatpush2.msra.mxu0 0.0
    %4992 = vmatprep.subr.mxu0 0.0
    %4993 = vmatpush2.msra.mxu0 0.0
    %4994 = vmatprep.subr.mxu0 0.0
    %4995 = vmatpush2.msra.mxu0 0.0
    %4996 = vmatprep.mubr.f32.mxu0 0.0
    %4997 = vmatmul.mubr.f32.gmra.mxu0 %v4930
    %v4998 = vpop.f32.mrf.mxu0
    %v4999 = vadd.f32 0.0, %v4998
    %v5000 = vpop.f32.mrf.mxu0
    %5001 = vdwg.mxu0
    %v5003 = vsel %vm585, %v4833, 0
    %5005 = vmatprep.subr.mxu0 0.0
    %5006 = vmatpush1.msra.mxu0 0.0
    %5007 = vmatprep.subr.mxu0 0.0
    %5008 = vmatpush1.msra.mxu0 0.0
    %5009 = vmatprep.subr.mxu0 0.0
    %5010 = vmatpush1.msra.mxu0 0.0
    %5011 = vmatprep.subr.mxu0 0.0
    %5012 = vmatpush1.msra.mxu0 0.0
    %5013 = vmatprep.subr.mxu0 0.0
    %5014 = vmatpush1.msra.mxu0 0.0
    %5015 = vmatprep.subr.mxu0 0.0
    %5016 = vmatpush1.msra.mxu0 0.0
    %5017 = vmatprep.subr.mxu0 0.0
    %5018 = vmatpush1.msra.mxu0 0.0
    %5019 = vmatprep.subr.mxu0 0.0
    %5020 = vmatpush1.msra.mxu0 0.0
    %5021 = vmatprep.subr.mxu0 0.0
    %5022 = vmatpush1.msra.mxu0 0.0
    %5023 = vmatprep.subr.mxu0 0.0
    %5024 = vmatpush1.msra.mxu0 0.0
    %5025 = vmatprep.subr.mxu0 0.0
    %5026 = vmatpush1.msra.mxu0 0.0
    %5027 = vmatprep.subr.mxu0 0.0
    %5028 = vmatpush1.msra.mxu0 0.0
    %5029 = vmatprep.subr.mxu0 0.0
    %5030 = vmatpush1.msra.mxu0 0.0
    %5031 = vmatprep.subr.mxu0 0.0
    %5032 = vmatpush1.msra.mxu0 0.0
    %5033 = vmatprep.subr.mxu0 0.0
    %5034 = vmatpush1.msra.mxu0 %v4379
    %5035 = vmatprep.subr.mxu0 0.0
    %5036 = vmatpush1.msra.mxu0 %v4374
    %5037 = vmatprep.subr.mxu0 0.0
    %5038 = vmatpush2.msra.mxu0 0.0
    %5039 = vmatprep.subr.mxu0 0.0
    %5040 = vmatpush2.msra.mxu0 0.0
    %5041 = vmatprep.subr.mxu0 0.0
    %5042 = vmatpush2.msra.mxu0 0.0
    %5043 = vmatprep.subr.mxu0 0.0
    %5044 = vmatpush2.msra.mxu0 0.0
    %5045 = vmatprep.subr.mxu0 0.0
    %5046 = vmatpush2.msra.mxu0 0.0
    %5047 = vmatprep.subr.mxu0 0.0
    %5048 = vmatpush2.msra.mxu0 0.0
    %5049 = vmatprep.subr.mxu0 0.0
    %5050 = vmatpush2.msra.mxu0 0.0
    %5051 = vmatprep.subr.mxu0 0.0
    %5052 = vmatpush2.msra.mxu0 0.0
    %5053 = vmatprep.subr.mxu0 0.0
    %5054 = vmatpush2.msra.mxu0 0.0
    %5055 = vmatprep.subr.mxu0 0.0
    %5056 = vmatpush2.msra.mxu0 0.0
    %5057 = vmatprep.subr.mxu0 0.0
    %5058 = vmatpush2.msra.mxu0 0.0
    %5059 = vmatprep.subr.mxu0 0.0
    %5060 = vmatpush2.msra.mxu0 0.0
    %5061 = vmatprep.subr.mxu0 0.0
    %5062 = vmatpush2.msra.mxu0 0.0
    %5063 = vmatprep.subr.mxu0 0.0
    %5064 = vmatpush2.msra.mxu0 0.0
    %5065 = vmatprep.subr.mxu0 0.0
    %5066 = vmatpush2.msra.mxu0 0.0
    %5067 = vmatprep.subr.mxu0 0.0
    %5068 = vmatpush2.msra.mxu0 0.0
    %5069 = vmatprep.mubr.f32.mxu0 0.0
    %5070 = vmatmul.mubr.f32.gmra.mxu0 %v5003
    %v5071 = vpop.f32.mrf.mxu0
    %v5072 = vadd.f32 %v4926, %v5071
    %v5073 = vpop.f32.mrf.mxu0
    %5074 = vdwg.mxu0
    %v5076 = vsel %vm585, %v4835, 0
    %5078 = vmatprep.subr.mxu0 0.0
    %5079 = vmatpush1.msra.mxu0 0.0
    %5080 = vmatprep.subr.mxu0 0.0
    %5081 = vmatpush1.msra.mxu0 0.0
    %5082 = vmatprep.subr.mxu0 0.0
    %5083 = vmatpush1.msra.mxu0 0.0
    %5084 = vmatprep.subr.mxu0 0.0
    %5085 = vmatpush1.msra.mxu0 0.0
    %5086 = vmatprep.subr.mxu0 0.0
    %5087 = vmatpush1.msra.mxu0 0.0
    %5088 = vmatprep.subr.mxu0 0.0
    %5089 = vmatpush1.msra.mxu0 0.0
    %5090 = vmatprep.subr.mxu0 0.0
    %5091 = vmatpush1.msra.mxu0 0.0
    %5092 = vmatprep.subr.mxu0 0.0
    %5093 = vmatpush1.msra.mxu0 0.0
    %5094 = vmatprep.subr.mxu0 0.0
    %5095 = vmatpush1.msra.mxu0 0.0
    %5096 = vmatprep.subr.mxu0 0.0
    %5097 = vmatpush1.msra.mxu0 0.0
    %5098 = vmatprep.subr.mxu0 0.0
    %5099 = vmatpush1.msra.mxu0 0.0
    %5100 = vmatprep.subr.mxu0 0.0
    %5101 = vmatpush1.msra.mxu0 0.0
    %5102 = vmatprep.subr.mxu0 0.0
    %5103 = vmatpush1.msra.mxu0 0.0
    %5104 = vmatprep.subr.mxu0 0.0
    %5105 = vmatpush1.msra.mxu0 0.0
    %5106 = vmatprep.subr.mxu0 0.0
    %5107 = vmatpush1.msra.mxu0 %v4389
    %5108 = vmatprep.subr.mxu0 0.0
    %5109 = vmatpush1.msra.mxu0 %v4384
    %5110 = vmatprep.subr.mxu0 0.0
    %5111 = vmatpush2.msra.mxu0 0.0
    %5112 = vmatprep.subr.mxu0 0.0
    %5113 = vmatpush2.msra.mxu0 0.0
    %5114 = vmatprep.subr.mxu0 0.0
    %5115 = vmatpush2.msra.mxu0 0.0
    %5116 = vmatprep.subr.mxu0 0.0
    %5117 = vmatpush2.msra.mxu0 0.0
    %5118 = vmatprep.subr.mxu0 0.0
    %5119 = vmatpush2.msra.mxu0 0.0
    %5120 = vmatprep.subr.mxu0 0.0
    %5121 = vmatpush2.msra.mxu0 0.0
    %5122 = vmatprep.subr.mxu0 0.0
    %5123 = vmatpush2.msra.mxu0 0.0
    %5124 = vmatprep.subr.mxu0 0.0
    %5125 = vmatpush2.msra.mxu0 0.0
    %5126 = vmatprep.subr.mxu0 0.0
    %5127 = vmatpush2.msra.mxu0 0.0
    %5128 = vmatprep.subr.mxu0 0.0
    %5129 = vmatpush2.msra.mxu0 0.0
    %5130 = vmatprep.subr.mxu0 0.0
    %5131 = vmatpush2.msra.mxu0 0.0
    %5132 = vmatprep.subr.mxu0 0.0
    %5133 = vmatpush2.msra.mxu0 0.0
    %5134 = vmatprep.subr.mxu0 0.0
    %5135 = vmatpush2.msra.mxu0 0.0
    %5136 = vmatprep.subr.mxu0 0.0
    %5137 = vmatpush2.msra.mxu0 0.0
    %5138 = vmatprep.subr.mxu0 0.0
    %5139 = vmatpush2.msra.mxu0 0.0
    %5140 = vmatprep.subr.mxu0 0.0
    %5141 = vmatpush2.msra.mxu0 0.0
    %5142 = vmatprep.mubr.f32.mxu0 0.0
    %5143 = vmatmul.mubr.f32.gmra.mxu0 %v5076
    %v5144 = vpop.f32.mrf.mxu0
    %v5145 = vadd.f32 %v4999, %v5144
    %v5146 = vpop.f32.mrf.mxu0
    %5147 = vdwg.mxu0
    %v5148 = vrcp.pop %v4854
    %v5149 = vrcp.pop %v4855
    %v5150 = vmul.f32 %v5072, %v5148
    %v5151 = vmul.f32 %v5145, %v5149
    %v5153 = vsel %vm585, %v5150, 0
    %v5156 = vsel %vm585, %v5151, 0
    %5158 = vmatprep.subr.mxu0 0.0
    %5159 = vmatpush1.msra.mxu0 0.0
    %5160 = vmatprep.subr.mxu0 0.0
    %5161 = vmatpush1.msra.mxu0 0.0
    %5162 = vmatprep.subr.mxu0 0.0
    %5163 = vmatpush1.msra.mxu0 0.0
    %5164 = vmatprep.subr.mxu0 0.0
    %5165 = vmatpush1.msra.mxu0 0.0
    %5166 = vmatprep.subr.mxu0 0.0
    %5167 = vmatpush1.msra.mxu0 0.0
    %5168 = vmatprep.subr.mxu0 0.0
    %5169 = vmatpush1.msra.mxu0 0.0
    %5170 = vmatprep.subr.mxu0 0.0
    %5171 = vmatpush1.msra.mxu0 0.0
    %5172 = vmatprep.subr.mxu0 0.0
    %5173 = vmatpush1.msra.mxu0 0.0
    %5174 = vmatprep.subr.mxu0 0.0
    %5175 = vmatpush1.msra.mxu0 0.0
    %5176 = vmatprep.subr.mxu0 0.0
    %5177 = vmatpush1.msra.mxu0 0.0
    %5178 = vmatprep.subr.mxu0 0.0
    %5179 = vmatpush1.msra.mxu0 0.0
    %5180 = vmatprep.subr.mxu0 0.0
    %5181 = vmatpush1.msra.mxu0 0.0
    %5182 = vmatprep.subr.mxu0 0.0
    %5183 = vmatpush1.msra.mxu0 0.0
    %5184 = vmatprep.subr.mxu0 0.0
    %5185 = vmatpush1.msra.mxu0 0.0
    %5186 = vmatprep.subr.mxu0 0.0
    %5187 = vmatpush1.msra.mxu0 %v3978
    %5188 = vmatprep.subr.mxu0 0.0
    %5189 = vmatpush1.msra.mxu0 %v3977
    %5190 = vmatprep.subr.mxu0 0.0
    %5191 = vmatpush2.msra.mxu0 0.0
    %5192 = vmatprep.subr.mxu0 0.0
    %5193 = vmatpush2.msra.mxu0 0.0
    %5194 = vmatprep.subr.mxu0 0.0
    %5195 = vmatpush2.msra.mxu0 0.0
    %5196 = vmatprep.subr.mxu0 0.0
    %5197 = vmatpush2.msra.mxu0 0.0
    %5198 = vmatprep.subr.mxu0 0.0
    %5199 = vmatpush2.msra.mxu0 0.0
    %5200 = vmatprep.subr.mxu0 0.0
    %5201 = vmatpush2.msra.mxu0 0.0
    %5202 = vmatprep.subr.mxu0 0.0
    %5203 = vmatpush2.msra.mxu0 0.0
    %5204 = vmatprep.subr.mxu0 0.0
    %5205 = vmatpush2.msra.mxu0 0.0
    %5206 = vmatprep.subr.mxu0 0.0
    %5207 = vmatpush2.msra.mxu0 0.0
    %5208 = vmatprep.subr.mxu0 0.0
    %5209 = vmatpush2.msra.mxu0 0.0
    %5210 = vmatprep.subr.mxu0 0.0
    %5211 = vmatpush2.msra.mxu0 0.0
    %5212 = vmatprep.subr.mxu0 0.0
    %5213 = vmatpush2.msra.mxu0 0.0
    %5214 = vmatprep.subr.mxu0 0.0
    %5215 = vmatpush2.msra.mxu0 0.0
    %5216 = vmatprep.subr.mxu0 0.0
    %5217 = vmatpush2.msra.mxu0 0.0
    %5218 = vmatprep.subr.mxu0 0.0
    %5219 = vmatpush2.msra.mxu0 0.0
    %5220 = vmatprep.subr.mxu0 0.0
    %5221 = vmatpush2.msra.mxu0 0.0
    %5222 = vmatprep.mubr.f32.mxu0 0.0
    %5223 = vmatmul.mubr.f32.gmra.mxu0 %v5153
    %v5224 = vpop.f32.mrf.mxu0
    %v5225 = vadd.f32 0.0, %v5224
    %v5226 = vpop.f32.mrf.mxu0
    %5227 = vmatprep.mubr.f32.mxu0 0.0
    %5228 = vmatmul.mubr.f32.gmra.mxu0 %v5156
    %v5229 = vpop.f32.mrf.mxu0
    %v5230 = vadd.f32 0.0, %v5229
    %v5231 = vpop.f32.mrf.mxu0
    %5232 = vdwg.mxu0
    %v5233 = vadd.f32 %v3969, %v5225
    %v5234 = vadd.f32 %v3970, %v5230
    %5235 = vst.msk [vmem:[#allocation2] sm:$0xff] %vm30, %v5233
    %5236 = vst.msk [vmem:[#allocation2 + $0x8] sm:$0xff] %vm30, %v5234
    // Predicated region
    $region26: #{perceiver_attention_qk.1} parent=1 // pred_check
      _
    $region27: #{perceiver_attention_qk.1} parent=1 // pred_check_branch
      %5238 = sbr.rel (0) target = $region29
    $region28: #{perceiver_attention_qk.1} parent=1 // pred_region
      %s5240 = ssub.s32 256, 256
      %5241 = vsyncadd [#allocation3], %s5240
      %s5242 = sshll.u32 [#allocation2], 4
      %s5243 = int_to_ptr.vmem [resolvable:$true] %s5242
      %5248 = dma.vmem_to_hbm [thread:$0]  %s5243, 256, %s6, [#allocation3], 128, 128, 8
    $region29: #{perceiver_attention_qk.1} parent=1 // pred_fallthru
      _
    // Predicated region
    $region30: #{perceiver_attention_qk.1} parent=1 // pred_check
      _
    $region31: #{perceiver_attention_qk.1} parent=1 // pred_check_branch
      %5250 = sbr.rel (0) target = $region33
    $region32: #{perceiver_attention_qk.1} parent=1 // pred_region
      %5251 = dma.done [#allocation3], 256
    $region33: #{perceiver_attention_qk.1} parent=1 // pred_fallthru
      _
    %5252 = vsyncpa [#allocation3], 1

</llo_original>
